<compile_context>
chip_gen: v7x
topology: tpu7x:2x2x1
jax: 0.10.0
libtpu: 0.0.40
codegen_flags: <defaults>
</compile_context>

<pallas_src>
import jax
import jax.numpy as jnp
import numpy as np
from jax.experimental import pallas as pl
from jax.experimental.pallas import tpu as pltpu

D = 768          # timestep_input_dim / out_dim
H = 2048         # time_embed_dim
HALF = D // 2    # 384 sinusoid frequencies
L = 77           # sequence length implied by emb.repeat(1, 77, 1)
TH = 512         # hidden-dim chunk per grid step (H // TH grid steps)


def iterative_embedding_kernel(ts_ref, freq_ref, w1_ref, b1_ref, w2_ref,
                               b2_ref, ids_ref, rmod_ref, embw_ref,
                               out_ref, temb_ref, acc_ref):
    k = pl.program_id(0)
    nk = pl.num_programs(0)
    B = ts_ref.shape[0]
    BL = ids_ref.shape[0]
    V = embw_ref.shape[0]

    # --- first grid step: sinusoidal timestep embedding, flip_sin_to_cos=True
    #     -> [cos | sin]; cached in VMEM scratch; accumulator zeroed.  All f32.
    @pl.when(k == 0)
    def _init():
        arg = ts_ref[...] * freq_ref[...]          # (B, HALF) f32
        temb_ref[:, :HALF] = jnp.cos(arg)          # lane-aligned (384 % 128 == 0)
        temb_ref[:, HALF:] = jnp.sin(arg)
        acc_ref[...] = jnp.zeros_like(acc_ref)

    # --- chunk k of Linear(D,H) -> SiLU -> Linear(H,D)
    #     bf16 MXU operands, f32 accumulation; SiLU stays in f32.
    t_bf = temb_ref[...].astype(jnp.bfloat16)                           # (B, D)
    h = jnp.dot(t_bf, w1_ref[...],
                preferred_element_type=jnp.float32) + b1_ref[...]       # (B, TH)
    h = h * jax.nn.sigmoid(h)                                           # SiLU
    acc_ref[...] += jnp.dot(h.astype(jnp.bfloat16), w2_ref[...],
                            preferred_element_type=jnp.float32)         # (B, D)

    # --- last grid step: bias, embedding gather, repeat-select, multiply, store.
    @pl.when(k == nk - 1)
    def _finalize():
        emb = acc_ref[...] + b2_ref[...]                                # (B, D) f32

        # nn.Embedding lookup as a bf16 one-hot matmul (f32 accumulate).
        vid = jax.lax.broadcasted_iota(jnp.int32, (BL, V), 1)
        onehot = (ids_ref[...] == vid).astype(jnp.bfloat16)             # (BL, V)
        pos = jnp.dot(onehot, embw_ref[...],
                      preferred_element_type=jnp.float32)               # (BL, D)

        # emb.repeat(1, 77, 1).view(B, 77, -1): flattened row r uses emb[r % B].
        # rmod_ref holds the precomputed r % B map; B-step select chain (VPU only).
        emb_rep = jnp.zeros((BL, D), jnp.float32)
        for j in range(B):  # B is the (small, static) batch size
            emb_rep = jnp.where(rmod_ref[...] == j, emb[j:j + 1, :], emb_rep)

        out_ref[...] = emb_rep * pos


def iterative_embedding(input_ids, timesteps, params):
    """input_ids: (B, 77) int, timesteps: scalar or (B,) float -> (B, 77, 768) f32."""
    B, Lq = input_ids.shape
    assert Lq == L, "sequence length must be 77 (emb.repeat(1, 77, 1))"
    BL = B * L

    ts = jnp.broadcast_to(
        jnp.asarray(timesteps, jnp.float32).reshape(-1), (B,)).reshape(B, 1)
    freq = params["freq"].reshape(1, HALF).astype(jnp.float32)
    ids = input_ids.astype(jnp.int32).reshape(BL, 1)
    rmod = (jnp.arange(BL, dtype=jnp.int32) % B).reshape(BL, 1)

    # HBM-resident matmul operands in bf16 (halves the dominant weight DMA).
    w1 = params["w1"].astype(jnp.bfloat16)          # (D, H)
    w2 = params["w2"].astype(jnp.bfloat16)          # (H, D)
    emb_w = params["emb_w"].astype(jnp.bfloat16)    # (V, D), 0/1 exact in bf16
    b1 = params["b1"].reshape(1, H).astype(jnp.float32)
    b2 = params["b2"].reshape(1, D).astype(jnp.float32)
    V = emb_w.shape[0]

    assert H % TH == 0 and TH % 128 == 0 and D % 128 == 0
    nk = H // TH

    grid_spec = pltpu.PrefetchScalarGridSpec(
        num_scalar_prefetch=0,
        grid=(nk,),
        in_specs=[
            pl.BlockSpec((B, 1), lambda k: (0, 0)),        # timesteps
            pl.BlockSpec((1, HALF), lambda k: (0, 0)),     # sinusoid freqs
            pl.BlockSpec((D, TH), lambda k: (0, k)),       # w1 chunk (bf16)
            pl.BlockSpec((1, TH), lambda k: (0, k)),       # b1 chunk (f32)
            pl.BlockSpec((TH, D), lambda k: (k, 0)),       # w2 chunk (bf16)
            pl.BlockSpec((1, D), lambda k: (0, 0)),        # b2 (f32)
            pl.BlockSpec((BL, 1), lambda k: (0, 0)),       # token ids
            pl.BlockSpec((BL, 1), lambda k: (0, 0)),       # r % B row map
            pl.BlockSpec((V, D), lambda k: (0, 0)),        # embedding table (bf16)
        ],
        out_specs=pl.BlockSpec((BL, D), lambda k: (0, 0)),
        scratch_shapes=[pltpu.VMEM((B, D), jnp.float32),   # cached t_emb
                        pltpu.VMEM((B, D), jnp.float32)],  # emb accumulator
    )

    # TODO(synk): the remaining ~6 MiB bf16 weight DMA could be hidden behind
    # adjacent layers via cross-call prefetch (P10) at the caller level.
    out = pl.pallas_call(
        iterative_embedding_kernel,
        out_shape=jax.ShapeDtypeStruct((BL, D), jnp.float32),
        grid_spec=grid_spec,
        compiler_params=pltpu.CompilerParams(
            dimension_semantics=("arbitrary",),             # H-chunk reduction
            vmem_limit_bytes=32 * 1024 * 1024),             # < 64 MiB v7x VMEM
    )(ts, freq, w1, b1, w2, b2, ids, rmod, emb_w)
    return out.reshape(B, L, D)


def reference(input_ids, timesteps, params):
    # Pure-JAX f32 mirror of the PyTorch forward for verification.
    B, Lq = input_ids.shape
    ts = jnp.broadcast_to(jnp.asarray(timesteps, jnp.float32).reshape(-1), (B,))
    arg = ts[:, None] * params["freq"][None, :]
    t_emb = jnp.concatenate([jnp.cos(arg), jnp.sin(arg)], axis=-1)  # flip_sin_to_cos
    h = t_emb @ params["w1"] + params["b1"]
    h = h * jax.nn.sigmoid(h)
    emb = h @ params["w2"] + params["b2"]
    rows = jnp.arange(B * Lq) % B              # repeat(1,77,1).view semantics
    emb_rep = emb[rows]
    pos = params["emb_w"][input_ids.reshape(-1)]
    return (emb_rep * pos).reshape(B, Lq, D)


def make_params(size=16, newtoken=1):
    key = jax.random.PRNGKey(0)
    k1, k2, k3, k4 = jax.random.split(key, 4)
    freq = jnp.exp(-jnp.log(10000.0) *
                   jnp.arange(HALF, dtype=jnp.float32) / HALF)  # freq_shift=0
    emb_w = jnp.zeros((size, D), jnp.float32).at[-newtoken:].set(1.0)
    return {
        "freq": freq,
        "w1": 0.02 * jax.random.normal(k1, (D, H), jnp.float32),
        "b1": 0.02 * jax.random.normal(k2, (H,), jnp.float32),
        "w2": 0.02 * jax.random.normal(k3, (H, D), jnp.float32),
        "b2": 0.02 * jax.random.normal(k4, (D,), jnp.float32),
        "emb_w": emb_w,
    }


if __name__ == "__main__":
    size, newtoken = 16, 1
    B = 2
    params = make_params(size=size, newtoken=newtoken)

    key = jax.random.PRNGKey(0)
    input_ids = jax.random.randint(key, (B, L), 0, size, dtype=jnp.int32)
    timesteps = jnp.array(37.0, jnp.float32)   # expanded to (B,) inside

    out = iterative_embedding(input_ids, timesteps, params)
    out = jax.block_until_ready(out)

    ref = reference(input_ids, timesteps, params)
    np.testing.assert_allclose(np.asarray(out), np.asarray(ref),
                               rtol=2e-2, atol=2e-2)   # bf16 weight path
    assert out.shape == (B, L, D) and out.dtype == jnp.float32
    print("KERNEL_OK")
</pallas_src>

<mosaic_0001>
module attributes {stable_mosaic.version = 11 : i64} {
  func.func @iterative_embedding_kernel(%arg0: i32, %arg1: memref<2x1xf32, #tpu.memory_space<vmem>>, %arg2: memref<1x384xf32, #tpu.memory_space<vmem>>, %arg3: memref<768x512xbf16, #tpu.memory_space<vmem>>, %arg4: memref<1x512xf32, #tpu.memory_space<vmem>>, %arg5: memref<512x768xbf16, #tpu.memory_space<vmem>>, %arg6: memref<1x768xf32, #tpu.memory_space<vmem>>, %arg7: memref<154x1xi32, #tpu.memory_space<vmem>>, %arg8: memref<154x1xi32, #tpu.memory_space<vmem>>, %arg9: memref<16x768xbf16, #tpu.memory_space<vmem>>, %arg10: memref<154x768xf32, #tpu.memory_space<vmem>>, %arg11: memref<2x768xf32, #tpu.memory_space<vmem>>, %arg12: memref<2x768xf32, #tpu.memory_space<vmem>>) attributes {dimension_semantics = [#tpu.dimension_semantics<arbitrary>], iteration_bounds = array<i64: 4>, scalar_prefetch = 0 : i64, scratch_operands = 2 : i64, tpu.core_type = #tpu.core_type<tc>, window_params = [{pipeline_mode = #tpu.pipeline_mode<synchronous>, transform_indices = @transform_0, window_bounds = array<i64: 2, 1>}, {pipeline_mode = #tpu.pipeline_mode<synchronous>, transform_indices = @transform_1, window_bounds = array<i64: 1, 384>}, {transform_indices = @transform_2, window_bounds = array<i64: 768, 512>}, {transform_indices = @transform_3, window_bounds = array<i64: 1, 512>}, {transform_indices = @transform_4, window_bounds = array<i64: 512, 768>}, {pipeline_mode = #tpu.pipeline_mode<synchronous>, transform_indices = @transform_5, window_bounds = array<i64: 1, 768>}, {pipeline_mode = #tpu.pipeline_mode<synchronous>, transform_indices = @transform_6, window_bounds = array<i64: 154, 1>}, {pipeline_mode = #tpu.pipeline_mode<synchronous>, transform_indices = @transform_7, window_bounds = array<i64: 154, 1>}, {pipeline_mode = #tpu.pipeline_mode<synchronous>, transform_indices = @transform_8, window_bounds = array<i64: 16, 768>}, {pipeline_mode = #tpu.pipeline_mode<synchronous>, transform_indices = @transform_9, window_bounds = array<i64: 154, 768>}]} {
    %c0_i32 = arith.constant 0 : i32
    %0 = arith.cmpi eq, %arg0, %c0_i32 : i32
    %1 = arith.extui %0 : i1 to i32
    %c0_i32_0 = arith.constant 0 : i32
    %2 = arith.cmpi ne, %1, %c0_i32_0 : i32
    scf.if %2 {
      %c0_15 = arith.constant 0 : index
      %c0_16 = arith.constant 0 : index
      %25 = vector.load %arg1[%c0_15, %c0_16] : memref<2x1xf32, #tpu.memory_space<vmem>>, vector<2x1xf32>
      %c0_17 = arith.constant 0 : index
      %c0_18 = arith.constant 0 : index
      %26 = vector.load %arg2[%c0_17, %c0_18] : memref<1x384xf32, #tpu.memory_space<vmem>>, vector<1x384xf32>
      %27 = vector.broadcast %25 : vector<2x1xf32> to vector<2x384xf32>
      %28 = vector.broadcast %26 : vector<1x384xf32> to vector<2x384xf32>
      %29 = arith.mulf %27, %28 : vector<2x384xf32>
      %30 = math.cos %29 : vector<2x384xf32>
      %c0_19 = arith.constant 0 : index
      %c0_20 = arith.constant 0 : index
      %31 = vector.load %arg11[%c0_19, %c0_20] : memref<2x768xf32, #tpu.memory_space<vmem>>, vector<2x384xf32>
      tpu.vector_store %arg11[%c0_19, %c0_20], %30 {strides = array<i32>} : memref<2x768xf32, #tpu.memory_space<vmem>>, vector<2x384xf32>,
      %32 = math.sin %29 : vector<2x384xf32>
      %c0_21 = arith.constant 0 : index
      %c384 = arith.constant 384 : index
      %33 = vector.load %arg11[%c0_21, %c384] : memref<2x768xf32, #tpu.memory_space<vmem>>, vector<2x384xf32>
      tpu.vector_store %arg11[%c0_21, %c384], %32 {strides = array<i32>} : memref<2x768xf32, #tpu.memory_space<vmem>>, vector<2x384xf32>,
      %cst_22 = arith.constant 0.000000e+00 : f32
      %34 = vector.broadcast %cst_22 : f32 to vector<2x768xf32>
      %c0_23 = arith.constant 0 : index
      %c0_24 = arith.constant 0 : index
      %35 = vector.load %arg12[%c0_23, %c0_24] : memref<2x768xf32, #tpu.memory_space<vmem>>, vector<2x768xf32>
      tpu.vector_store %arg12[%c0_23, %c0_24], %34 {strides = array<i32>} : memref<2x768xf32, #tpu.memory_space<vmem>>, vector<2x768xf32>,
    } else {
    }
    %c0 = arith.constant 0 : index
    %c0_1 = arith.constant 0 : index
    %3 = vector.load %arg11[%c0, %c0_1] : memref<2x768xf32, #tpu.memory_space<vmem>>, vector<2x768xf32>
    %4 = arith.truncf %3 : vector<2x768xf32> to vector<2x768xbf16>
    %c0_2 = arith.constant 0 : index
    %c0_3 = arith.constant 0 : index
    %5 = vector.load %arg3[%c0_2, %c0_3] : memref<768x512xbf16, #tpu.memory_space<vmem>>, vector<768x512xbf16>
    %cst = arith.constant dense<0.000000e+00> : vector<2x512xf32>
    %6 = tpu.matmul %4, %5, %cst {dimension_numbers = #tpu.dot_dimension_numbers<[1], [0], [0], [1], [0, 0, 1, 1], [], []>} : vector<2x768xbf16>, vector<768x512xbf16>, vector<2x512xf32> -> vector<2x512xf32>
    %c0_4 = arith.constant 0 : index
    %c0_5 = arith.constant 0 : index
    %7 = vector.load %arg4[%c0_4, %c0_5] : memref<1x512xf32, #tpu.memory_space<vmem>>, vector<1x512xf32>
    %8 = vector.broadcast %7 : vector<1x512xf32> to vector<2x512xf32>
    %9 = arith.addf %6, %8 : vector<2x512xf32>
    %10 = arith.negf %9 : vector<2x512xf32>
    %11 = math.exp %10 : vector<2x512xf32>
    %cst_6 = arith.constant 1.000000e+00 : f32
    %12 = vector.broadcast %cst_6 : f32 to vector<2x512xf32>
    %13 = arith.addf %12, %11 : vector<2x512xf32>
    %14 = arith.divf %12, %13 : vector<2x512xf32>
    %15 = arith.mulf %9, %14 : vector<2x512xf32>
    %c0_7 = arith.constant 0 : index
    %c0_8 = arith.constant 0 : index
    %16 = vector.load %arg12[%c0_7, %c0_8] : memref<2x768xf32, #tpu.memory_space<vmem>>, vector<2x768xf32>
    %17 = arith.truncf %15 : vector<2x512xf32> to vector<2x512xbf16>
    %c0_9 = arith.constant 0 : index
    %c0_10 = arith.constant 0 : index
    %18 = vector.load %arg5[%c0_9, %c0_10] : memref<512x768xbf16, #tpu.memory_space<vmem>>, vector<512x768xbf16>
    %cst_11 = arith.constant dense<0.000000e+00> : vector<2x768xf32>
    %19 = tpu.matmul %17, %18, %cst_11 {dimension_numbers = #tpu.dot_dimension_numbers<[1], [0], [0], [1], [0, 0, 1, 1], [], []>} : vector<2x512xbf16>, vector<512x768xbf16>, vector<2x768xf32> -> vector<2x768xf32>
    %20 = arith.addf %16, %19 : vector<2x768xf32>
    %c0_12 = arith.constant 0 : index
    %c0_13 = arith.constant 0 : index
    %21 = vector.load %arg12[%c0_12, %c0_13] : memref<2x768xf32, #tpu.memory_space<vmem>>, vector<2x768xf32>
    tpu.vector_store %arg12[%c0_12, %c0_13], %20 {strides = array<i32>} : memref<2x768xf32, #tpu.memory_space<vmem>>, vector<2x768xf32>,
    %c3_i32 = arith.constant 3 : i32
    %22 = arith.cmpi eq, %arg0, %c3_i32 : i32
    %23 = arith.extui %22 : i1 to i32
    %c0_i32_14 = arith.constant 0 : i32
    %24 = arith.cmpi ne, %23, %c0_i32_14 : i32
    scf.if %24 {
      %c0_15 = arith.constant 0 : index
      %c0_16 = arith.constant 0 : index
      %25 = vector.load %arg12[%c0_15, %c0_16] : memref<2x768xf32, #tpu.memory_space<vmem>>, vector<2x768xf32>
      %c0_17 = arith.constant 0 : index
      %c0_18 = arith.constant 0 : index
      %26 = vector.load %arg6[%c0_17, %c0_18] : memref<1x768xf32, #tpu.memory_space<vmem>>, vector<1x768xf32>
      %27 = vector.broadcast %26 : vector<1x768xf32> to vector<2x768xf32>
      %28 = arith.addf %25, %27 : vector<2x768xf32>
      %29 = tpu.iota {dimensions = array<i32: 1>} : vector<154x16xi32>
      %c0_19 = arith.constant 0 : index
      %c0_20 = arith.constant 0 : index
      %30 = vector.load %arg7[%c0_19, %c0_20] : memref<154x1xi32, #tpu.memory_space<vmem>>, vector<154x1xi32>
      %31 = vector.broadcast %30 : vector<154x1xi32> to vector<154x16xi32>
      %32 = arith.cmpi eq, %31, %29 : vector<154x16xi32>
      %33 = arith.extui %32 : vector<154x16xi1> to vector<154x16xi32>
      %34 = arith.sitofp %33 : vector<154x16xi32> to vector<154x16xf32>
      %35 = arith.truncf %34 : vector<154x16xf32> to vector<154x16xbf16>
      %c0_21 = arith.constant 0 : index
      %c0_22 = arith.constant 0 : index
      %36 = vector.load %arg9[%c0_21, %c0_22] : memref<16x768xbf16, #tpu.memory_space<vmem>>, vector<16x768xbf16>
      %cst_23 = arith.constant dense<0.000000e+00> : vector<154x768xf32>
      %37 = tpu.matmul %35, %36, %cst_23 {dimension_numbers = #tpu.dot_dimension_numbers<[1], [0], [0], [1], [0, 0, 1, 1], [], []>} : vector<154x16xbf16>, vector<16x768xbf16>, vector<154x768xf32> -> vector<154x768xf32>
      %cst_24 = arith.constant 0.000000e+00 : f32
      %38 = vector.broadcast %cst_24 : f32 to vector<154x768xf32>
      %c0_25 = arith.constant 0 : index
      %c0_26 = arith.constant 0 : index
      %39 = vector.load %arg8[%c0_25, %c0_26] : memref<154x1xi32, #tpu.memory_space<vmem>>, vector<154x1xi32>
      %c0_i32_27 = arith.constant 0 : i32
      %40 = vector.broadcast %c0_i32_27 : i32 to vector<154x1xi32>
      %41 = arith.cmpi eq, %39, %40 : vector<154x1xi32>
      %42 = vector.extract_strided_slice %28 {offsets = [0, 0], sizes = [1, 768], strides = [1, 1]} : vector<2x768xf32> to vector<1x768xf32>
      %43 = vector.shape_cast %41 : vector<154x1xi1> to vector<154x1xi1>
      %44 = vector.broadcast %43 : vector<154x1xi1> to vector<154x768xi1>
      %45 = vector.shape_cast %42 : vector<1x768xf32> to vector<1x768xf32>
      %46 = vector.broadcast %45 : vector<1x768xf32> to vector<154x768xf32>
      %47 = arith.select %44, %46, %38 : vector<154x768xi1>, vector<154x768xf32>
      %c0_28 = arith.constant 0 : index
      %c0_29 = arith.constant 0 : index
      %48 = vector.load %arg8[%c0_28, %c0_29] : memref<154x1xi32, #tpu.memory_space<vmem>>, vector<154x1xi32>
      %c1_i32 = arith.constant 1 : i32
      %49 = vector.broadcast %c1_i32 : i32 to vector<154x1xi32>
      %50 = arith.cmpi eq, %48, %49 : vector<154x1xi32>
      %51 = vector.extract_strided_slice %28 {offsets = [1, 0], sizes = [1, 768], strides = [1, 1]} : vector<2x768xf32> to vector<1x768xf32>
      %52 = vector.shape_cast %50 : vector<154x1xi1> to vector<154x1xi1>
      %53 = vector.broadcast %52 : vector<154x1xi1> to vector<154x768xi1>
      %54 = vector.shape_cast %51 : vector<1x768xf32> to vector<1x768xf32>
      %55 = vector.broadcast %54 : vector<1x768xf32> to vector<154x768xf32>
      %56 = arith.select %53, %55, %47 : vector<154x768xi1>, vector<154x768xf32>
      %57 = arith.mulf %56, %37 : vector<154x768xf32>
      %c0_30 = arith.constant 0 : index
      %c0_31 = arith.constant 0 : index
      %58 = vector.load %arg10[%c0_30, %c0_31] : memref<154x768xf32, #tpu.memory_space<vmem>>, vector<154x768xf32>
      tpu.vector_store %arg10[%c0_30, %c0_31], %57 {strides = array<i32>} : memref<154x768xf32, #tpu.memory_space<vmem>>, vector<154x768xf32>,
    } else {
    }
    return
  }
  func.func @transform_0(%arg0: i32) -> (i32, i32) {
    %c0_i32 = arith.constant 0 : i32
    %c0_i32_0 = arith.constant 0 : i32
    %c0_i32_1 = arith.constant 0 : i32
    return %c0_i32, %c0_i32_0 : i32, i32
  }
  func.func @transform_1(%arg0: i32) -> (i32, i32) {
    %c0_i32 = arith.constant 0 : i32
    %c0_i32_0 = arith.constant 0 : i32
    %c0_i32_1 = arith.constant 0 : i32
    return %c0_i32, %c0_i32_0 : i32, i32
  }
  func.func @transform_2(%arg0: i32) -> (i32, i32) {
    %c0_i32 = arith.constant 0 : i32
    %c0_i32_0 = arith.constant 0 : i32
    return %c0_i32, %arg0 : i32, i32
  }
  func.func @transform_3(%arg0: i32) -> (i32, i32) {
    %c0_i32 = arith.constant 0 : i32
    %c0_i32_0 = arith.constant 0 : i32
    return %c0_i32, %arg0 : i32, i32
  }
  func.func @transform_4(%arg0: i32) -> (i32, i32) {
    %c0_i32 = arith.constant 0 : i32
    %c0_i32_0 = arith.constant 0 : i32
    return %arg0, %c0_i32 : i32, i32
  }
  func.func @transform_5(%arg0: i32) -> (i32, i32) {
    %c0_i32 = arith.constant 0 : i32
    %c0_i32_0 = arith.constant 0 : i32
    %c0_i32_1 = arith.constant 0 : i32
    return %c0_i32, %c0_i32_0 : i32, i32
  }
  func.func @transform_6(%arg0: i32) -> (i32, i32) {
    %c0_i32 = arith.constant 0 : i32
    %c0_i32_0 = arith.constant 0 : i32
    %c0_i32_1 = arith.constant 0 : i32
    return %c0_i32, %c0_i32_0 : i32, i32
  }
  func.func @transform_7(%arg0: i32) -> (i32, i32) {
    %c0_i32 = arith.constant 0 : i32
    %c0_i32_0 = arith.constant 0 : i32
    %c0_i32_1 = arith.constant 0 : i32
    return %c0_i32, %c0_i32_0 : i32, i32
  }
  func.func @transform_8(%arg0: i32) -> (i32, i32) {
    %c0_i32 = arith.constant 0 : i32
    %c0_i32_0 = arith.constant 0 : i32
    %c0_i32_1 = arith.constant 0 : i32
    return %c0_i32, %c0_i32_0 : i32, i32
  }
  func.func @transform_9(%arg0: i32) -> (i32, i32) {
    %c0_i32 = arith.constant 0 : i32
    %c0_i32_0 = arith.constant 0 : i32
    %c0_i32_1 = arith.constant 0 : i32
    return %c0_i32, %c0_i32_0 : i32, i32
  }
}

</mosaic_0001>

<llo_original>
// kernel: tpu_custom_call.1
$region0: #{tpu_custom_call.1}
  #allocation0 [shape = 'u32[]', space=smem, size = 0x4, offset = 0x4, fixed_abs, tag = 'smem constant byte address 0x4 - core index']
  #allocation1 [shape = 'u32[144,128]{1,0:T(1,128)}', space=vmem, size = 0x12000, scoped, tag = 'internal scratch']
  #allocation2 [shape = 'f32[2,768]{1,0:T(2,128)}', space=vmem, size = 0x1800, scoped, tag = 'scratch operand']
  #allocation3 [shape = 'f32[2,768]{1,0:T(2,128)}', space=vmem, size = 0x1800, scoped, tag = 'scratch operand']
  %s0 = inlined_call_operand.vmem [shape: f32[2,1], index: 0, kind: input, shape index: {}]
  %s1 = inlined_call_operand.hbm [shape: f32[1,384], index: 1, kind: input, shape index: {}]
  %s2 = inlined_call_operand.hbm [shape: bf16[768,2048], index: 2, kind: input, shape index: {}]
  %s3 = inlined_call_operand.hbm [shape: f32[1,2048], index: 3, kind: input, shape index: {}]
  %s4 = inlined_call_operand.hbm [shape: bf16[2048,768], index: 4, kind: input, shape index: {}]
  %s5 = inlined_call_operand.hbm [shape: f32[1,768], index: 5, kind: input, shape index: {}]
  %s6 = inlined_call_operand.vmem [shape: s32[154,1], index: 6, kind: input, shape index: {}]
  %s7 = inlined_call_operand.vmem [shape: s32[154,1], index: 7, kind: input, shape index: {}]
  %s8 = inlined_call_operand.hbm [shape: bf16[16,768], index: 8, kind: input, shape index: {}]
  %s9 = inlined_call_operand.hbm [shape: f32[154,768], index: 9, kind: output, shape index: {}]
  %s10 = sld [smem:[#allocation0]]
  $region101: #{tpu_custom_call.1} parent=0
    _
  %s12 = ssub.s32 1, %s10
  %s13 = scalar_select 0, %s12, %s10
  $region1: #{tpu_custom_call.1} parent=0
    #allocation4 [shape = 'u8[1536]{0}', space=vmem, size = 0x800, scoped, tag = 'input window, operand 1, single buffered']
    #allocation5 [shape = 's32[2]{0}', space=sflag, size = 0x8, scoped, tag = 'scoped memory for tpu_custom_call.1']
    #allocation6 [shape = 's32[2]{0}', space=sflag, size = 0x8, scoped, tag = 'scoped memory for tpu_custom_call.1']
    #allocation7 [shape = 'u8[1572864]{0}', space=vmem, size = 0x180000, scoped, tag = 'input window, operand 2']
    #allocation8 [shape = 's32[2]{0}', space=sflag, size = 0x8, scoped, tag = 'scoped memory for tpu_custom_call.1']
    #allocation9 [shape = 'u8[4096]{0}', space=vmem, size = 0x1000, scoped, tag = 'input window, operand 3']
    #allocation10 [shape = 'u8[1572864]{0}', space=vmem, size = 0x180000, scoped, tag = 'input window, operand 4']
    #allocation11 [shape = 's32[2]{0}', space=sflag, size = 0x8, scoped, tag = 'scoped memory for tpu_custom_call.1']
    #allocation12 [shape = 'u8[3072]{0}', space=vmem, size = 0xc00, scoped, tag = 'input window, operand 5, single buffered']
    #allocation13 [shape = 'u8[24576]{0}', space=vmem, size = 0x6000, scoped, tag = 'input window, operand 8, single buffered']
    #allocation14 [shape = 's32[1]{0}', space=sflag, size = 0x4, scoped, tag = 'scoped memory for tpu_custom_call.1']
    #allocation15 [shape = 'u8[491520]{0}', space=vmem, size = 0x78000, scoped, tag = 'output window, operand 0, single buffered']
    %14 = vsyncpa [#allocation5], 0
    %15 = vsyncpa [#allocation8], 0
    %s16 = scalar_lea.sflag [#allocation8], 1
    %17 = vsyncpa %s16, 0
    %18 = vsyncpa [#allocation11], 0
    %s19 = scalar_lea.sflag [#allocation11], 1
    %20 = vsyncpa %s19, 0
    %21 = vsyncpa [#allocation14], 0
    %22 = vsyncpa [#allocation6], 0
    loop: start=0, step=1, limit=6
    $region2: #{tpu_custom_call.1} parent=1 // loop_pre_header
      _
    $region3: #{tpu_custom_call.1} parent=1 // loop_header
      %s24 = sphi 0, %s28
      %p25 = scmp.ge.s32.totalorder %s24, 6
      %s32 = sphi 0, %s32
      %s34 = sphi 0, %s32
      %s35 = sphi 0, %s34
      %s49 = sphi 0, %s35
      %s53 = sphi 0, %s53
      %s55 = sphi 0, %s53
      %s56 = sphi 0, %s55
      %s70 = sphi 0, %s56
      %s76 = sphi 0, %s78
      %s79 = sphi 0, %s76
      %s80 = sphi 0, %s79
      %s96 = sphi 0, %s80
      %s102 = sphi 0, %s104
      %s105 = sphi 0, %s102
      %s106 = sphi 0, %s105
      %s122 = sphi 0, %s106
      %s128 = sphi 0, %s130
      %s131 = sphi 0, %s128
      %s132 = sphi 0, %s131
      %s148 = sphi 0, %s132
      %s152 = sphi 0, %s152
      %s154 = sphi 0, %s152
      %s155 = sphi 0, %s154
      %s169 = sphi 0, %s155
      %s173 = sphi 0, %s173
      %s175 = sphi 0, %s173
      %s176 = sphi 0, %s175
      %s190 = sphi 0, %s176
      %s194 = sphi 0, %s194
      %s196 = sphi 0, %s194
      %s197 = sphi 0, %s196
      %s211 = sphi 0, %s197
      %s215 = sphi 0, %s215
      %s217 = sphi 0, %s215
      %s218 = sphi 0, %s217
      %s232 = sphi 0, %s218
      %s236 = sphi 0, %s236
      %s238 = sphi 0, %s236
      %s239 = sphi 0, %s238
      %s253 = sphi 0, %s239
    $region4: #{tpu_custom_call.1} parent=1 // loop_header_branch
      %27 = sbr.rel (%p25) target = $region8
    $region5: #{tpu_custom_call.1} parent=1 // loop_body
      %s29 = ssub.s32 %s24, 1
      %s30 = ssub.s32 %s24, 2
      %s31 = sadd.s32 %s24, 1
      %s33 = sadd.s32 %s32, 1
      %p36 = scmp.eq.s32.totalorder %s24, 3
      %p37 = scmp.ne.s32.totalorder %s32, %s34
      %p38 = scmp.eq.s32.totalorder %s24, 0
      %p39 = por %p37, %p38
      %p40 = scmp.ne.s32.totalorder %s32, %s34
      %p41 = scmp.eq.s32.totalorder %s29, 3
      %p42 = por %p40, %p41
      %p43 = scmp.ne.s32.totalorder %s34, %s35
      %p44 = scmp.eq.s32.totalorder %s29, 0
      %p45 = por %p43, %p44
      %p46 = scmp.ne.s32.totalorder %s34, %s35
      %p47 = scmp.eq.s32.totalorder %s30, 3
      %p48 = por %p46, %p47
      %p50 = scmp.ne.s32.totalorder %s35, %s49
      %p51 = scmp.eq.s32.totalorder %s30, 0
      %p52 = por %p50, %p51
      %s54 = sadd.s32 %s53, 1
      %p57 = scmp.eq.s32.totalorder %s24, 3
      %p58 = scmp.ne.s32.totalorder %s53, %s55
      %p59 = scmp.eq.s32.totalorder %s24, 0
      %p60 = por %p58, %p59
      %p61 = scmp.ne.s32.totalorder %s53, %s55
      %p62 = scmp.eq.s32.totalorder %s29, 3
      %p63 = por %p61, %p62
      %p64 = scmp.ne.s32.totalorder %s55, %s56
      %p65 = scmp.eq.s32.totalorder %s29, 0
      %p66 = por %p64, %p65
      %p67 = scmp.ne.s32.totalorder %s55, %s56
      %p68 = scmp.eq.s32.totalorder %s30, 3
      %p69 = por %p67, %p68
      %p71 = scmp.ne.s32.totalorder %s56, %s70
      %p72 = scmp.eq.s32.totalorder %s30, 0
      %p73 = por %p71, %p72
      %s74 = ssub.s32 %s24, %s31
      %p75 = scmp.eq.s32.totalorder %s74, 0
      %s77 = sadd.s32 %s76, 1
      %s78 = scalar_select %p75, %s76, %s77
      %p81 = pneg %p75
      %p82 = scmp.eq.s32.totalorder %s24, 3
      %p83 = por %p81, %p82
      %p84 = scmp.ne.s32.totalorder %s76, %s79
      %p85 = scmp.eq.s32.totalorder %s24, 0
      %p86 = por %p84, %p85
      %p87 = scmp.ne.s32.totalorder %s76, %s79
      %p88 = scmp.eq.s32.totalorder %s29, 3
      %p89 = por %p87, %p88
      %p90 = scmp.ne.s32.totalorder %s79, %s80
      %p91 = scmp.eq.s32.totalorder %s29, 0
      %p92 = por %p90, %p91
      %p93 = scmp.ne.s32.totalorder %s79, %s80
      %p94 = scmp.eq.s32.totalorder %s30, 3
      %p95 = por %p93, %p94
      %p97 = scmp.ne.s32.totalorder %s80, %s96
      %p98 = scmp.eq.s32.totalorder %s30, 0
      %p99 = por %p97, %p98
      %s100 = ssub.s32 %s24, %s31
      %p101 = scmp.eq.s32.totalorder %s100, 0
      %s103 = sadd.s32 %s102, 1
      %s104 = scalar_select %p101, %s102, %s103
      %p107 = pneg %p101
      %p108 = scmp.eq.s32.totalorder %s24, 3
      %p109 = por %p107, %p108
      %p110 = scmp.ne.s32.totalorder %s102, %s105
      %p111 = scmp.eq.s32.totalorder %s24, 0
      %p112 = por %p110, %p111
      %p113 = scmp.ne.s32.totalorder %s102, %s105
      %p114 = scmp.eq.s32.totalorder %s29, 3
      %p115 = por %p113, %p114
      %p116 = scmp.ne.s32.totalorder %s105, %s106
      %p117 = scmp.eq.s32.totalorder %s29, 0
      %p118 = por %p116, %p117
      %p119 = scmp.ne.s32.totalorder %s105, %s106
      %p120 = scmp.eq.s32.totalorder %s30, 3
      %p121 = por %p119, %p120
      %p123 = scmp.ne.s32.totalorder %s106, %s122
      %p124 = scmp.eq.s32.totalorder %s30, 0
      %p125 = por %p123, %p124
      %s126 = ssub.s32 %s24, %s31
      %p127 = scmp.eq.s32.totalorder %s126, 0
      %s129 = sadd.s32 %s128, 1
      %s130 = scalar_select %p127, %s128, %s129
      %p133 = pneg %p127
      %p134 = scmp.eq.s32.totalorder %s24, 3
      %p135 = por %p133, %p134
      %p136 = scmp.ne.s32.totalorder %s128, %s131
      %p137 = scmp.eq.s32.totalorder %s24, 0
      %p138 = por %p136, %p137
      %p139 = scmp.ne.s32.totalorder %s128, %s131
      %p140 = scmp.eq.s32.totalorder %s29, 3
      %p141 = por %p139, %p140
      %p142 = scmp.ne.s32.totalorder %s131, %s132
      %p143 = scmp.eq.s32.totalorder %s29, 0
      %p144 = por %p142, %p143
      %p145 = scmp.ne.s32.totalorder %s131, %s132
      %p146 = scmp.eq.s32.totalorder %s30, 3
      %p147 = por %p145, %p146
      %p149 = scmp.ne.s32.totalorder %s132, %s148
      %p150 = scmp.eq.s32.totalorder %s30, 0
      %p151 = por %p149, %p150
      %s153 = sadd.s32 %s152, 1
      %p156 = scmp.eq.s32.totalorder %s24, 3
      %p157 = scmp.ne.s32.totalorder %s152, %s154
      %p158 = scmp.eq.s32.totalorder %s24, 0
      %p159 = por %p157, %p158
      %p160 = scmp.ne.s32.totalorder %s152, %s154
      %p161 = scmp.eq.s32.totalorder %s29, 3
      %p162 = por %p160, %p161
      %p163 = scmp.ne.s32.totalorder %s154, %s155
      %p164 = scmp.eq.s32.totalorder %s29, 0
      %p165 = por %p163, %p164
      %p166 = scmp.ne.s32.totalorder %s154, %s155
      %p167 = scmp.eq.s32.totalorder %s30, 3
      %p168 = por %p166, %p167
      %p170 = scmp.ne.s32.totalorder %s155, %s169
      %p171 = scmp.eq.s32.totalorder %s30, 0
      %p172 = por %p170, %p171
      %s174 = sadd.s32 %s173, 1
      %p177 = scmp.eq.s32.totalorder %s24, 3
      %p178 = scmp.ne.s32.totalorder %s173, %s175
      %p179 = scmp.eq.s32.totalorder %s24, 0
      %p180 = por %p178, %p179
      %p181 = scmp.ne.s32.totalorder %s173, %s175
      %p182 = scmp.eq.s32.totalorder %s29, 3
      %p183 = por %p181, %p182
      %p184 = scmp.ne.s32.totalorder %s175, %s176
      %p185 = scmp.eq.s32.totalorder %s29, 0
      %p186 = por %p184, %p185
      %p187 = scmp.ne.s32.totalorder %s175, %s176
      %p188 = scmp.eq.s32.totalorder %s30, 3
      %p189 = por %p187, %p188
      %p191 = scmp.ne.s32.totalorder %s176, %s190
      %p192 = scmp.eq.s32.totalorder %s30, 0
      %p193 = por %p191, %p192
      %s195 = sadd.s32 %s194, 1
      %p198 = scmp.eq.s32.totalorder %s24, 3
      %p199 = scmp.ne.s32.totalorder %s194, %s196
      %p200 = scmp.eq.s32.totalorder %s24, 0
      %p201 = por %p199, %p200
      %p202 = scmp.ne.s32.totalorder %s194, %s196
      %p203 = scmp.eq.s32.totalorder %s29, 3
      %p204 = por %p202, %p203
      %p205 = scmp.ne.s32.totalorder %s196, %s197
      %p206 = scmp.eq.s32.totalorder %s29, 0
      %p207 = por %p205, %p206
      %p208 = scmp.ne.s32.totalorder %s196, %s197
      %p209 = scmp.eq.s32.totalorder %s30, 3
      %p210 = por %p208, %p209
      %p212 = scmp.ne.s32.totalorder %s197, %s211
      %p213 = scmp.eq.s32.totalorder %s30, 0
      %p214 = por %p212, %p213
      %s216 = sadd.s32 %s215, 1
      %p219 = scmp.eq.s32.totalorder %s24, 3
      %p220 = scmp.ne.s32.totalorder %s215, %s217
      %p221 = scmp.eq.s32.totalorder %s24, 0
      %p222 = por %p220, %p221
      %p223 = scmp.ne.s32.totalorder %s215, %s217
      %p224 = scmp.eq.s32.totalorder %s29, 3
      %p225 = por %p223, %p224
      %p226 = scmp.ne.s32.totalorder %s217, %s218
      %p227 = scmp.eq.s32.totalorder %s29, 0
      %p228 = por %p226, %p227
      %p229 = scmp.ne.s32.totalorder %s217, %s218
      %p230 = scmp.eq.s32.totalorder %s30, 3
      %p231 = por %p229, %p230
      %p233 = scmp.ne.s32.totalorder %s218, %s232
      %p234 = scmp.eq.s32.totalorder %s30, 0
      %p235 = por %p233, %p234
      %s237 = sadd.s32 %s236, 1
      %p240 = scmp.eq.s32.totalorder %s24, 3
      %p241 = scmp.ne.s32.totalorder %s236, %s238
      %p242 = scmp.eq.s32.totalorder %s24, 0
      %p243 = por %p241, %p242
      %p244 = scmp.ne.s32.totalorder %s236, %s238
      %p245 = scmp.eq.s32.totalorder %s29, 3
      %p246 = por %p244, %p245
      %p247 = scmp.ne.s32.totalorder %s238, %s239
      %p248 = scmp.eq.s32.totalorder %s29, 0
      %p249 = por %p247, %p248
      %p250 = scmp.ne.s32.totalorder %s238, %s239
      %p251 = scmp.eq.s32.totalorder %s30, 3
      %p252 = por %p250, %p251
      %p254 = scmp.ne.s32.totalorder %s239, %s253
      %p255 = scmp.eq.s32.totalorder %s30, 0
      %p256 = por %p254, %p255
      %p257 = scmp.le.s32.totalorder 1, %s24
      %p258 = scmp.lt.s32.totalorder %s24, 5
      %p259 = pnand %p257, %p258
      %p260 = pneg %p259
      // Predicated region
      $region9: #{tpu_custom_call.1} parent=5 // pred_check
        _
      $region10: #{tpu_custom_call.1} parent=5 // pred_check_branch
        %262 = sbr.rel (%p259) target = $region12
      $region11: #{tpu_custom_call.1} parent=5 // pred_region
        %s263 = ssub.s32 %s24, 1
        // Predicated region
        $region13: #{tpu_custom_call.1} parent=11 // pred_check
          %p264 = pneg %p45
        $region14: #{tpu_custom_call.1} parent=11 // pred_check_branch
          %266 = sbr.rel (%p264) target = $region16
        $region15: #{tpu_custom_call.1} parent=11 // pred_region
          _
        $region16: #{tpu_custom_call.1} parent=11 // pred_fallthru
          _
        // Predicated region
        $region17: #{tpu_custom_call.1} parent=11 // pred_check
          %p267 = pneg %p66
        $region18: #{tpu_custom_call.1} parent=11 // pred_check_branch
          %269 = sbr.rel (%p267) target = $region20
        $region19: #{tpu_custom_call.1} parent=11 // pred_region
          %s271 = ssub.s32 48, 48
          %272 = vsyncadd [#allocation5], %s271
          %s274 = sshll.u32 [#allocation4], 4
          %s275 = int_to_ptr.vmem [resolvable:$true] %s274
          %277 = dma.hbm_to_vmem [thread:$0]  %s1, 48, %s275, [#allocation5]
        $region20: #{tpu_custom_call.1} parent=11 // pred_fallthru
          _
        // Predicated region
        $region21: #{tpu_custom_call.1} parent=11 // pred_check
          %p278 = pneg %p165
        $region22: #{tpu_custom_call.1} parent=11 // pred_check_branch
          %280 = sbr.rel (%p278) target = $region24
        $region23: #{tpu_custom_call.1} parent=11 // pred_region
          %s282 = ssub.s32 96, 96
          %283 = vsyncadd [#allocation11], %s282
          %s285 = sshll.u32 [#allocation12], 4
          %s286 = int_to_ptr.vmem [resolvable:$true] %s285
          %288 = dma.hbm_to_vmem [thread:$0]  %s5, 96, %s286, [#allocation11]
        $region24: #{tpu_custom_call.1} parent=11 // pred_fallthru
          _
        // Predicated region
        $region25: #{tpu_custom_call.1} parent=11 // pred_check
          %p289 = pneg %p186
        $region26: #{tpu_custom_call.1} parent=11 // pred_check_branch
          %291 = sbr.rel (%p289) target = $region28
        $region27: #{tpu_custom_call.1} parent=11 // pred_region
          _
        $region28: #{tpu_custom_call.1} parent=11 // pred_fallthru
          _
        // Predicated region
        $region29: #{tpu_custom_call.1} parent=11 // pred_check
          %p292 = pneg %p207
        $region30: #{tpu_custom_call.1} parent=11 // pred_check_branch
          %294 = sbr.rel (%p292) target = $region32
        $region31: #{tpu_custom_call.1} parent=11 // pred_region
          _
        $region32: #{tpu_custom_call.1} parent=11 // pred_fallthru
          _
        // Predicated region
        $region33: #{tpu_custom_call.1} parent=11 // pred_check
          %p295 = pneg %p228
        $region34: #{tpu_custom_call.1} parent=11 // pred_check_branch
          %297 = sbr.rel (%p295) target = $region36
        $region35: #{tpu_custom_call.1} parent=11 // pred_region
          %s299 = ssub.s32 768, 768
          %300 = vsyncadd [#allocation14], %s299
          %s301 = sshll.u32 [#allocation13], 4
          %s302 = int_to_ptr.vmem [resolvable:$true] %s301
          %307 = dma.hbm_to_vmem [thread:$0]  %s8, 768, %s302, [#allocation14], 384, 384, 24
        $region36: #{tpu_custom_call.1} parent=11 // pred_fallthru
          _
      $region12: #{tpu_custom_call.1} parent=5 // pred_fallthru
        _
      %p308 = scmp.lt.s32.totalorder %s24, 4
      // Predicated region
      $region37: #{tpu_custom_call.1} parent=5 // pred_check
        %p309 = pneg %p308
      $region38: #{tpu_custom_call.1} parent=5 // pred_check_branch
        %311 = sbr.rel (%p309) target = $region40
      $region39: #{tpu_custom_call.1} parent=5 // pred_region
        // Predicated region
        $region41: #{tpu_custom_call.1} parent=39 // pred_check
          %p312 = pneg %p86
        $region42: #{tpu_custom_call.1} parent=39 // pred_check_branch
          %314 = sbr.rel (%p312) target = $region44
        $region43: #{tpu_custom_call.1} parent=39 // pred_region
          %s315 = sand.u32 %s24, 1
          %s316 = scalar_lea.sflag [#allocation8], %s315
          %s317 = sand.u32 %s76, 1
          %s318 = smul.addr %s317, 1536
          %s319 = scalar_lea.vmem [#allocation7], %s318
          %s320 = smul.u32 4, %s24
          %s322 = ssub.s32 24576, 24576
          %323 = vsyncadd %s316, %s322
          %s324 = smul.addr %s320, 64
          %s325 = scalar_lea.hbm %s2, %s324
          %s326 = sshll.u32 %s319, 4
          %s327 = int_to_ptr.vmem [resolvable:$true] %s326
          %332 = dma.hbm_to_vmem [thread:$0]  %s325, 24576, %s327, %s316, 1024, 256, 16
        $region44: #{tpu_custom_call.1} parent=39 // pred_fallthru
          _
        // Predicated region
        $region45: #{tpu_custom_call.1} parent=39 // pred_check
          %p333 = pneg %p112
        $region46: #{tpu_custom_call.1} parent=39 // pred_check_branch
          %335 = sbr.rel (%p333) target = $region48
        $region47: #{tpu_custom_call.1} parent=39 // pred_region
          %s336 = sand.u32 %s24, 1
          %s337 = scalar_lea.sflag [#allocation8], %s336
          %s338 = sand.u32 %s102, 1
          %s339 = smul.addr %s338, 4
          %s340 = scalar_lea.vmem [#allocation9], %s339
          %s341 = smul.u32 4, %s24
          %s343 = ssub.s32 64, 64
          %344 = vsyncadd %s337, %s343
          %s345 = smul.addr %s341, 16
          %s346 = scalar_lea.hbm %s3, %s345
          %s348 = sshll.u32 %s340, 4
          %s349 = int_to_ptr.vmem [resolvable:$true] %s348
          %351 = dma.hbm_to_vmem [thread:$0]  %s346, 64, %s349, %s337
        $region48: #{tpu_custom_call.1} parent=39 // pred_fallthru
          _
        // Predicated region
        $region49: #{tpu_custom_call.1} parent=39 // pred_check
          %p352 = pneg %p138
        $region50: #{tpu_custom_call.1} parent=39 // pred_check_branch
          %354 = sbr.rel (%p352) target = $region52
        $region51: #{tpu_custom_call.1} parent=39 // pred_region
          %s355 = sand.u32 %s24, 1
          %s356 = scalar_lea.sflag [#allocation11], %s355
          %s357 = sand.u32 %s128, 1
          %s358 = smul.addr %s357, 1536
          %s359 = scalar_lea.vmem [#allocation10], %s358
          %s360 = smul.u32 64, %s24
          %s362 = ssub.s32 24576, 24576
          %363 = vsyncadd %s356, %s362
          %s364 = smul.addr %s360, 6
          %s365 = smul.addr %s364, 64
          %s366 = scalar_lea.hbm %s4, %s365
          %s367 = sshll.u32 %s359, 4
          %s368 = int_to_ptr.vmem [resolvable:$true] %s367
          %373 = dma.hbm_to_vmem [thread:$0]  %s366, 24576, %s368, %s356, 384, 384, 24
        $region52: #{tpu_custom_call.1} parent=39 // pred_fallthru
          _
      $region40: #{tpu_custom_call.1} parent=5 // pred_fallthru
        _
      %p374 = scmp.le.s32.totalorder 1, %s24
      %p375 = scmp.lt.s32.totalorder %s24, 5
      %p376 = pnand %p374, %p375
      %p377 = pneg %p376
      // Predicated region
      $region53: #{tpu_custom_call.1} parent=5 // pred_check
        _
      $region54: #{tpu_custom_call.1} parent=5 // pred_check_branch
        %379 = sbr.rel (%p376) target = $region56
      $region55: #{tpu_custom_call.1} parent=5 // pred_region
        %s380 = ssub.s32 %s24, 1
        // Predicated region
        $region57: #{tpu_custom_call.1} parent=55 // pred_check
          %p381 = pneg %p66
        $region58: #{tpu_custom_call.1} parent=55 // pred_check_branch
          %383 = sbr.rel (%p381) target = $region60
        $region59: #{tpu_custom_call.1} parent=55 // pred_region
          %384 = dma.done [#allocation5], 48
        $region60: #{tpu_custom_call.1} parent=55 // pred_fallthru
          _
        %s385 = sand.u32 %s29, 1
        %s386 = scalar_lea.sflag [#allocation8], %s385
        %s387 = sand.u32 %s79, 1
        %s388 = smul.addr %s387, 1536
        %s389 = scalar_lea.vmem [#allocation7], %s388
        // Predicated region
        $region61: #{tpu_custom_call.1} parent=55 // pred_check
          %p390 = pneg %p92
        $region62: #{tpu_custom_call.1} parent=55 // pred_check_branch
          %392 = sbr.rel (%p390) target = $region64
        $region63: #{tpu_custom_call.1} parent=55 // pred_region
          %393 = dma.done %s386, 24576
        $region64: #{tpu_custom_call.1} parent=55 // pred_fallthru
          _
        %s394 = sand.u32 %s29, 1
        %s395 = scalar_lea.sflag [#allocation8], %s394
        %s396 = sand.u32 %s105, 1
        %s397 = smul.addr %s396, 4
        %s398 = scalar_lea.vmem [#allocation9], %s397
        // Predicated region
        $region65: #{tpu_custom_call.1} parent=55 // pred_check
          %p399 = pneg %p118
        $region66: #{tpu_custom_call.1} parent=55 // pred_check_branch
          %401 = sbr.rel (%p399) target = $region68
        $region67: #{tpu_custom_call.1} parent=55 // pred_region
          %402 = dma.done %s395, 64
        $region68: #{tpu_custom_call.1} parent=55 // pred_fallthru
          _
        %s403 = sand.u32 %s29, 1
        %s404 = scalar_lea.sflag [#allocation11], %s403
        %s405 = sand.u32 %s131, 1
        %s406 = smul.addr %s405, 1536
        %s407 = scalar_lea.vmem [#allocation10], %s406
        // Predicated region
        $region69: #{tpu_custom_call.1} parent=55 // pred_check
          %p408 = pneg %p144
        $region70: #{tpu_custom_call.1} parent=55 // pred_check_branch
          %410 = sbr.rel (%p408) target = $region72
        $region71: #{tpu_custom_call.1} parent=55 // pred_region
          %411 = dma.done %s404, 24576
        $region72: #{tpu_custom_call.1} parent=55 // pred_fallthru
          _
        // Predicated region
        $region73: #{tpu_custom_call.1} parent=55 // pred_check
          %p412 = pneg %p165
        $region74: #{tpu_custom_call.1} parent=55 // pred_check_branch
          %414 = sbr.rel (%p412) target = $region76
        $region75: #{tpu_custom_call.1} parent=55 // pred_region
          %415 = dma.done [#allocation11], 96
        $region76: #{tpu_custom_call.1} parent=55 // pred_fallthru
          _
        // Predicated region
        $region77: #{tpu_custom_call.1} parent=55 // pred_check
          %p416 = pneg %p228
        $region78: #{tpu_custom_call.1} parent=55 // pred_check_branch
          %418 = sbr.rel (%p416) target = $region80
        $region79: #{tpu_custom_call.1} parent=55 // pred_region
          %419 = dma.done [#allocation14], 768
        $region80: #{tpu_custom_call.1} parent=55 // pred_fallthru
          _
        %p420 = pneg %p45
        %p421 = pneg %p42
        %p422 = pneg %p66
        %p423 = pneg %p63
        %s424 = sand.u32 %s29, 1
        %s425 = scalar_lea.sflag [#allocation8], %s424
        %s426 = sand.u32 %s79, 1
        %s427 = smul.addr %s426, 1536
        %s428 = scalar_lea.vmem [#allocation7], %s427
        %p429 = pneg %p92
        %p430 = pneg %p89
        %s431 = sand.u32 %s29, 1
        %s432 = scalar_lea.sflag [#allocation8], %s431
        %s433 = sand.u32 %s105, 1
        %s434 = smul.addr %s433, 4
        %s435 = scalar_lea.vmem [#allocation9], %s434
        %p436 = pneg %p118
        %p437 = pneg %p115
        %s438 = sand.u32 %s29, 1
        %s439 = scalar_lea.sflag [#allocation11], %s438
        %s440 = sand.u32 %s131, 1
        %s441 = smul.addr %s440, 1536
        %s442 = scalar_lea.vmem [#allocation10], %s441
        %p443 = pneg %p144
        %p444 = pneg %p141
        %p445 = pneg %p165
        %p446 = pneg %p162
        %p447 = pneg %p186
        %p448 = pneg %p183
        %p449 = pneg %p207
        %p450 = pneg %p204
        %p451 = pneg %p228
        %p452 = pneg %p225
        %p453 = pneg %p249
        %p454 = pneg %p246
        %s455 = smul.u32 4, %s29
        %s456 = smul.u32 4, %s29
        %s457 = smul.u32 64, %s29
        %p459 = scmp.eq.s32.totalorder %s29, 0
        // Predicated region
        $region81: #{tpu_custom_call.1} parent=55 // pred_check
          %p460 = pneg %p459
        $region82: #{tpu_custom_call.1} parent=55 // pred_check_branch
          %462 = sbr.rel (%p460) target = $region84
        $region83: #{tpu_custom_call.1} parent=55 // pred_region
          %v463 = vld [vmem:[%s0] sm:$0x3]
          %v464 = vld [vmem:[#allocation4] sm:$0x7]
          %466 = vset.pattern.permute.xlu0 0
          %467 = vperm.xlu0 %466, %v463
          %v468 = vpop.permute.xlu0 %467
          %v471 = vlaneseq
          %v472 = vshrl.u32 %v471, 7
          %v473 = vsub.s32 0, %v472
          %v474 = vrot.slane %v464, %v473
          %v475 = vlaneseq
          %v476 = vshrl.u32 %v475, 7
          %v477 = vsub.s32 1, %v476
          %v478 = vrot.slane %v464, %v477
          %v479 = vlaneseq
          %v480 = vshrl.u32 %v479, 7
          %v481 = vsub.s32 2, %v480
          %v482 = vrot.slane %v464, %v481
          %v486 = vmul.f32 %v468, %v474
          %v487 = vmul.f32 %v468, %v478
          %v488 = vmul.f32 %v468, %v482
          %v489 = vand.u32 2147483647, %v486
          %vm490 = vcmp.le.f32.partialorder %v489, 0.7853982
          %vm491 = vcmp.lt.s32.totalorder %v486, 0
          %v492 = vand.u32 %v486, 2139095040
          %v493 = vshrl.u32 %v492, 23
          %v494 = vsub.s32 %v493, 127
          %v495 = vand.u32 2147483647, %v486
          %v496 = vand.u32 %v495, 8388607
          %v497 = vor.u32 %v496, 8388608
          %v498 = vsub.s32 0, %v497
          %v499 = vadd.s32 %v494, 1
          %vm500 = vcmp.gt.s32.totalorder %v499, 0
          %v501 = vsel %vm500, %v499, 0
          %v502 = vshrl.u32 %v501, 5
          %v503 = vand.u32 %v501, 31
          %v504 = vsub.s32 32, %v503
          %v505 = vshrl.u32 683565275, %v504
          %v506 = vshll.u32 683565275, %v503
          %v507 = vshrl.u32 2475754826, %v504
          %v508 = vor.u32 %v506, %v507
          %v509 = vshll.u32 2475754826, %v503
          %v510 = vshrl.u32 2131351028, %v504
          %v511 = vor.u32 %v509, %v510
          %v512 = vshll.u32 2131351028, %v503
          %v513 = vshrl.u32 2102212464, %v504
          %v514 = vor.u32 %v512, %v513
          %v515 = vshll.u32 2102212464, %v503
          %v516 = vshrl.u32 920167782, %v504
          %v517 = vor.u32 %v515, %v516
          %v518 = vshll.u32 920167782, %v503
          %v519 = vshrl.u32 1326507024, %v504
          %v520 = vor.u32 %v518, %v519
          %vm521 = vcmp.lt.s32.totalorder %v502, 1
          %vm522 = vcmp.lt.s32.totalorder %v502, 2
          %vm523 = vcmp.lt.s32.totalorder %v502, 3
          %vm524 = vcmp.lt.s32.totalorder %v502, 4
          %v525 = vsel %vm521, %v505, %v508
          %v526 = vsel %vm524, %v514, 2102212464
          %v527 = vsel %vm523, %v511, %v526
          %v528 = vsel %vm522, %v525, %v527
          %v529 = vsel %vm521, %v508, %v511
          %v530 = vsel %vm524, %v517, 920167782
          %v531 = vsel %vm523, %v514, %v530
          %v532 = vsel %vm522, %v529, %v531
          %v533 = vsel %vm521, %v511, %v514
          %v534 = vsel %vm524, %v520, 1326507024
          %v535 = vsel %vm523, %v517, %v534
          %v536 = vsel %vm522, %v533, %v535
          %v537 = vshll.u32 %v497, 8
          %v538 = vmul.u32.u64.compose %v537, %v536
          %v539 = vextract.low.u32 %v538
          %v540 = vextract.high.u32 %v538
          %v541 = vmul.u32.u64.compose %v537, %v532
          %v542 = vextract.low.u32 %v541
          %v543 = vextract.high.u32 %v541
          %v544 = vmul.u32 %v537, %v528
          %v545 = vadd.s32 %v540, %v542
          %vm546 = vc.u32 %v540, %v542
          %v547 = vadd.s32 %v543, 1
          %v548 = vsel %vm546, %v547, %v543
          %v549 = vadd.s32 %v544, %v548
          %v550 = vadd.s32 %v549, 536870912
          %v551 = vshrl.u32 %v550, 30
          %v552 = vshll.u32 %v551, 30
          %v553 = vsub.s32 %v549, %v552
          %vm554 = vcmp.lt.s32.totalorder %v553, 0
          %v555 = vsub.s32 0, %v553
          %v556 = vsel %vm554, %v555, %v553
          %v557 = vclz %v556
          %v558 = vsub.s32 %v557, 2
          %vm559 = vcmp.gt.s32.totalorder 0, %v558
          %v560 = vsel %vm559, 0, %v558
          %v561 = vsub.s32 32, %v560
          %v562 = vshll.u32 %v553, %v560
          %v563 = vshrl.u32 %v545, %v561
          %v564 = vor.u32 %v562, %v563
          %v565 = vsub.s32 4294967266, %v560
          %v566 = vadd.s32 %v565, 127
          %v567 = vshll.u32 %v566, 23
          %v568 = vor.u32 4788187, %v567
          %v569 = vand.u32 2147483647, %v568
          %v571 = vcvt.s32.f32 %v564
          %v572 = vmul.f32 %v571, %v569
          %v573 = vxor.u32 %v572, 2147483648
          %v574 = vsel %vm491, %v573, %v572
          %v575 = vsub.s32 4, %v551
          %v576 = vsel %vm491, %v575, %v551
          %v577 = vsel %vm490, %v486, %v574
          %v578 = vsel %vm490, 0, %v576
          %v579 = vcosq.f32.pop %v577
          %v580 = vsinq.f32.pop %v577
          %vm581 = vweird.f32 %v486
          %v582 = vand.u32 %v578, 3
          %vm583 = vcmp.lt.s32.totalorder %v582, 2
          %vm584 = vcmp.eq.s32.totalorder %v582, 0
          %v585 = vxor.u32 %v580, 2147483648
          %v586 = vsel %vm584, %v579, %v585
          %vm587 = vcmp.eq.s32.totalorder %v582, 2
          %v588 = vxor.u32 %v579, 2147483648
          %v589 = vsel %vm587, %v588, %v580
          %v590 = vsel %vm583, %v586, %v589
          %v591 = vsel %vm581, nan, %v590
          %v592 = vand.u32 2147483647, %v487
          %vm593 = vcmp.le.f32.partialorder %v592, 0.7853982
          %vm594 = vcmp.lt.s32.totalorder %v487, 0
          %v595 = vand.u32 %v487, 2139095040
          %v596 = vshrl.u32 %v595, 23
          %v597 = vsub.s32 %v596, 127
          %v598 = vand.u32 2147483647, %v487
          %v599 = vand.u32 %v598, 8388607
          %v600 = vor.u32 %v599, 8388608
          %v601 = vsub.s32 0, %v600
          %v602 = vadd.s32 %v597, 1
          %vm603 = vcmp.gt.s32.totalorder %v602, 0
          %v604 = vsel %vm603, %v602, 0
          %v605 = vshrl.u32 %v604, 5
          %v606 = vand.u32 %v604, 31
          %v607 = vsub.s32 32, %v606
          %v608 = vshrl.u32 683565275, %v607
          %v609 = vshll.u32 683565275, %v606
          %v610 = vshrl.u32 2475754826, %v607
          %v611 = vor.u32 %v609, %v610
          %v612 = vshll.u32 2475754826, %v606
          %v613 = vshrl.u32 2131351028, %v607
          %v614 = vor.u32 %v612, %v613
          %v615 = vshll.u32 2131351028, %v606
          %v616 = vshrl.u32 2102212464, %v607
          %v617 = vor.u32 %v615, %v616
          %v618 = vshll.u32 2102212464, %v606
          %v619 = vshrl.u32 920167782, %v607
          %v620 = vor.u32 %v618, %v619
          %v621 = vshll.u32 920167782, %v606
          %v622 = vshrl.u32 1326507024, %v607
          %v623 = vor.u32 %v621, %v622
          %vm624 = vcmp.lt.s32.totalorder %v605, 1
          %vm625 = vcmp.lt.s32.totalorder %v605, 2
          %vm626 = vcmp.lt.s32.totalorder %v605, 3
          %vm627 = vcmp.lt.s32.totalorder %v605, 4
          %v628 = vsel %vm624, %v608, %v611
          %v629 = vsel %vm627, %v617, 2102212464
          %v630 = vsel %vm626, %v614, %v629
          %v631 = vsel %vm625, %v628, %v630
          %v632 = vsel %vm624, %v611, %v614
          %v633 = vsel %vm627, %v620, 920167782
          %v634 = vsel %vm626, %v617, %v633
          %v635 = vsel %vm625, %v632, %v634
          %v636 = vsel %vm624, %v614, %v617
          %v637 = vsel %vm627, %v623, 1326507024
          %v638 = vsel %vm626, %v620, %v637
          %v639 = vsel %vm625, %v636, %v638
          %v640 = vshll.u32 %v600, 8
          %v641 = vmul.u32.u64.compose %v640, %v639
          %v642 = vextract.low.u32 %v641
          %v643 = vextract.high.u32 %v641
          %v644 = vmul.u32.u64.compose %v640, %v635
          %v645 = vextract.low.u32 %v644
          %v646 = vextract.high.u32 %v644
          %v647 = vmul.u32 %v640, %v631
          %v648 = vadd.s32 %v643, %v645
          %vm649 = vc.u32 %v643, %v645
          %v650 = vadd.s32 %v646, 1
          %v651 = vsel %vm649, %v650, %v646
          %v652 = vadd.s32 %v647, %v651
          %v653 = vadd.s32 %v652, 536870912
          %v654 = vshrl.u32 %v653, 30
          %v655 = vshll.u32 %v654, 30
          %v656 = vsub.s32 %v652, %v655
          %vm657 = vcmp.lt.s32.totalorder %v656, 0
          %v658 = vsub.s32 0, %v656
          %v659 = vsel %vm657, %v658, %v656
          %v660 = vclz %v659
          %v661 = vsub.s32 %v660, 2
          %vm662 = vcmp.gt.s32.totalorder 0, %v661
          %v663 = vsel %vm662, 0, %v661
          %v664 = vsub.s32 32, %v663
          %v665 = vshll.u32 %v656, %v663
          %v666 = vshrl.u32 %v648, %v664
          %v667 = vor.u32 %v665, %v666
          %v668 = vsub.s32 4294967266, %v663
          %v669 = vadd.s32 %v668, 127
          %v670 = vshll.u32 %v669, 23
          %v671 = vor.u32 4788187, %v670
          %v672 = vand.u32 2147483647, %v671
          %v674 = vcvt.s32.f32 %v667
          %v675 = vmul.f32 %v674, %v672
          %v676 = vxor.u32 %v675, 2147483648
          %v677 = vsel %vm594, %v676, %v675
          %v678 = vsub.s32 4, %v654
          %v679 = vsel %vm594, %v678, %v654
          %v680 = vsel %vm593, %v487, %v677
          %v681 = vsel %vm593, 0, %v679
          %v682 = vcosq.f32.pop %v680
          %v683 = vsinq.f32.pop %v680
          %vm684 = vweird.f32 %v487
          %v685 = vand.u32 %v681, 3
          %vm686 = vcmp.lt.s32.totalorder %v685, 2
          %vm687 = vcmp.eq.s32.totalorder %v685, 0
          %v688 = vxor.u32 %v683, 2147483648
          %v689 = vsel %vm687, %v682, %v688
          %vm690 = vcmp.eq.s32.totalorder %v685, 2
          %v691 = vxor.u32 %v682, 2147483648
          %v692 = vsel %vm690, %v691, %v683
          %v693 = vsel %vm686, %v689, %v692
          %v694 = vsel %vm684, nan, %v693
          %v695 = vand.u32 2147483647, %v488
          %vm696 = vcmp.le.f32.partialorder %v695, 0.7853982
          %vm697 = vcmp.lt.s32.totalorder %v488, 0
          %v698 = vand.u32 %v488, 2139095040
          %v699 = vshrl.u32 %v698, 23
          %v700 = vsub.s32 %v699, 127
          %v701 = vand.u32 2147483647, %v488
          %v702 = vand.u32 %v701, 8388607
          %v703 = vor.u32 %v702, 8388608
          %v704 = vsub.s32 0, %v703
          %v705 = vadd.s32 %v700, 1
          %vm706 = vcmp.gt.s32.totalorder %v705, 0
          %v707 = vsel %vm706, %v705, 0
          %v708 = vshrl.u32 %v707, 5
          %v709 = vand.u32 %v707, 31
          %v710 = vsub.s32 32, %v709
          %v711 = vshrl.u32 683565275, %v710
          %v712 = vshll.u32 683565275, %v709
          %v713 = vshrl.u32 2475754826, %v710
          %v714 = vor.u32 %v712, %v713
          %v715 = vshll.u32 2475754826, %v709
          %v716 = vshrl.u32 2131351028, %v710
          %v717 = vor.u32 %v715, %v716
          %v718 = vshll.u32 2131351028, %v709
          %v719 = vshrl.u32 2102212464, %v710
          %v720 = vor.u32 %v718, %v719
          %v721 = vshll.u32 2102212464, %v709
          %v722 = vshrl.u32 920167782, %v710
          %v723 = vor.u32 %v721, %v722
          %v724 = vshll.u32 920167782, %v709
          %v725 = vshrl.u32 1326507024, %v710
          %v726 = vor.u32 %v724, %v725
          %vm727 = vcmp.lt.s32.totalorder %v708, 1
          %vm728 = vcmp.lt.s32.totalorder %v708, 2
          %vm729 = vcmp.lt.s32.totalorder %v708, 3
          %vm730 = vcmp.lt.s32.totalorder %v708, 4
          %v731 = vsel %vm727, %v711, %v714
          %v732 = vsel %vm730, %v720, 2102212464
          %v733 = vsel %vm729, %v717, %v732
          %v734 = vsel %vm728, %v731, %v733
          %v735 = vsel %vm727, %v714, %v717
          %v736 = vsel %vm730, %v723, 920167782
          %v737 = vsel %vm729, %v720, %v736
          %v738 = vsel %vm728, %v735, %v737
          %v739 = vsel %vm727, %v717, %v720
          %v740 = vsel %vm730, %v726, 1326507024
          %v741 = vsel %vm729, %v723, %v740
          %v742 = vsel %vm728, %v739, %v741
          %v743 = vshll.u32 %v703, 8
          %v744 = vmul.u32.u64.compose %v743, %v742
          %v745 = vextract.low.u32 %v744
          %v746 = vextract.high.u32 %v744
          %v747 = vmul.u32.u64.compose %v743, %v738
          %v748 = vextract.low.u32 %v747
          %v749 = vextract.high.u32 %v747
          %v750 = vmul.u32 %v743, %v734
          %v751 = vadd.s32 %v746, %v748
          %vm752 = vc.u32 %v746, %v748
          %v753 = vadd.s32 %v749, 1
          %v754 = vsel %vm752, %v753, %v749
          %v755 = vadd.s32 %v750, %v754
          %v756 = vadd.s32 %v755, 536870912
          %v757 = vshrl.u32 %v756, 30
          %v758 = vshll.u32 %v757, 30
          %v759 = vsub.s32 %v755, %v758
          %vm760 = vcmp.lt.s32.totalorder %v759, 0
          %v761 = vsub.s32 0, %v759
          %v762 = vsel %vm760, %v761, %v759
          %v763 = vclz %v762
          %v764 = vsub.s32 %v763, 2
          %vm765 = vcmp.gt.s32.totalorder 0, %v764
          %v766 = vsel %vm765, 0, %v764
          %v767 = vsub.s32 32, %v766
          %v768 = vshll.u32 %v759, %v766
          %v769 = vshrl.u32 %v751, %v767
          %v770 = vor.u32 %v768, %v769
          %v771 = vsub.s32 4294967266, %v766
          %v772 = vadd.s32 %v771, 127
          %v773 = vshll.u32 %v772, 23
          %v774 = vor.u32 4788187, %v773
          %v775 = vand.u32 2147483647, %v774
          %v777 = vcvt.s32.f32 %v770
          %v778 = vmul.f32 %v777, %v775
          %v779 = vxor.u32 %v778, 2147483648
          %v780 = vsel %vm697, %v779, %v778
          %v781 = vsub.s32 4, %v757
          %v782 = vsel %vm697, %v781, %v757
          %v783 = vsel %vm696, %v488, %v780
          %v784 = vsel %vm696, 0, %v782
          %v785 = vcosq.f32.pop %v783
          %v786 = vsinq.f32.pop %v783
          %vm787 = vweird.f32 %v488
          %v788 = vand.u32 %v784, 3
          %vm789 = vcmp.lt.s32.totalorder %v788, 2
          %vm790 = vcmp.eq.s32.totalorder %v788, 0
          %v791 = vxor.u32 %v786, 2147483648
          %v792 = vsel %vm790, %v785, %v791
          %vm793 = vcmp.eq.s32.totalorder %v788, 2
          %v794 = vxor.u32 %v785, 2147483648
          %v795 = vsel %vm793, %v794, %v786
          %v796 = vsel %vm789, %v792, %v795
          %v797 = vsel %vm787, nan, %v796
          %v801 = vcombine.low %v591, %v694
          %v803 = vunpack.c.l.s4 1983009808
          %v804 = vunpack.c.0.s8 %v803
          %v805 = vlaneseq
          %v806 = vshrl.u32 %v805, 7
          %v807 = vsub.s32 %v804, %v806
          %v808 = vrot.slane %v801, %v807
          %v810 = vunpack.c.l.s4 1983009808
          %v811 = vunpack.c.0.s8 %v810
          %v812 = vlaneseq
          %v813 = vshrl.u32 %v812, 7
          %v814 = vsub.s32 %v811, %v813
          %v815 = vrot.slane %v797, %v814
          %v816 = vcombine.low %v808, %v815
          %818 = vst [vmem:[#allocation2] sm:$0x3f] %v816
          %v819 = vand.u32 2147483647, %v486
          %vm820 = vcmp.le.f32.partialorder %v819, 0.7853982
          %vm821 = vcmp.lt.s32.totalorder %v486, 0
          %v822 = vand.u32 %v486, 2139095040
          %v823 = vshrl.u32 %v822, 23
          %v824 = vsub.s32 %v823, 127
          %v825 = vand.u32 2147483647, %v486
          %v826 = vand.u32 %v825, 8388607
          %v827 = vor.u32 %v826, 8388608
          %v828 = vsub.s32 0, %v827
          %v829 = vadd.s32 %v824, 1
          %vm830 = vcmp.gt.s32.totalorder %v829, 0
          %v831 = vsel %vm830, %v829, 0
          %v832 = vshrl.u32 %v831, 5
          %v833 = vand.u32 %v831, 31
          %v834 = vsub.s32 32, %v833
          %v835 = vshrl.u32 683565275, %v834
          %v836 = vshll.u32 683565275, %v833
          %v837 = vshrl.u32 2475754826, %v834
          %v838 = vor.u32 %v836, %v837
          %v839 = vshll.u32 2475754826, %v833
          %v840 = vshrl.u32 2131351028, %v834
          %v841 = vor.u32 %v839, %v840
          %v842 = vshll.u32 2131351028, %v833
          %v843 = vshrl.u32 2102212464, %v834
          %v844 = vor.u32 %v842, %v843
          %v845 = vshll.u32 2102212464, %v833
          %v846 = vshrl.u32 920167782, %v834
          %v847 = vor.u32 %v845, %v846
          %v848 = vshll.u32 920167782, %v833
          %v849 = vshrl.u32 1326507024, %v834
          %v850 = vor.u32 %v848, %v849
          %vm851 = vcmp.lt.s32.totalorder %v832, 1
          %vm852 = vcmp.lt.s32.totalorder %v832, 2
          %vm853 = vcmp.lt.s32.totalorder %v832, 3
          %vm854 = vcmp.lt.s32.totalorder %v832, 4
          %v855 = vsel %vm851, %v835, %v838
          %v856 = vsel %vm854, %v844, 2102212464
          %v857 = vsel %vm853, %v841, %v856
          %v858 = vsel %vm852, %v855, %v857
          %v859 = vsel %vm851, %v838, %v841
          %v860 = vsel %vm854, %v847, 920167782
          %v861 = vsel %vm853, %v844, %v860
          %v862 = vsel %vm852, %v859, %v861
          %v863 = vsel %vm851, %v841, %v844
          %v864 = vsel %vm854, %v850, 1326507024
          %v865 = vsel %vm853, %v847, %v864
          %v866 = vsel %vm852, %v863, %v865
          %v867 = vshll.u32 %v827, 8
          %v868 = vmul.u32.u64.compose %v867, %v866
          %v869 = vextract.low.u32 %v868
          %v870 = vextract.high.u32 %v868
          %v871 = vmul.u32.u64.compose %v867, %v862
          %v872 = vextract.low.u32 %v871
          %v873 = vextract.high.u32 %v871
          %v874 = vmul.u32 %v867, %v858
          %v875 = vadd.s32 %v870, %v872
          %vm876 = vc.u32 %v870, %v872
          %v877 = vadd.s32 %v873, 1
          %v878 = vsel %vm876, %v877, %v873
          %v879 = vadd.s32 %v874, %v878
          %v880 = vadd.s32 %v879, 536870912
          %v881 = vshrl.u32 %v880, 30
          %v882 = vshll.u32 %v881, 30
          %v883 = vsub.s32 %v879, %v882
          %vm884 = vcmp.lt.s32.totalorder %v883, 0
          %v885 = vsub.s32 0, %v883
          %v886 = vsel %vm884, %v885, %v883
          %v887 = vclz %v886
          %v888 = vsub.s32 %v887, 2
          %vm889 = vcmp.gt.s32.totalorder 0, %v888
          %v890 = vsel %vm889, 0, %v888
          %v891 = vsub.s32 32, %v890
          %v892 = vshll.u32 %v883, %v890
          %v893 = vshrl.u32 %v875, %v891
          %v894 = vor.u32 %v892, %v893
          %v895 = vsub.s32 4294967266, %v890
          %v896 = vadd.s32 %v895, 127
          %v897 = vshll.u32 %v896, 23
          %v898 = vor.u32 4788187, %v897
          %v899 = vand.u32 2147483647, %v898
          %v901 = vcvt.s32.f32 %v894
          %v902 = vmul.f32 %v901, %v899
          %v903 = vxor.u32 %v902, 2147483648
          %v904 = vsel %vm821, %v903, %v902
          %v905 = vsub.s32 4, %v881
          %v906 = vsel %vm821, %v905, %v881
          %v907 = vsel %vm820, %v486, %v904
          %v908 = vsel %vm820, 0, %v906
          %v909 = vcosq.f32.pop %v907
          %v910 = vsinq.f32.pop %v907
          %vm911 = vweird.f32 %v486
          %v912 = vadd.s32 %v908, 3
          %v913 = vand.u32 %v912, 3
          %vm914 = vcmp.lt.s32.totalorder %v913, 2
          %vm915 = vcmp.eq.s32.totalorder %v913, 0
          %v916 = vxor.u32 %v910, 2147483648
          %v917 = vsel %vm915, %v909, %v916
          %vm918 = vcmp.eq.s32.totalorder %v913, 2
          %v919 = vxor.u32 %v909, 2147483648
          %v920 = vsel %vm918, %v919, %v910
          %v921 = vsel %vm914, %v917, %v920
          %v922 = vsel %vm911, nan, %v921
          %v923 = vand.u32 2147483647, %v487
          %vm924 = vcmp.le.f32.partialorder %v923, 0.7853982
          %vm925 = vcmp.lt.s32.totalorder %v487, 0
          %v926 = vand.u32 %v487, 2139095040
          %v927 = vshrl.u32 %v926, 23
          %v928 = vsub.s32 %v927, 127
          %v929 = vand.u32 2147483647, %v487
          %v930 = vand.u32 %v929, 8388607
          %v931 = vor.u32 %v930, 8388608
          %v932 = vsub.s32 0, %v931
          %v933 = vadd.s32 %v928, 1
          %vm934 = vcmp.gt.s32.totalorder %v933, 0
          %v935 = vsel %vm934, %v933, 0
          %v936 = vshrl.u32 %v935, 5
          %v937 = vand.u32 %v935, 31
          %v938 = vsub.s32 32, %v937
          %v939 = vshrl.u32 683565275, %v938
          %v940 = vshll.u32 683565275, %v937
          %v941 = vshrl.u32 2475754826, %v938
          %v942 = vor.u32 %v940, %v941
          %v943 = vshll.u32 2475754826, %v937
          %v944 = vshrl.u32 2131351028, %v938
          %v945 = vor.u32 %v943, %v944
          %v946 = vshll.u32 2131351028, %v937
          %v947 = vshrl.u32 2102212464, %v938
          %v948 = vor.u32 %v946, %v947
          %v949 = vshll.u32 2102212464, %v937
          %v950 = vshrl.u32 920167782, %v938
          %v951 = vor.u32 %v949, %v950
          %v952 = vshll.u32 920167782, %v937
          %v953 = vshrl.u32 1326507024, %v938
          %v954 = vor.u32 %v952, %v953
          %vm955 = vcmp.lt.s32.totalorder %v936, 1
          %vm956 = vcmp.lt.s32.totalorder %v936, 2
          %vm957 = vcmp.lt.s32.totalorder %v936, 3
          %vm958 = vcmp.lt.s32.totalorder %v936, 4
          %v959 = vsel %vm955, %v939, %v942
          %v960 = vsel %vm958, %v948, 2102212464
          %v961 = vsel %vm957, %v945, %v960
          %v962 = vsel %vm956, %v959, %v961
          %v963 = vsel %vm955, %v942, %v945
          %v964 = vsel %vm958, %v951, 920167782
          %v965 = vsel %vm957, %v948, %v964
          %v966 = vsel %vm956, %v963, %v965
          %v967 = vsel %vm955, %v945, %v948
          %v968 = vsel %vm958, %v954, 1326507024
          %v969 = vsel %vm957, %v951, %v968
          %v970 = vsel %vm956, %v967, %v969
          %v971 = vshll.u32 %v931, 8
          %v972 = vmul.u32.u64.compose %v971, %v970
          %v973 = vextract.low.u32 %v972
          %v974 = vextract.high.u32 %v972
          %v975 = vmul.u32.u64.compose %v971, %v966
          %v976 = vextract.low.u32 %v975
          %v977 = vextract.high.u32 %v975
          %v978 = vmul.u32 %v971, %v962
          %v979 = vadd.s32 %v974, %v976
          %vm980 = vc.u32 %v974, %v976
          %v981 = vadd.s32 %v977, 1
          %v982 = vsel %vm980, %v981, %v977
          %v983 = vadd.s32 %v978, %v982
          %v984 = vadd.s32 %v983, 536870912
          %v985 = vshrl.u32 %v984, 30
          %v986 = vshll.u32 %v985, 30
          %v987 = vsub.s32 %v983, %v986
          %vm988 = vcmp.lt.s32.totalorder %v987, 0
          %v989 = vsub.s32 0, %v987
          %v990 = vsel %vm988, %v989, %v987
          %v991 = vclz %v990
          %v992 = vsub.s32 %v991, 2
          %vm993 = vcmp.gt.s32.totalorder 0, %v992
          %v994 = vsel %vm993, 0, %v992
          %v995 = vsub.s32 32, %v994
          %v996 = vshll.u32 %v987, %v994
          %v997 = vshrl.u32 %v979, %v995
          %v998 = vor.u32 %v996, %v997
          %v999 = vsub.s32 4294967266, %v994
          %v1000 = vadd.s32 %v999, 127
          %v1001 = vshll.u32 %v1000, 23
          %v1002 = vor.u32 4788187, %v1001
          %v1003 = vand.u32 2147483647, %v1002
          %v1005 = vcvt.s32.f32 %v998
          %v1006 = vmul.f32 %v1005, %v1003
          %v1007 = vxor.u32 %v1006, 2147483648
          %v1008 = vsel %vm925, %v1007, %v1006
          %v1009 = vsub.s32 4, %v985
          %v1010 = vsel %vm925, %v1009, %v985
          %v1011 = vsel %vm924, %v487, %v1008
          %v1012 = vsel %vm924, 0, %v1010
          %v1013 = vcosq.f32.pop %v1011
          %v1014 = vsinq.f32.pop %v1011
          %vm1015 = vweird.f32 %v487
          %v1016 = vadd.s32 %v1012, 3
          %v1017 = vand.u32 %v1016, 3
          %vm1018 = vcmp.lt.s32.totalorder %v1017, 2
          %vm1019 = vcmp.eq.s32.totalorder %v1017, 0
          %v1020 = vxor.u32 %v1014, 2147483648
          %v1021 = vsel %vm1019, %v1013, %v1020
          %vm1022 = vcmp.eq.s32.totalorder %v1017, 2
          %v1023 = vxor.u32 %v1013, 2147483648
          %v1024 = vsel %vm1022, %v1023, %v1014
          %v1025 = vsel %vm1018, %v1021, %v1024
          %v1026 = vsel %vm1015, nan, %v1025
          %v1027 = vand.u32 2147483647, %v488
          %vm1028 = vcmp.le.f32.partialorder %v1027, 0.7853982
          %vm1029 = vcmp.lt.s32.totalorder %v488, 0
          %v1030 = vand.u32 %v488, 2139095040
          %v1031 = vshrl.u32 %v1030, 23
          %v1032 = vsub.s32 %v1031, 127
          %v1033 = vand.u32 2147483647, %v488
          %v1034 = vand.u32 %v1033, 8388607
          %v1035 = vor.u32 %v1034, 8388608
          %v1036 = vsub.s32 0, %v1035
          %v1037 = vadd.s32 %v1032, 1
          %vm1038 = vcmp.gt.s32.totalorder %v1037, 0
          %v1039 = vsel %vm1038, %v1037, 0
          %v1040 = vshrl.u32 %v1039, 5
          %v1041 = vand.u32 %v1039, 31
          %v1042 = vsub.s32 32, %v1041
          %v1043 = vshrl.u32 683565275, %v1042
          %v1044 = vshll.u32 683565275, %v1041
          %v1045 = vshrl.u32 2475754826, %v1042
          %v1046 = vor.u32 %v1044, %v1045
          %v1047 = vshll.u32 2475754826, %v1041
          %v1048 = vshrl.u32 2131351028, %v1042
          %v1049 = vor.u32 %v1047, %v1048
          %v1050 = vshll.u32 2131351028, %v1041
          %v1051 = vshrl.u32 2102212464, %v1042
          %v1052 = vor.u32 %v1050, %v1051
          %v1053 = vshll.u32 2102212464, %v1041
          %v1054 = vshrl.u32 920167782, %v1042
          %v1055 = vor.u32 %v1053, %v1054
          %v1056 = vshll.u32 920167782, %v1041
          %v1057 = vshrl.u32 1326507024, %v1042
          %v1058 = vor.u32 %v1056, %v1057
          %vm1059 = vcmp.lt.s32.totalorder %v1040, 1
          %vm1060 = vcmp.lt.s32.totalorder %v1040, 2
          %vm1061 = vcmp.lt.s32.totalorder %v1040, 3
          %vm1062 = vcmp.lt.s32.totalorder %v1040, 4
          %v1063 = vsel %vm1059, %v1043, %v1046
          %v1064 = vsel %vm1062, %v1052, 2102212464
          %v1065 = vsel %vm1061, %v1049, %v1064
          %v1066 = vsel %vm1060, %v1063, %v1065
          %v1067 = vsel %vm1059, %v1046, %v1049
          %v1068 = vsel %vm1062, %v1055, 920167782
          %v1069 = vsel %vm1061, %v1052, %v1068
          %v1070 = vsel %vm1060, %v1067, %v1069
          %v1071 = vsel %vm1059, %v1049, %v1052
          %v1072 = vsel %vm1062, %v1058, 1326507024
          %v1073 = vsel %vm1061, %v1055, %v1072
          %v1074 = vsel %vm1060, %v1071, %v1073
          %v1075 = vshll.u32 %v1035, 8
          %v1076 = vmul.u32.u64.compose %v1075, %v1074
          %v1077 = vextract.low.u32 %v1076
          %v1078 = vextract.high.u32 %v1076
          %v1079 = vmul.u32.u64.compose %v1075, %v1070
          %v1080 = vextract.low.u32 %v1079
          %v1081 = vextract.high.u32 %v1079
          %v1082 = vmul.u32 %v1075, %v1066
          %v1083 = vadd.s32 %v1078, %v1080
          %vm1084 = vc.u32 %v1078, %v1080
          %v1085 = vadd.s32 %v1081, 1
          %v1086 = vsel %vm1084, %v1085, %v1081
          %v1087 = vadd.s32 %v1082, %v1086
          %v1088 = vadd.s32 %v1087, 536870912
          %v1089 = vshrl.u32 %v1088, 30
          %v1090 = vshll.u32 %v1089, 30
          %v1091 = vsub.s32 %v1087, %v1090
          %vm1092 = vcmp.lt.s32.totalorder %v1091, 0
          %v1093 = vsub.s32 0, %v1091
          %v1094 = vsel %vm1092, %v1093, %v1091
          %v1095 = vclz %v1094
          %v1096 = vsub.s32 %v1095, 2
          %vm1097 = vcmp.gt.s32.totalorder 0, %v1096
          %v1098 = vsel %vm1097, 0, %v1096
          %v1099 = vsub.s32 32, %v1098
          %v1100 = vshll.u32 %v1091, %v1098
          %v1101 = vshrl.u32 %v1083, %v1099
          %v1102 = vor.u32 %v1100, %v1101
          %v1103 = vsub.s32 4294967266, %v1098
          %v1104 = vadd.s32 %v1103, 127
          %v1105 = vshll.u32 %v1104, 23
          %v1106 = vor.u32 4788187, %v1105
          %v1107 = vand.u32 2147483647, %v1106
          %v1109 = vcvt.s32.f32 %v1102
          %v1110 = vmul.f32 %v1109, %v1107
          %v1111 = vxor.u32 %v1110, 2147483648
          %v1112 = vsel %vm1029, %v1111, %v1110
          %v1113 = vsub.s32 4, %v1089
          %v1114 = vsel %vm1029, %v1113, %v1089
          %v1115 = vsel %vm1028, %v488, %v1112
          %v1116 = vsel %vm1028, 0, %v1114
          %v1117 = vcosq.f32.pop %v1115
          %v1118 = vsinq.f32.pop %v1115
          %vm1119 = vweird.f32 %v488
          %v1120 = vadd.s32 %v1116, 3
          %v1121 = vand.u32 %v1120, 3
          %vm1122 = vcmp.lt.s32.totalorder %v1121, 2
          %vm1123 = vcmp.eq.s32.totalorder %v1121, 0
          %v1124 = vxor.u32 %v1118, 2147483648
          %v1125 = vsel %vm1123, %v1117, %v1124
          %vm1126 = vcmp.eq.s32.totalorder %v1121, 2
          %v1127 = vxor.u32 %v1117, 2147483648
          %v1128 = vsel %vm1126, %v1127, %v1118
          %v1129 = vsel %vm1122, %v1125, %v1128
          %v1130 = vsel %vm1119, nan, %v1129
          %v1134 = vcombine.low %v922, %v1026
          %v1136 = vunpack.c.l.s4 1983009808
          %v1137 = vunpack.c.0.s8 %v1136
          %v1138 = vlaneseq
          %v1139 = vshrl.u32 %v1138, 7
          %v1140 = vsub.s32 %v1137, %v1139
          %v1141 = vrot.slane %v1134, %v1140
          %v1143 = vunpack.c.l.s4 1983009808
          %v1144 = vunpack.c.0.s8 %v1143
          %v1145 = vlaneseq
          %v1146 = vshrl.u32 %v1145, 7
          %v1147 = vsub.s32 %v1144, %v1146
          %v1148 = vrot.slane %v1130, %v1147
          %v1149 = vcombine.low %v1141, %v1148
          %1151 = vst [vmem:[#allocation2 + $0x6] sm:$0x3f] %v1149
          %1152 = vst [vmem:[#allocation3] sm:$0xff] 0.0
          %1153 = vst [vmem:[#allocation3 + $0x8] sm:$0xf] 0.0
        $region84: #{tpu_custom_call.1} parent=55 // pred_fallthru
          _
        %v1154 = vld [vmem:[#allocation2] sm:$0xff]
        %v1155 = vld [vmem:[#allocation2 + $0x8] sm:$0xf]
        %v1158 = vcombine.high %v1154, %v1154
        %v1160 = vunpack.c.l.s4 1983009808
        %v1161 = vunpack.c.0.s8 %v1160
        %v1162 = vlaneseq
        %v1163 = vshrl.u32 %v1162, 7
        %v1164 = vsub.s32 %v1161, %v1163
        %v1165 = vrot.slane %v1154, %v1164
        %v1167 = vunpack.c.l.s4 1983009808
        %v1168 = vunpack.c.0.s8 %v1167
        %v1169 = vlaneseq
        %v1170 = vshrl.u32 %v1169, 7
        %v1171 = vsub.s32 %v1168, %v1170
        %v1172 = vrot.slane %v1158, %v1171
        %v1173 = vcombine.high %v1165, %v1165
        %v1174 = vcombine.high %v1172, %v1172
        %v1176 = vunpack.c.l.s4 1983009808
        %v1177 = vunpack.c.0.s8 %v1176
        %v1178 = vlaneseq
        %v1179 = vshrl.u32 %v1178, 7
        %v1180 = vsub.s32 %v1177, %v1179
        %v1181 = vrot.slane %v1155, %v1180
        %v1182 = vcombine.high %v1181, %v1181
        %v1189 = vpack.c.bf16 %v1165, %v1165
        %v1190 = vpack.c.bf16 %v1173, %v1173
        %v1191 = vpack.c.bf16 %v1172, %v1172
        %v1192 = vpack.c.bf16 %v1174, %v1174
        %v1193 = vpack.c.bf16 %v1181, %v1181
        %v1194 = vpack.c.bf16 %v1182, %v1182
        %v1195 = vld [vmem:[%s389] sm:$0xff]
        %v1196 = vld [vmem:[%s389 + $0x8] sm:$0xff]
        %v1197 = vld [vmem:[%s389 + $0x10] sm:$0xff]
        %v1198 = vld [vmem:[%s389 + $0x18] sm:$0xff]
        %v1199 = vld [vmem:[%s389 + $0x20] sm:$0xff]
        %v1200 = vld [vmem:[%s389 + $0x28] sm:$0xff]
        %v1201 = vld [vmem:[%s389 + $0x30] sm:$0xff]
        %v1202 = vld [vmem:[%s389 + $0x38] sm:$0xff]
        %v1203 = vld [vmem:[%s389 + $0x40] sm:$0xff]
        %v1204 = vld [vmem:[%s389 + $0x48] sm:$0xff]
        %v1205 = vld [vmem:[%s389 + $0x50] sm:$0xff]
        %v1206 = vld [vmem:[%s389 + $0x58] sm:$0xff]
        %v1207 = vld [vmem:[%s389 + $0x60] sm:$0xff]
        %v1208 = vld [vmem:[%s389 + $0x68] sm:$0xff]
        %v1209 = vld [vmem:[%s389 + $0x70] sm:$0xff]
        %v1210 = vld [vmem:[%s389 + $0x78] sm:$0xff]
        %v1211 = vld [vmem:[%s389 + $0x80] sm:$0xff]
        %v1212 = vld [vmem:[%s389 + $0x88] sm:$0xff]
        %v1213 = vld [vmem:[%s389 + $0x90] sm:$0xff]
        %v1214 = vld [vmem:[%s389 + $0x98] sm:$0xff]
        %v1215 = vld [vmem:[%s389 + $0xa0] sm:$0xff]
        %v1216 = vld [vmem:[%s389 + $0xa8] sm:$0xff]
        %v1217 = vld [vmem:[%s389 + $0xb0] sm:$0xff]
        %v1218 = vld [vmem:[%s389 + $0xb8] sm:$0xff]
        %v1219 = vld [vmem:[%s389 + $0xc0] sm:$0xff]
        %v1220 = vld [vmem:[%s389 + $0xc8] sm:$0xff]
        %v1221 = vld [vmem:[%s389 + $0xd0] sm:$0xff]
        %v1222 = vld [vmem:[%s389 + $0xd8] sm:$0xff]
        %v1223 = vld [vmem:[%s389 + $0xe0] sm:$0xff]
        %v1224 = vld [vmem:[%s389 + $0xe8] sm:$0xff]
        %v1225 = vld [vmem:[%s389 + $0xf0] sm:$0xff]
        %v1226 = vld [vmem:[%s389 + $0xf8] sm:$0xff]
        %v1227 = vld [vmem:[%s389 + $0x100] sm:$0xff]
        %v1228 = vld [vmem:[%s389 + $0x108] sm:$0xff]
        %v1229 = vld [vmem:[%s389 + $0x110] sm:$0xff]
        %v1230 = vld [vmem:[%s389 + $0x118] sm:$0xff]
        %v1231 = vld [vmem:[%s389 + $0x120] sm:$0xff]
        %v1232 = vld [vmem:[%s389 + $0x128] sm:$0xff]
        %v1233 = vld [vmem:[%s389 + $0x130] sm:$0xff]
        %v1234 = vld [vmem:[%s389 + $0x138] sm:$0xff]
        %v1235 = vld [vmem:[%s389 + $0x140] sm:$0xff]
        %v1236 = vld [vmem:[%s389 + $0x148] sm:$0xff]
        %v1237 = vld [vmem:[%s389 + $0x150] sm:$0xff]
        %v1238 = vld [vmem:[%s389 + $0x158] sm:$0xff]
        %v1239 = vld [vmem:[%s389 + $0x160] sm:$0xff]
        %v1240 = vld [vmem:[%s389 + $0x168] sm:$0xff]
        %v1241 = vld [vmem:[%s389 + $0x170] sm:$0xff]
        %v1242 = vld [vmem:[%s389 + $0x178] sm:$0xff]
        %v1243 = vld [vmem:[%s389 + $0x180] sm:$0xff]
        %v1244 = vld [vmem:[%s389 + $0x188] sm:$0xff]
        %v1245 = vld [vmem:[%s389 + $0x190] sm:$0xff]
        %v1246 = vld [vmem:[%s389 + $0x198] sm:$0xff]
        %v1247 = vld [vmem:[%s389 + $0x1a0] sm:$0xff]
        %v1248 = vld [vmem:[%s389 + $0x1a8] sm:$0xff]
        %v1249 = vld [vmem:[%s389 + $0x1b0] sm:$0xff]
        %v1250 = vld [vmem:[%s389 + $0x1b8] sm:$0xff]
        %v1251 = vld [vmem:[%s389 + $0x1c0] sm:$0xff]
        %v1252 = vld [vmem:[%s389 + $0x1c8] sm:$0xff]
        %v1253 = vld [vmem:[%s389 + $0x1d0] sm:$0xff]
        %v1254 = vld [vmem:[%s389 + $0x1d8] sm:$0xff]
        %v1255 = vld [vmem:[%s389 + $0x1e0] sm:$0xff]
        %v1256 = vld [vmem:[%s389 + $0x1e8] sm:$0xff]
        %v1257 = vld [vmem:[%s389 + $0x1f0] sm:$0xff]
        %v1258 = vld [vmem:[%s389 + $0x1f8] sm:$0xff]
        %v1259 = vld [vmem:[%s389 + $0x200] sm:$0xff]
        %v1260 = vld [vmem:[%s389 + $0x208] sm:$0xff]
        %v1261 = vld [vmem:[%s389 + $0x210] sm:$0xff]
        %v1262 = vld [vmem:[%s389 + $0x218] sm:$0xff]
        %v1263 = vld [vmem:[%s389 + $0x220] sm:$0xff]
        %v1264 = vld [vmem:[%s389 + $0x228] sm:$0xff]
        %v1265 = vld [vmem:[%s389 + $0x230] sm:$0xff]
        %v1266 = vld [vmem:[%s389 + $0x238] sm:$0xff]
        %v1267 = vld [vmem:[%s389 + $0x240] sm:$0xff]
        %v1268 = vld [vmem:[%s389 + $0x248] sm:$0xff]
        %v1269 = vld [vmem:[%s389 + $0x250] sm:$0xff]
        %v1270 = vld [vmem:[%s389 + $0x258] sm:$0xff]
        %v1271 = vld [vmem:[%s389 + $0x260] sm:$0xff]
        %v1272 = vld [vmem:[%s389 + $0x268] sm:$0xff]
        %v1273 = vld [vmem:[%s389 + $0x270] sm:$0xff]
        %v1274 = vld [vmem:[%s389 + $0x278] sm:$0xff]
        %v1275 = vld [vmem:[%s389 + $0x280] sm:$0xff]
        %v1276 = vld [vmem:[%s389 + $0x288] sm:$0xff]
        %v1277 = vld [vmem:[%s389 + $0x290] sm:$0xff]
        %v1278 = vld [vmem:[%s389 + $0x298] sm:$0xff]
        %v1279 = vld [vmem:[%s389 + $0x2a0] sm:$0xff]
        %v1280 = vld [vmem:[%s389 + $0x2a8] sm:$0xff]
        %v1281 = vld [vmem:[%s389 + $0x2b0] sm:$0xff]
        %v1282 = vld [vmem:[%s389 + $0x2b8] sm:$0xff]
        %v1283 = vld [vmem:[%s389 + $0x2c0] sm:$0xff]
        %v1284 = vld [vmem:[%s389 + $0x2c8] sm:$0xff]
        %v1285 = vld [vmem:[%s389 + $0x2d0] sm:$0xff]
        %v1286 = vld [vmem:[%s389 + $0x2d8] sm:$0xff]
        %v1287 = vld [vmem:[%s389 + $0x2e0] sm:$0xff]
        %v1288 = vld [vmem:[%s389 + $0x2e8] sm:$0xff]
        %v1289 = vld [vmem:[%s389 + $0x2f0] sm:$0xff]
        %v1290 = vld [vmem:[%s389 + $0x2f8] sm:$0xff]
        %v1291 = vld [vmem:[%s389 + $0x300] sm:$0xff]
        %v1292 = vld [vmem:[%s389 + $0x308] sm:$0xff]
        %v1293 = vld [vmem:[%s389 + $0x310] sm:$0xff]
        %v1294 = vld [vmem:[%s389 + $0x318] sm:$0xff]
        %v1295 = vld [vmem:[%s389 + $0x320] sm:$0xff]
        %v1296 = vld [vmem:[%s389 + $0x328] sm:$0xff]
        %v1297 = vld [vmem:[%s389 + $0x330] sm:$0xff]
        %v1298 = vld [vmem:[%s389 + $0x338] sm:$0xff]
        %v1299 = vld [vmem:[%s389 + $0x340] sm:$0xff]
        %v1300 = vld [vmem:[%s389 + $0x348] sm:$0xff]
        %v1301 = vld [vmem:[%s389 + $0x350] sm:$0xff]
        %v1302 = vld [vmem:[%s389 + $0x358] sm:$0xff]
        %v1303 = vld [vmem:[%s389 + $0x360] sm:$0xff]
        %v1304 = vld [vmem:[%s389 + $0x368] sm:$0xff]
        %v1305 = vld [vmem:[%s389 + $0x370] sm:$0xff]
        %v1306 = vld [vmem:[%s389 + $0x378] sm:$0xff]
        %v1307 = vld [vmem:[%s389 + $0x380] sm:$0xff]
        %v1308 = vld [vmem:[%s389 + $0x388] sm:$0xff]
        %v1309 = vld [vmem:[%s389 + $0x390] sm:$0xff]
        %v1310 = vld [vmem:[%s389 + $0x398] sm:$0xff]
        %v1311 = vld [vmem:[%s389 + $0x3a0] sm:$0xff]
        %v1312 = vld [vmem:[%s389 + $0x3a8] sm:$0xff]
        %v1313 = vld [vmem:[%s389 + $0x3b0] sm:$0xff]
        %v1314 = vld [vmem:[%s389 + $0x3b8] sm:$0xff]
        %v1315 = vld [vmem:[%s389 + $0x3c0] sm:$0xff]
        %v1316 = vld [vmem:[%s389 + $0x3c8] sm:$0xff]
        %v1317 = vld [vmem:[%s389 + $0x3d0] sm:$0xff]
        %v1318 = vld [vmem:[%s389 + $0x3d8] sm:$0xff]
        %v1319 = vld [vmem:[%s389 + $0x3e0] sm:$0xff]
        %v1320 = vld [vmem:[%s389 + $0x3e8] sm:$0xff]
        %v1321 = vld [vmem:[%s389 + $0x3f0] sm:$0xff]
        %v1322 = vld [vmem:[%s389 + $0x3f8] sm:$0xff]
        %v1323 = vld [vmem:[%s389 + $0x400] sm:$0xff]
        %v1324 = vld [vmem:[%s389 + $0x408] sm:$0xff]
        %v1325 = vld [vmem:[%s389 + $0x410] sm:$0xff]
        %v1326 = vld [vmem:[%s389 + $0x418] sm:$0xff]
        %v1327 = vld [vmem:[%s389 + $0x420] sm:$0xff]
        %v1328 = vld [vmem:[%s389 + $0x428] sm:$0xff]
        %v1329 = vld [vmem:[%s389 + $0x430] sm:$0xff]
        %v1330 = vld [vmem:[%s389 + $0x438] sm:$0xff]
        %v1331 = vld [vmem:[%s389 + $0x440] sm:$0xff]
        %v1332 = vld [vmem:[%s389 + $0x448] sm:$0xff]
        %v1333 = vld [vmem:[%s389 + $0x450] sm:$0xff]
        %v1334 = vld [vmem:[%s389 + $0x458] sm:$0xff]
        %v1335 = vld [vmem:[%s389 + $0x460] sm:$0xff]
        %v1336 = vld [vmem:[%s389 + $0x468] sm:$0xff]
        %v1337 = vld [vmem:[%s389 + $0x470] sm:$0xff]
        %v1338 = vld [vmem:[%s389 + $0x478] sm:$0xff]
        %v1339 = vld [vmem:[%s389 + $0x480] sm:$0xff]
        %v1340 = vld [vmem:[%s389 + $0x488] sm:$0xff]
        %v1341 = vld [vmem:[%s389 + $0x490] sm:$0xff]
        %v1342 = vld [vmem:[%s389 + $0x498] sm:$0xff]
        %v1343 = vld [vmem:[%s389 + $0x4a0] sm:$0xff]
        %v1344 = vld [vmem:[%s389 + $0x4a8] sm:$0xff]
        %v1345 = vld [vmem:[%s389 + $0x4b0] sm:$0xff]
        %v1346 = vld [vmem:[%s389 + $0x4b8] sm:$0xff]
        %v1347 = vld [vmem:[%s389 + $0x4c0] sm:$0xff]
        %v1348 = vld [vmem:[%s389 + $0x4c8] sm:$0xff]
        %v1349 = vld [vmem:[%s389 + $0x4d0] sm:$0xff]
        %v1350 = vld [vmem:[%s389 + $0x4d8] sm:$0xff]
        %v1351 = vld [vmem:[%s389 + $0x4e0] sm:$0xff]
        %v1352 = vld [vmem:[%s389 + $0x4e8] sm:$0xff]
        %v1353 = vld [vmem:[%s389 + $0x4f0] sm:$0xff]
        %v1354 = vld [vmem:[%s389 + $0x4f8] sm:$0xff]
        %v1355 = vld [vmem:[%s389 + $0x500] sm:$0xff]
        %v1356 = vld [vmem:[%s389 + $0x508] sm:$0xff]
        %v1357 = vld [vmem:[%s389 + $0x510] sm:$0xff]
        %v1358 = vld [vmem:[%s389 + $0x518] sm:$0xff]
        %v1359 = vld [vmem:[%s389 + $0x520] sm:$0xff]
        %v1360 = vld [vmem:[%s389 + $0x528] sm:$0xff]
        %v1361 = vld [vmem:[%s389 + $0x530] sm:$0xff]
        %v1362 = vld [vmem:[%s389 + $0x538] sm:$0xff]
        %v1363 = vld [vmem:[%s389 + $0x540] sm:$0xff]
        %v1364 = vld [vmem:[%s389 + $0x548] sm:$0xff]
        %v1365 = vld [vmem:[%s389 + $0x550] sm:$0xff]
        %v1366 = vld [vmem:[%s389 + $0x558] sm:$0xff]
        %v1367 = vld [vmem:[%s389 + $0x560] sm:$0xff]
        %v1368 = vld [vmem:[%s389 + $0x568] sm:$0xff]
        %v1369 = vld [vmem:[%s389 + $0x570] sm:$0xff]
        %v1370 = vld [vmem:[%s389 + $0x578] sm:$0xff]
        %v1371 = vld [vmem:[%s389 + $0x580] sm:$0xff]
        %v1372 = vld [vmem:[%s389 + $0x588] sm:$0xff]
        %v1373 = vld [vmem:[%s389 + $0x590] sm:$0xff]
        %v1374 = vld [vmem:[%s389 + $0x598] sm:$0xff]
        %v1375 = vld [vmem:[%s389 + $0x5a0] sm:$0xff]
        %v1376 = vld [vmem:[%s389 + $0x5a8] sm:$0xff]
        %v1377 = vld [vmem:[%s389 + $0x5b0] sm:$0xff]
        %v1378 = vld [vmem:[%s389 + $0x5b8] sm:$0xff]
        %v1379 = vld [vmem:[%s389 + $0x5c0] sm:$0xff]
        %v1380 = vld [vmem:[%s389 + $0x5c8] sm:$0xff]
        %v1381 = vld [vmem:[%s389 + $0x5d0] sm:$0xff]
        %v1382 = vld [vmem:[%s389 + $0x5d8] sm:$0xff]
        %v1383 = vld [vmem:[%s389 + $0x5e0] sm:$0xff]
        %v1384 = vld [vmem:[%s389 + $0x5e8] sm:$0xff]
        %v1385 = vld [vmem:[%s389 + $0x5f0] sm:$0xff]
        %v1386 = vld [vmem:[%s389 + $0x5f8] sm:$0xff]
        %v1387 = vld [vmem:[%s398] sm:$0xf]
        %v1389 = vlaneseq
        %v1390 = vshrl.u32 %v1389, 7
        %v1391 = vsub.s32 0, %v1390
        %v1392 = vrot.slane %v1387, %v1391
        %v1393 = vlaneseq
        %v1394 = vshrl.u32 %v1393, 7
        %v1395 = vsub.s32 1, %v1394
        %v1396 = vrot.slane %v1387, %v1395
        %v1397 = vlaneseq
        %v1398 = vshrl.u32 %v1397, 7
        %v1399 = vsub.s32 2, %v1398
        %v1400 = vrot.slane %v1387, %v1399
        %v1401 = vlaneseq
        %v1402 = vshrl.u32 %v1401, 7
        %v1403 = vsub.s32 3, %v1402
        %v1404 = vrot.slane %v1387, %v1403
        %v1601 = vunpack.c.l.b16 %v1195
        %v1602 = vunpack.c.h.b16 %v1195
        %v1603 = vunpack.c.l.b16 %v1196
        %v1604 = vunpack.c.h.b16 %v1196
        %v1605 = vunpack.c.l.b16 %v1197
        %v1606 = vunpack.c.h.b16 %v1197
        %v1607 = vunpack.c.l.b16 %v1198
        %v1608 = vunpack.c.h.b16 %v1198
        %v1609 = vunpack.c.l.b16 %v1199
        %v1610 = vunpack.c.h.b16 %v1199
        %v1611 = vunpack.c.l.b16 %v1200
        %v1612 = vunpack.c.h.b16 %v1200
        %v1613 = vunpack.c.l.b16 %v1201
        %v1614 = vunpack.c.h.b16 %v1201
        %v1615 = vunpack.c.l.b16 %v1202
        %v1616 = vunpack.c.h.b16 %v1202
        %v1617 = vunpack.c.l.b16 %v1203
        %v1618 = vunpack.c.h.b16 %v1203
        %v1619 = vunpack.c.l.b16 %v1204
        %v1620 = vunpack.c.h.b16 %v1204
        %v1621 = vunpack.c.l.b16 %v1205
        %v1622 = vunpack.c.h.b16 %v1205
        %v1623 = vunpack.c.l.b16 %v1206
        %v1624 = vunpack.c.h.b16 %v1206
        %v1625 = vunpack.c.l.b16 %v1207
        %v1626 = vunpack.c.h.b16 %v1207
        %v1627 = vunpack.c.l.b16 %v1208
        %v1628 = vunpack.c.h.b16 %v1208
        %v1629 = vunpack.c.l.b16 %v1209
        %v1630 = vunpack.c.h.b16 %v1209
        %v1631 = vunpack.c.l.b16 %v1210
        %v1632 = vunpack.c.h.b16 %v1210
        %v1633 = vunpack.c.l.b16 %v1211
        %v1634 = vunpack.c.h.b16 %v1211
        %v1635 = vunpack.c.l.b16 %v1212
        %v1636 = vunpack.c.h.b16 %v1212
        %v1637 = vunpack.c.l.b16 %v1213
        %v1638 = vunpack.c.h.b16 %v1213
        %v1639 = vunpack.c.l.b16 %v1214
        %v1640 = vunpack.c.h.b16 %v1214
        %v1641 = vunpack.c.l.b16 %v1215
        %v1642 = vunpack.c.h.b16 %v1215
        %v1643 = vunpack.c.l.b16 %v1216
        %v1644 = vunpack.c.h.b16 %v1216
        %v1645 = vunpack.c.l.b16 %v1217
        %v1646 = vunpack.c.h.b16 %v1217
        %v1647 = vunpack.c.l.b16 %v1218
        %v1648 = vunpack.c.h.b16 %v1218
        %v1649 = vunpack.c.l.b16 %v1219
        %v1650 = vunpack.c.h.b16 %v1219
        %v1651 = vunpack.c.l.b16 %v1220
        %v1652 = vunpack.c.h.b16 %v1220
        %v1653 = vunpack.c.l.b16 %v1221
        %v1654 = vunpack.c.h.b16 %v1221
        %v1655 = vunpack.c.l.b16 %v1222
        %v1656 = vunpack.c.h.b16 %v1222
        %v1657 = vunpack.c.l.b16 %v1223
        %v1658 = vunpack.c.h.b16 %v1223
        %v1659 = vunpack.c.l.b16 %v1224
        %v1660 = vunpack.c.h.b16 %v1224
        %v1661 = vunpack.c.l.b16 %v1225
        %v1662 = vunpack.c.h.b16 %v1225
        %v1663 = vunpack.c.l.b16 %v1226
        %v1664 = vunpack.c.h.b16 %v1226
        %v1665 = vunpack.c.l.b16 %v1227
        %v1666 = vunpack.c.h.b16 %v1227
        %v1667 = vunpack.c.l.b16 %v1228
        %v1668 = vunpack.c.h.b16 %v1228
        %v1669 = vunpack.c.l.b16 %v1229
        %v1670 = vunpack.c.h.b16 %v1229
        %v1671 = vunpack.c.l.b16 %v1230
        %v1672 = vunpack.c.h.b16 %v1230
        %v1673 = vunpack.c.l.b16 %v1231
        %v1674 = vunpack.c.h.b16 %v1231
        %v1675 = vunpack.c.l.b16 %v1232
        %v1676 = vunpack.c.h.b16 %v1232
        %v1677 = vunpack.c.l.b16 %v1233
        %v1678 = vunpack.c.h.b16 %v1233
        %v1679 = vunpack.c.l.b16 %v1234
        %v1680 = vunpack.c.h.b16 %v1234
        %v1681 = vunpack.c.l.b16 %v1235
        %v1682 = vunpack.c.h.b16 %v1235
        %v1683 = vunpack.c.l.b16 %v1236
        %v1684 = vunpack.c.h.b16 %v1236
        %v1685 = vunpack.c.l.b16 %v1237
        %v1686 = vunpack.c.h.b16 %v1237
        %v1687 = vunpack.c.l.b16 %v1238
        %v1688 = vunpack.c.h.b16 %v1238
        %v1689 = vunpack.c.l.b16 %v1239
        %v1690 = vunpack.c.h.b16 %v1239
        %v1691 = vunpack.c.l.b16 %v1240
        %v1692 = vunpack.c.h.b16 %v1240
        %v1693 = vunpack.c.l.b16 %v1241
        %v1694 = vunpack.c.h.b16 %v1241
        %v1695 = vunpack.c.l.b16 %v1242
        %v1696 = vunpack.c.h.b16 %v1242
        %v1697 = vunpack.c.l.b16 %v1243
        %v1698 = vunpack.c.h.b16 %v1243
        %v1699 = vunpack.c.l.b16 %v1244
        %v1700 = vunpack.c.h.b16 %v1244
        %v1701 = vunpack.c.l.b16 %v1245
        %v1702 = vunpack.c.h.b16 %v1245
        %v1703 = vunpack.c.l.b16 %v1246
        %v1704 = vunpack.c.h.b16 %v1246
        %v1705 = vunpack.c.l.b16 %v1247
        %v1706 = vunpack.c.h.b16 %v1247
        %v1707 = vunpack.c.l.b16 %v1248
        %v1708 = vunpack.c.h.b16 %v1248
        %v1709 = vunpack.c.l.b16 %v1249
        %v1710 = vunpack.c.h.b16 %v1249
        %v1711 = vunpack.c.l.b16 %v1250
        %v1712 = vunpack.c.h.b16 %v1250
        %v1713 = vunpack.c.l.b16 %v1251
        %v1714 = vunpack.c.h.b16 %v1251
        %v1715 = vunpack.c.l.b16 %v1252
        %v1716 = vunpack.c.h.b16 %v1252
        %v1717 = vunpack.c.l.b16 %v1253
        %v1718 = vunpack.c.h.b16 %v1253
        %v1719 = vunpack.c.l.b16 %v1254
        %v1720 = vunpack.c.h.b16 %v1254
        %v1721 = vunpack.c.l.b16 %v1255
        %v1722 = vunpack.c.h.b16 %v1255
        %v1723 = vunpack.c.l.b16 %v1256
        %v1724 = vunpack.c.h.b16 %v1256
        %v1725 = vunpack.c.l.b16 %v1257
        %v1726 = vunpack.c.h.b16 %v1257
        %v1727 = vunpack.c.l.b16 %v1258
        %v1728 = vunpack.c.h.b16 %v1258
        %v1729 = vunpack.c.l.b16 %v1259
        %v1730 = vunpack.c.h.b16 %v1259
        %v1731 = vunpack.c.l.b16 %v1260
        %v1732 = vunpack.c.h.b16 %v1260
        %v1733 = vunpack.c.l.b16 %v1261
        %v1734 = vunpack.c.h.b16 %v1261
        %v1735 = vunpack.c.l.b16 %v1262
        %v1736 = vunpack.c.h.b16 %v1262
        %v1737 = vunpack.c.l.b16 %v1263
        %v1738 = vunpack.c.h.b16 %v1263
        %v1739 = vunpack.c.l.b16 %v1264
        %v1740 = vunpack.c.h.b16 %v1264
        %v1741 = vunpack.c.l.b16 %v1265
        %v1742 = vunpack.c.h.b16 %v1265
        %v1743 = vunpack.c.l.b16 %v1266
        %v1744 = vunpack.c.h.b16 %v1266
        %v1745 = vunpack.c.l.b16 %v1267
        %v1746 = vunpack.c.h.b16 %v1267
        %v1747 = vunpack.c.l.b16 %v1268
        %v1748 = vunpack.c.h.b16 %v1268
        %v1749 = vunpack.c.l.b16 %v1269
        %v1750 = vunpack.c.h.b16 %v1269
        %v1751 = vunpack.c.l.b16 %v1270
        %v1752 = vunpack.c.h.b16 %v1270
        %v1753 = vunpack.c.l.b16 %v1271
        %v1754 = vunpack.c.h.b16 %v1271
        %v1755 = vunpack.c.l.b16 %v1272
        %v1756 = vunpack.c.h.b16 %v1272
        %v1757 = vunpack.c.l.b16 %v1273
        %v1758 = vunpack.c.h.b16 %v1273
        %v1759 = vunpack.c.l.b16 %v1274
        %v1760 = vunpack.c.h.b16 %v1274
        %v1761 = vunpack.c.l.b16 %v1275
        %v1762 = vunpack.c.h.b16 %v1275
        %v1763 = vunpack.c.l.b16 %v1276
        %v1764 = vunpack.c.h.b16 %v1276
        %v1765 = vunpack.c.l.b16 %v1277
        %v1766 = vunpack.c.h.b16 %v1277
        %v1767 = vunpack.c.l.b16 %v1278
        %v1768 = vunpack.c.h.b16 %v1278
        %v1769 = vunpack.c.l.b16 %v1279
        %v1770 = vunpack.c.h.b16 %v1279
        %v1771 = vunpack.c.l.b16 %v1280
        %v1772 = vunpack.c.h.b16 %v1280
        %v1773 = vunpack.c.l.b16 %v1281
        %v1774 = vunpack.c.h.b16 %v1281
        %v1775 = vunpack.c.l.b16 %v1282
        %v1776 = vunpack.c.h.b16 %v1282
        %v1777 = vunpack.c.l.b16 %v1283
        %v1778 = vunpack.c.h.b16 %v1283
        %v1779 = vunpack.c.l.b16 %v1284
        %v1780 = vunpack.c.h.b16 %v1284
        %v1781 = vunpack.c.l.b16 %v1285
        %v1782 = vunpack.c.h.b16 %v1285
        %v1783 = vunpack.c.l.b16 %v1286
        %v1784 = vunpack.c.h.b16 %v1286
        %v1785 = vunpack.c.l.b16 %v1287
        %v1786 = vunpack.c.h.b16 %v1287
        %v1787 = vunpack.c.l.b16 %v1288
        %v1788 = vunpack.c.h.b16 %v1288
        %v1789 = vunpack.c.l.b16 %v1289
        %v1790 = vunpack.c.h.b16 %v1289
        %v1791 = vunpack.c.l.b16 %v1290
        %v1792 = vunpack.c.h.b16 %v1290
        %v1793 = vunpack.c.l.b16 %v1291
        %v1794 = vunpack.c.h.b16 %v1291
        %v1795 = vunpack.c.l.b16 %v1292
        %v1796 = vunpack.c.h.b16 %v1292
        %v1797 = vunpack.c.l.b16 %v1293
        %v1798 = vunpack.c.h.b16 %v1293
        %v1799 = vunpack.c.l.b16 %v1294
        %v1800 = vunpack.c.h.b16 %v1294
        %v1801 = vunpack.c.l.b16 %v1295
        %v1802 = vunpack.c.h.b16 %v1295
        %v1803 = vunpack.c.l.b16 %v1296
        %v1804 = vunpack.c.h.b16 %v1296
        %v1805 = vunpack.c.l.b16 %v1297
        %v1806 = vunpack.c.h.b16 %v1297
        %v1807 = vunpack.c.l.b16 %v1298
        %v1808 = vunpack.c.h.b16 %v1298
        %v1809 = vunpack.c.l.b16 %v1299
        %v1810 = vunpack.c.h.b16 %v1299
        %v1811 = vunpack.c.l.b16 %v1300
        %v1812 = vunpack.c.h.b16 %v1300
        %v1813 = vunpack.c.l.b16 %v1301
        %v1814 = vunpack.c.h.b16 %v1301
        %v1815 = vunpack.c.l.b16 %v1302
        %v1816 = vunpack.c.h.b16 %v1302
        %v1817 = vunpack.c.l.b16 %v1303
        %v1818 = vunpack.c.h.b16 %v1303
        %v1819 = vunpack.c.l.b16 %v1304
        %v1820 = vunpack.c.h.b16 %v1304
        %v1821 = vunpack.c.l.b16 %v1305
        %v1822 = vunpack.c.h.b16 %v1305
        %v1823 = vunpack.c.l.b16 %v1306
        %v1824 = vunpack.c.h.b16 %v1306
        %v1825 = vunpack.c.l.b16 %v1307
        %v1826 = vunpack.c.h.b16 %v1307
        %v1827 = vunpack.c.l.b16 %v1308
        %v1828 = vunpack.c.h.b16 %v1308
        %v1829 = vunpack.c.l.b16 %v1309
        %v1830 = vunpack.c.h.b16 %v1309
        %v1831 = vunpack.c.l.b16 %v1310
        %v1832 = vunpack.c.h.b16 %v1310
        %v1833 = vunpack.c.l.b16 %v1311
        %v1834 = vunpack.c.h.b16 %v1311
        %v1835 = vunpack.c.l.b16 %v1312
        %v1836 = vunpack.c.h.b16 %v1312
        %v1837 = vunpack.c.l.b16 %v1313
        %v1838 = vunpack.c.h.b16 %v1313
        %v1839 = vunpack.c.l.b16 %v1314
        %v1840 = vunpack.c.h.b16 %v1314
        %v1841 = vunpack.c.l.b16 %v1315
        %v1842 = vunpack.c.h.b16 %v1315
        %v1843 = vunpack.c.l.b16 %v1316
        %v1844 = vunpack.c.h.b16 %v1316
        %v1845 = vunpack.c.l.b16 %v1317
        %v1846 = vunpack.c.h.b16 %v1317
        %v1847 = vunpack.c.l.b16 %v1318
        %v1848 = vunpack.c.h.b16 %v1318
        %v1849 = vunpack.c.l.b16 %v1319
        %v1850 = vunpack.c.h.b16 %v1319
        %v1851 = vunpack.c.l.b16 %v1320
        %v1852 = vunpack.c.h.b16 %v1320
        %v1853 = vunpack.c.l.b16 %v1321
        %v1854 = vunpack.c.h.b16 %v1321
        %v1855 = vunpack.c.l.b16 %v1322
        %v1856 = vunpack.c.h.b16 %v1322
        %v1857 = vunpack.c.l.b16 %v1323
        %v1858 = vunpack.c.h.b16 %v1323
        %v1859 = vunpack.c.l.b16 %v1324
        %v1860 = vunpack.c.h.b16 %v1324
        %v1861 = vunpack.c.l.b16 %v1325
        %v1862 = vunpack.c.h.b16 %v1325
        %v1863 = vunpack.c.l.b16 %v1326
        %v1864 = vunpack.c.h.b16 %v1326
        %v1865 = vunpack.c.l.b16 %v1327
        %v1866 = vunpack.c.h.b16 %v1327
        %v1867 = vunpack.c.l.b16 %v1328
        %v1868 = vunpack.c.h.b16 %v1328
        %v1869 = vunpack.c.l.b16 %v1329
        %v1870 = vunpack.c.h.b16 %v1329
        %v1871 = vunpack.c.l.b16 %v1330
        %v1872 = vunpack.c.h.b16 %v1330
        %v1873 = vunpack.c.l.b16 %v1331
        %v1874 = vunpack.c.h.b16 %v1331
        %v1875 = vunpack.c.l.b16 %v1332
        %v1876 = vunpack.c.h.b16 %v1332
        %v1877 = vunpack.c.l.b16 %v1333
        %v1878 = vunpack.c.h.b16 %v1333
        %v1879 = vunpack.c.l.b16 %v1334
        %v1880 = vunpack.c.h.b16 %v1334
        %v1881 = vunpack.c.l.b16 %v1335
        %v1882 = vunpack.c.h.b16 %v1335
        %v1883 = vunpack.c.l.b16 %v1336
        %v1884 = vunpack.c.h.b16 %v1336
        %v1885 = vunpack.c.l.b16 %v1337
        %v1886 = vunpack.c.h.b16 %v1337
        %v1887 = vunpack.c.l.b16 %v1338
        %v1888 = vunpack.c.h.b16 %v1338
        %v1889 = vunpack.c.l.b16 %v1339
        %v1890 = vunpack.c.h.b16 %v1339
        %v1891 = vunpack.c.l.b16 %v1340
        %v1892 = vunpack.c.h.b16 %v1340
        %v1893 = vunpack.c.l.b16 %v1341
        %v1894 = vunpack.c.h.b16 %v1341
        %v1895 = vunpack.c.l.b16 %v1342
        %v1896 = vunpack.c.h.b16 %v1342
        %v1897 = vunpack.c.l.b16 %v1343
        %v1898 = vunpack.c.h.b16 %v1343
        %v1899 = vunpack.c.l.b16 %v1344
        %v1900 = vunpack.c.h.b16 %v1344
        %v1901 = vunpack.c.l.b16 %v1345
        %v1902 = vunpack.c.h.b16 %v1345
        %v1903 = vunpack.c.l.b16 %v1346
        %v1904 = vunpack.c.h.b16 %v1346
        %v1905 = vunpack.c.l.b16 %v1347
        %v1906 = vunpack.c.h.b16 %v1347
        %v1907 = vunpack.c.l.b16 %v1348
        %v1908 = vunpack.c.h.b16 %v1348
        %v1909 = vunpack.c.l.b16 %v1349
        %v1910 = vunpack.c.h.b16 %v1349
        %v1911 = vunpack.c.l.b16 %v1350
        %v1912 = vunpack.c.h.b16 %v1350
        %v1913 = vunpack.c.l.b16 %v1351
        %v1914 = vunpack.c.h.b16 %v1351
        %v1915 = vunpack.c.l.b16 %v1352
        %v1916 = vunpack.c.h.b16 %v1352
        %v1917 = vunpack.c.l.b16 %v1353
        %v1918 = vunpack.c.h.b16 %v1353
        %v1919 = vunpack.c.l.b16 %v1354
        %v1920 = vunpack.c.h.b16 %v1354
        %v1921 = vunpack.c.l.b16 %v1355
        %v1922 = vunpack.c.h.b16 %v1355
        %v1923 = vunpack.c.l.b16 %v1356
        %v1924 = vunpack.c.h.b16 %v1356
        %v1925 = vunpack.c.l.b16 %v1357
        %v1926 = vunpack.c.h.b16 %v1357
        %v1927 = vunpack.c.l.b16 %v1358
        %v1928 = vunpack.c.h.b16 %v1358
        %v1929 = vunpack.c.l.b16 %v1359
        %v1930 = vunpack.c.h.b16 %v1359
        %v1931 = vunpack.c.l.b16 %v1360
        %v1932 = vunpack.c.h.b16 %v1360
        %v1933 = vunpack.c.l.b16 %v1361
        %v1934 = vunpack.c.h.b16 %v1361
        %v1935 = vunpack.c.l.b16 %v1362
        %v1936 = vunpack.c.h.b16 %v1362
        %v1937 = vunpack.c.l.b16 %v1363
        %v1938 = vunpack.c.h.b16 %v1363
        %v1939 = vunpack.c.l.b16 %v1364
        %v1940 = vunpack.c.h.b16 %v1364
        %v1941 = vunpack.c.l.b16 %v1365
        %v1942 = vunpack.c.h.b16 %v1365
        %v1943 = vunpack.c.l.b16 %v1366
        %v1944 = vunpack.c.h.b16 %v1366
        %v1945 = vunpack.c.l.b16 %v1367
        %v1946 = vunpack.c.h.b16 %v1367
        %v1947 = vunpack.c.l.b16 %v1368
        %v1948 = vunpack.c.h.b16 %v1368
        %v1949 = vunpack.c.l.b16 %v1369
        %v1950 = vunpack.c.h.b16 %v1369
        %v1951 = vunpack.c.l.b16 %v1370
        %v1952 = vunpack.c.h.b16 %v1370
        %v1953 = vunpack.c.l.b16 %v1371
        %v1954 = vunpack.c.h.b16 %v1371
        %v1955 = vunpack.c.l.b16 %v1372
        %v1956 = vunpack.c.h.b16 %v1372
        %v1957 = vunpack.c.l.b16 %v1373
        %v1958 = vunpack.c.h.b16 %v1373
        %v1959 = vunpack.c.l.b16 %v1374
        %v1960 = vunpack.c.h.b16 %v1374
        %v1961 = vunpack.c.l.b16 %v1375
        %v1962 = vunpack.c.h.b16 %v1375
        %v1963 = vunpack.c.l.b16 %v1376
        %v1964 = vunpack.c.h.b16 %v1376
        %v1965 = vunpack.c.l.b16 %v1377
        %v1966 = vunpack.c.h.b16 %v1377
        %v1967 = vunpack.c.l.b16 %v1378
        %v1968 = vunpack.c.h.b16 %v1378
        %v1969 = vunpack.c.l.b16 %v1379
        %v1970 = vunpack.c.h.b16 %v1379
        %v1971 = vunpack.c.l.b16 %v1380
        %v1972 = vunpack.c.h.b16 %v1380
        %v1973 = vunpack.c.l.b16 %v1381
        %v1974 = vunpack.c.h.b16 %v1381
        %v1975 = vunpack.c.l.b16 %v1382
        %v1976 = vunpack.c.h.b16 %v1382
        %v1977 = vunpack.c.l.b16 %v1383
        %v1978 = vunpack.c.h.b16 %v1383
        %v1979 = vunpack.c.l.b16 %v1384
        %v1980 = vunpack.c.h.b16 %v1384
        %v1981 = vunpack.c.l.b16 %v1385
        %v1982 = vunpack.c.h.b16 %v1385
        %v1983 = vunpack.c.l.b16 %v1386
        %v1984 = vunpack.c.h.b16 %v1386
        %v1985 = vpack.c.b16 %v1605, %v1601
        %v1986 = vpack.c.b16 %v1606, %v1602
        %v1987 = vpack.c.b16 %v1607, %v1603
        %v1988 = vpack.c.b16 %v1608, %v1604
        %v1989 = vpack.c.b16 %v1613, %v1609
        %v1990 = vpack.c.b16 %v1614, %v1610
        %v1991 = vpack.c.b16 %v1615, %v1611
        %v1992 = vpack.c.b16 %v1616, %v1612
        %v1993 = vpack.c.b16 %v1621, %v1617
        %v1994 = vpack.c.b16 %v1622, %v1618
        %v1995 = vpack.c.b16 %v1623, %v1619
        %v1996 = vpack.c.b16 %v1624, %v1620
        %v1997 = vpack.c.b16 %v1629, %v1625
        %v1998 = vpack.c.b16 %v1630, %v1626
        %v1999 = vpack.c.b16 %v1631, %v1627
        %v2000 = vpack.c.b16 %v1632, %v1628
        %v2001 = vpack.c.b16 %v1637, %v1633
        %v2002 = vpack.c.b16 %v1638, %v1634
        %v2003 = vpack.c.b16 %v1639, %v1635
        %v2004 = vpack.c.b16 %v1640, %v1636
        %v2005 = vpack.c.b16 %v1645, %v1641
        %v2006 = vpack.c.b16 %v1646, %v1642
        %v2007 = vpack.c.b16 %v1647, %v1643
        %v2008 = vpack.c.b16 %v1648, %v1644
        %v2009 = vpack.c.b16 %v1653, %v1649
        %v2010 = vpack.c.b16 %v1654, %v1650
        %v2011 = vpack.c.b16 %v1655, %v1651
        %v2012 = vpack.c.b16 %v1656, %v1652
        %v2013 = vpack.c.b16 %v1661, %v1657
        %v2014 = vpack.c.b16 %v1662, %v1658
        %v2015 = vpack.c.b16 %v1663, %v1659
        %v2016 = vpack.c.b16 %v1664, %v1660
        %v2017 = vpack.c.b16 %v1669, %v1665
        %v2018 = vpack.c.b16 %v1670, %v1666
        %v2019 = vpack.c.b16 %v1671, %v1667
        %v2020 = vpack.c.b16 %v1672, %v1668
        %v2021 = vpack.c.b16 %v1677, %v1673
        %v2022 = vpack.c.b16 %v1678, %v1674
        %v2023 = vpack.c.b16 %v1679, %v1675
        %v2024 = vpack.c.b16 %v1680, %v1676
        %v2025 = vpack.c.b16 %v1685, %v1681
        %v2026 = vpack.c.b16 %v1686, %v1682
        %v2027 = vpack.c.b16 %v1687, %v1683
        %v2028 = vpack.c.b16 %v1688, %v1684
        %v2029 = vpack.c.b16 %v1693, %v1689
        %v2030 = vpack.c.b16 %v1694, %v1690
        %v2031 = vpack.c.b16 %v1695, %v1691
        %v2032 = vpack.c.b16 %v1696, %v1692
        %v2033 = vpack.c.b16 %v1701, %v1697
        %v2034 = vpack.c.b16 %v1702, %v1698
        %v2035 = vpack.c.b16 %v1703, %v1699
        %v2036 = vpack.c.b16 %v1704, %v1700
        %v2037 = vpack.c.b16 %v1709, %v1705
        %v2038 = vpack.c.b16 %v1710, %v1706
        %v2039 = vpack.c.b16 %v1711, %v1707
        %v2040 = vpack.c.b16 %v1712, %v1708
        %v2041 = vpack.c.b16 %v1717, %v1713
        %v2042 = vpack.c.b16 %v1718, %v1714
        %v2043 = vpack.c.b16 %v1719, %v1715
        %v2044 = vpack.c.b16 %v1720, %v1716
        %v2045 = vpack.c.b16 %v1725, %v1721
        %v2046 = vpack.c.b16 %v1726, %v1722
        %v2047 = vpack.c.b16 %v1727, %v1723
        %v2048 = vpack.c.b16 %v1728, %v1724
        %v2049 = vpack.c.b16 %v1733, %v1729
        %v2050 = vpack.c.b16 %v1734, %v1730
        %v2051 = vpack.c.b16 %v1735, %v1731
        %v2052 = vpack.c.b16 %v1736, %v1732
        %v2053 = vpack.c.b16 %v1741, %v1737
        %v2054 = vpack.c.b16 %v1742, %v1738
        %v2055 = vpack.c.b16 %v1743, %v1739
        %v2056 = vpack.c.b16 %v1744, %v1740
        %v2057 = vpack.c.b16 %v1749, %v1745
        %v2058 = vpack.c.b16 %v1750, %v1746
        %v2059 = vpack.c.b16 %v1751, %v1747
        %v2060 = vpack.c.b16 %v1752, %v1748
        %v2061 = vpack.c.b16 %v1757, %v1753
        %v2062 = vpack.c.b16 %v1758, %v1754
        %v2063 = vpack.c.b16 %v1759, %v1755
        %v2064 = vpack.c.b16 %v1760, %v1756
        %v2065 = vpack.c.b16 %v1765, %v1761
        %v2066 = vpack.c.b16 %v1766, %v1762
        %v2067 = vpack.c.b16 %v1767, %v1763
        %v2068 = vpack.c.b16 %v1768, %v1764
        %v2069 = vpack.c.b16 %v1773, %v1769
        %v2070 = vpack.c.b16 %v1774, %v1770
        %v2071 = vpack.c.b16 %v1775, %v1771
        %v2072 = vpack.c.b16 %v1776, %v1772
        %v2073 = vpack.c.b16 %v1781, %v1777
        %v2074 = vpack.c.b16 %v1782, %v1778
        %v2075 = vpack.c.b16 %v1783, %v1779
        %v2076 = vpack.c.b16 %v1784, %v1780
        %v2077 = vpack.c.b16 %v1789, %v1785
        %v2078 = vpack.c.b16 %v1790, %v1786
        %v2079 = vpack.c.b16 %v1791, %v1787
        %v2080 = vpack.c.b16 %v1792, %v1788
        %v2081 = vpack.c.b16 %v1797, %v1793
        %v2082 = vpack.c.b16 %v1798, %v1794
        %v2083 = vpack.c.b16 %v1799, %v1795
        %v2084 = vpack.c.b16 %v1800, %v1796
        %v2085 = vpack.c.b16 %v1805, %v1801
        %v2086 = vpack.c.b16 %v1806, %v1802
        %v2087 = vpack.c.b16 %v1807, %v1803
        %v2088 = vpack.c.b16 %v1808, %v1804
        %v2089 = vpack.c.b16 %v1813, %v1809
        %v2090 = vpack.c.b16 %v1814, %v1810
        %v2091 = vpack.c.b16 %v1815, %v1811
        %v2092 = vpack.c.b16 %v1816, %v1812
        %v2093 = vpack.c.b16 %v1821, %v1817
        %v2094 = vpack.c.b16 %v1822, %v1818
        %v2095 = vpack.c.b16 %v1823, %v1819
        %v2096 = vpack.c.b16 %v1824, %v1820
        %v2097 = vpack.c.b16 %v1829, %v1825
        %v2098 = vpack.c.b16 %v1830, %v1826
        %v2099 = vpack.c.b16 %v1831, %v1827
        %v2100 = vpack.c.b16 %v1832, %v1828
        %v2101 = vpack.c.b16 %v1837, %v1833
        %v2102 = vpack.c.b16 %v1838, %v1834
        %v2103 = vpack.c.b16 %v1839, %v1835
        %v2104 = vpack.c.b16 %v1840, %v1836
        %v2105 = vpack.c.b16 %v1845, %v1841
        %v2106 = vpack.c.b16 %v1846, %v1842
        %v2107 = vpack.c.b16 %v1847, %v1843
        %v2108 = vpack.c.b16 %v1848, %v1844
        %v2109 = vpack.c.b16 %v1853, %v1849
        %v2110 = vpack.c.b16 %v1854, %v1850
        %v2111 = vpack.c.b16 %v1855, %v1851
        %v2112 = vpack.c.b16 %v1856, %v1852
        %v2113 = vpack.c.b16 %v1861, %v1857
        %v2114 = vpack.c.b16 %v1862, %v1858
        %v2115 = vpack.c.b16 %v1863, %v1859
        %v2116 = vpack.c.b16 %v1864, %v1860
        %v2117 = vpack.c.b16 %v1869, %v1865
        %v2118 = vpack.c.b16 %v1870, %v1866
        %v2119 = vpack.c.b16 %v1871, %v1867
        %v2120 = vpack.c.b16 %v1872, %v1868
        %v2121 = vpack.c.b16 %v1877, %v1873
        %v2122 = vpack.c.b16 %v1878, %v1874
        %v2123 = vpack.c.b16 %v1879, %v1875
        %v2124 = vpack.c.b16 %v1880, %v1876
        %v2125 = vpack.c.b16 %v1885, %v1881
        %v2126 = vpack.c.b16 %v1886, %v1882
        %v2127 = vpack.c.b16 %v1887, %v1883
        %v2128 = vpack.c.b16 %v1888, %v1884
        %v2129 = vpack.c.b16 %v1893, %v1889
        %v2130 = vpack.c.b16 %v1894, %v1890
        %v2131 = vpack.c.b16 %v1895, %v1891
        %v2132 = vpack.c.b16 %v1896, %v1892
        %v2133 = vpack.c.b16 %v1901, %v1897
        %v2134 = vpack.c.b16 %v1902, %v1898
        %v2135 = vpack.c.b16 %v1903, %v1899
        %v2136 = vpack.c.b16 %v1904, %v1900
        %v2137 = vpack.c.b16 %v1909, %v1905
        %v2138 = vpack.c.b16 %v1910, %v1906
        %v2139 = vpack.c.b16 %v1911, %v1907
        %v2140 = vpack.c.b16 %v1912, %v1908
        %v2141 = vpack.c.b16 %v1917, %v1913
        %v2142 = vpack.c.b16 %v1918, %v1914
        %v2143 = vpack.c.b16 %v1919, %v1915
        %v2144 = vpack.c.b16 %v1920, %v1916
        %v2145 = vpack.c.b16 %v1925, %v1921
        %v2146 = vpack.c.b16 %v1926, %v1922
        %v2147 = vpack.c.b16 %v1927, %v1923
        %v2148 = vpack.c.b16 %v1928, %v1924
        %v2149 = vpack.c.b16 %v1933, %v1929
        %v2150 = vpack.c.b16 %v1934, %v1930
        %v2151 = vpack.c.b16 %v1935, %v1931
        %v2152 = vpack.c.b16 %v1936, %v1932
        %v2153 = vpack.c.b16 %v1941, %v1937
        %v2154 = vpack.c.b16 %v1942, %v1938
        %v2155 = vpack.c.b16 %v1943, %v1939
        %v2156 = vpack.c.b16 %v1944, %v1940
        %v2157 = vpack.c.b16 %v1949, %v1945
        %v2158 = vpack.c.b16 %v1950, %v1946
        %v2159 = vpack.c.b16 %v1951, %v1947
        %v2160 = vpack.c.b16 %v1952, %v1948
        %v2161 = vpack.c.b16 %v1957, %v1953
        %v2162 = vpack.c.b16 %v1958, %v1954
        %v2163 = vpack.c.b16 %v1959, %v1955
        %v2164 = vpack.c.b16 %v1960, %v1956
        %v2165 = vpack.c.b16 %v1965, %v1961
        %v2166 = vpack.c.b16 %v1966, %v1962
        %v2167 = vpack.c.b16 %v1967, %v1963
        %v2168 = vpack.c.b16 %v1968, %v1964
        %v2169 = vpack.c.b16 %v1973, %v1969
        %v2170 = vpack.c.b16 %v1974, %v1970
        %v2171 = vpack.c.b16 %v1975, %v1971
        %v2172 = vpack.c.b16 %v1976, %v1972
        %v2173 = vpack.c.b16 %v1981, %v1977
        %v2174 = vpack.c.b16 %v1982, %v1978
        %v2175 = vpack.c.b16 %v1983, %v1979
        %v2176 = vpack.c.b16 %v1984, %v1980
        %2369 = vmatprep.subr.bf16.mxu0 %v1986
        %2370 = vmatpush1.bf16.msra.mxu0 %v1985
        %2371 = vmatprep.subr.bf16.mxu0 %v1990
        %2372 = vmatpush1.bf16.msra.mxu0 %v1989
        %2373 = vmatprep.subr.bf16.mxu0 %v1994
        %2374 = vmatpush1.bf16.msra.mxu0 %v1993
        %2375 = vmatprep.subr.bf16.mxu0 %v1998
        %2376 = vmatpush1.bf16.msra.mxu0 %v1997
        %2377 = vmatprep.subr.bf16.mxu0 %v2002
        %2378 = vmatpush1.bf16.msra.mxu0 %v2001
        %2379 = vmatprep.subr.bf16.mxu0 %v2006
        %2380 = vmatpush1.bf16.msra.mxu0 %v2005
        %2381 = vmatprep.subr.bf16.mxu0 %v2010
        %2382 = vmatpush1.bf16.msra.mxu0 %v2009
        %2383 = vmatprep.subr.bf16.mxu0 %v2014
        %2384 = vmatpush1.bf16.msra.mxu0 %v2013
        %2385 = vmatprep.subr.bf16.mxu0 %v2018
        %2386 = vmatpush1.bf16.msra.mxu0 %v2017
        %2387 = vmatprep.subr.bf16.mxu0 %v2022
        %2388 = vmatpush1.bf16.msra.mxu0 %v2021
        %2389 = vmatprep.subr.bf16.mxu0 %v2026
        %2390 = vmatpush1.bf16.msra.mxu0 %v2025
        %2391 = vmatprep.subr.bf16.mxu0 %v2030
        %2392 = vmatpush1.bf16.msra.mxu0 %v2029
        %2393 = vmatprep.subr.bf16.mxu0 %v2034
        %2394 = vmatpush1.bf16.msra.mxu0 %v2033
        %2395 = vmatprep.subr.bf16.mxu0 %v2038
        %2396 = vmatpush1.bf16.msra.mxu0 %v2037
        %2397 = vmatprep.subr.bf16.mxu0 %v2042
        %2398 = vmatpush1.bf16.msra.mxu0 %v2041
        %2399 = vmatprep.subr.bf16.mxu0 %v2046
        %2400 = vmatpush1.bf16.msra.mxu0 %v2045
        %2401 = vmatprep.mubr.bf16.mxu0 %v1190
        %2402 = vmatmul.mubr.bf16.gmra.mrb[0].mxu0 %v1189
        %v2403 = vpop.f32.mrb[0].mxu0
        %v2404 = vadd.f32 %v1392, %v2403
        %v2405 = vpop.f32.mrb[0].mxu0
        %v2406 = vadd.f32 %v1396, %v2405
        %v2407 = vpop.f32.mrb[0].mxu0
        %v2408 = vpop.f32.mrb[0].mxu0
        %2409 = vdwg.mxu0
        %2410 = vmatprep.subr.bf16.mxu0 %v2050
        %2411 = vmatpush1.bf16.msra.mxu0 %v2049
        %2412 = vmatprep.subr.bf16.mxu0 %v2054
        %2413 = vmatpush1.bf16.msra.mxu0 %v2053
        %2414 = vmatprep.subr.bf16.mxu0 %v2058
        %2415 = vmatpush1.bf16.msra.mxu0 %v2057
        %2416 = vmatprep.subr.bf16.mxu0 %v2062
        %2417 = vmatpush1.bf16.msra.mxu0 %v2061
        %2418 = vmatprep.subr.bf16.mxu0 %v2066
        %2419 = vmatpush1.bf16.msra.mxu0 %v2065
        %2420 = vmatprep.subr.bf16.mxu0 %v2070
        %2421 = vmatpush1.bf16.msra.mxu0 %v2069
        %2422 = vmatprep.subr.bf16.mxu0 %v2074
        %2423 = vmatpush1.bf16.msra.mxu0 %v2073
        %2424 = vmatprep.subr.bf16.mxu0 %v2078
        %2425 = vmatpush1.bf16.msra.mxu0 %v2077
        %2426 = vmatprep.subr.bf16.mxu0 %v2082
        %2427 = vmatpush1.bf16.msra.mxu0 %v2081
        %2428 = vmatprep.subr.bf16.mxu0 %v2086
        %2429 = vmatpush1.bf16.msra.mxu0 %v2085
        %2430 = vmatprep.subr.bf16.mxu0 %v2090
        %2431 = vmatpush1.bf16.msra.mxu0 %v2089
        %2432 = vmatprep.subr.bf16.mxu0 %v2094
        %2433 = vmatpush1.bf16.msra.mxu0 %v2093
        %2434 = vmatprep.subr.bf16.mxu0 %v2098
        %2435 = vmatpush1.bf16.msra.mxu0 %v2097
        %2436 = vmatprep.subr.bf16.mxu0 %v2102
        %2437 = vmatpush1.bf16.msra.mxu0 %v2101
        %2438 = vmatprep.subr.bf16.mxu0 %v2106
        %2439 = vmatpush1.bf16.msra.mxu0 %v2105
        %2440 = vmatprep.subr.bf16.mxu0 %v2110
        %2441 = vmatpush1.bf16.msra.mxu0 %v2109
        %2442 = vmatprep.mubr.bf16.mxu0 %v1192
        %2443 = vmatmul.mubr.bf16.gmra.mrb[0].mxu0 %v1191
        %v2444 = vpop.f32.mrb[0].mxu0
        %v2445 = vadd.f32 %v2404, %v2444
        %v2446 = vpop.f32.mrb[0].mxu0
        %v2447 = vadd.f32 %v2406, %v2446
        %v2448 = vpop.f32.mrb[0].mxu0
        %v2449 = vpop.f32.mrb[0].mxu0
        %2450 = vdwg.mxu0
        %2451 = vmatprep.subr.bf16.mxu0 %v2114
        %2452 = vmatpush1.bf16.msra.mxu0 %v2113
        %2453 = vmatprep.subr.bf16.mxu0 %v2118
        %2454 = vmatpush1.bf16.msra.mxu0 %v2117
        %2455 = vmatprep.subr.bf16.mxu0 %v2122
        %2456 = vmatpush1.bf16.msra.mxu0 %v2121
        %2457 = vmatprep.subr.bf16.mxu0 %v2126
        %2458 = vmatpush1.bf16.msra.mxu0 %v2125
        %2459 = vmatprep.subr.bf16.mxu0 %v2130
        %2460 = vmatpush1.bf16.msra.mxu0 %v2129
        %2461 = vmatprep.subr.bf16.mxu0 %v2134
        %2462 = vmatpush1.bf16.msra.mxu0 %v2133
        %2463 = vmatprep.subr.bf16.mxu0 %v2138
        %2464 = vmatpush1.bf16.msra.mxu0 %v2137
        %2465 = vmatprep.subr.bf16.mxu0 %v2142
        %2466 = vmatpush1.bf16.msra.mxu0 %v2141
        %2467 = vmatprep.subr.bf16.mxu0 %v2146
        %2468 = vmatpush1.bf16.msra.mxu0 %v2145
        %2469 = vmatprep.subr.bf16.mxu0 %v2150
        %2470 = vmatpush1.bf16.msra.mxu0 %v2149
        %2471 = vmatprep.subr.bf16.mxu0 %v2154
        %2472 = vmatpush1.bf16.msra.mxu0 %v2153
        %2473 = vmatprep.subr.bf16.mxu0 %v2158
        %2474 = vmatpush1.bf16.msra.mxu0 %v2157
        %2475 = vmatprep.subr.bf16.mxu0 %v2162
        %2476 = vmatpush1.bf16.msra.mxu0 %v2161
        %2477 = vmatprep.subr.bf16.mxu0 %v2166
        %2478 = vmatpush1.bf16.msra.mxu0 %v2165
        %2479 = vmatprep.subr.bf16.mxu0 %v2170
        %2480 = vmatpush1.bf16.msra.mxu0 %v2169
        %2481 = vmatprep.subr.bf16.mxu0 %v2174
        %2482 = vmatpush1.bf16.msra.mxu0 %v2173
        %2483 = vmatprep.mubr.bf16.mxu0 %v1194
        %2484 = vmatmul.mubr.bf16.gmra.mrb[0].mxu0 %v1193
        %v2485 = vpop.f32.mrb[0].mxu0
        %v2486 = vadd.f32 %v2445, %v2485
        %v2487 = vpop.f32.mrb[0].mxu0
        %v2488 = vadd.f32 %v2447, %v2487
        %v2489 = vpop.f32.mrb[0].mxu0
        %v2490 = vpop.f32.mrb[0].mxu0
        %2491 = vdwg.mxu0
        %2492 = vmatprep.subr.bf16.mxu0 %v1988
        %2493 = vmatpush1.bf16.msra.mxu0 %v1987
        %2494 = vmatprep.subr.bf16.mxu0 %v1992
        %2495 = vmatpush1.bf16.msra.mxu0 %v1991
        %2496 = vmatprep.subr.bf16.mxu0 %v1996
        %2497 = vmatpush1.bf16.msra.mxu0 %v1995
        %2498 = vmatprep.subr.bf16.mxu0 %v2000
        %2499 = vmatpush1.bf16.msra.mxu0 %v1999
        %2500 = vmatprep.subr.bf16.mxu0 %v2004
        %2501 = vmatpush1.bf16.msra.mxu0 %v2003
        %2502 = vmatprep.subr.bf16.mxu0 %v2008
        %2503 = vmatpush1.bf16.msra.mxu0 %v2007
        %2504 = vmatprep.subr.bf16.mxu0 %v2012
        %2505 = vmatpush1.bf16.msra.mxu0 %v2011
        %2506 = vmatprep.subr.bf16.mxu0 %v2016
        %2507 = vmatpush1.bf16.msra.mxu0 %v2015
        %2508 = vmatprep.subr.bf16.mxu0 %v2020
        %2509 = vmatpush1.bf16.msra.mxu0 %v2019
        %2510 = vmatprep.subr.bf16.mxu0 %v2024
        %2511 = vmatpush1.bf16.msra.mxu0 %v2023
        %2512 = vmatprep.subr.bf16.mxu0 %v2028
        %2513 = vmatpush1.bf16.msra.mxu0 %v2027
        %2514 = vmatprep.subr.bf16.mxu0 %v2032
        %2515 = vmatpush1.bf16.msra.mxu0 %v2031
        %2516 = vmatprep.subr.bf16.mxu0 %v2036
        %2517 = vmatpush1.bf16.msra.mxu0 %v2035
        %2518 = vmatprep.subr.bf16.mxu0 %v2040
        %2519 = vmatpush1.bf16.msra.mxu0 %v2039
        %2520 = vmatprep.subr.bf16.mxu0 %v2044
        %2521 = vmatpush1.bf16.msra.mxu0 %v2043
        %2522 = vmatprep.subr.bf16.mxu0 %v2048
        %2523 = vmatpush1.bf16.msra.mxu0 %v2047
        %2524 = vmatprep.mubr.bf16.mxu0 %v1190
        %2525 = vmatmul.mubr.bf16.gmra.mrb[0].mxu0 %v1189
        %v2526 = vpop.f32.mrb[0].mxu0
        %v2527 = vadd.f32 %v1400, %v2526
        %v2528 = vpop.f32.mrb[0].mxu0
        %v2529 = vadd.f32 %v1404, %v2528
        %v2530 = vpop.f32.mrb[0].mxu0
        %v2531 = vpop.f32.mrb[0].mxu0
        %2532 = vdwg.mxu0
        %2533 = vmatprep.subr.bf16.mxu0 %v2052
        %2534 = vmatpush1.bf16.msra.mxu0 %v2051
        %2535 = vmatprep.subr.bf16.mxu0 %v2056
        %2536 = vmatpush1.bf16.msra.mxu0 %v2055
        %2537 = vmatprep.subr.bf16.mxu0 %v2060
        %2538 = vmatpush1.bf16.msra.mxu0 %v2059
        %2539 = vmatprep.subr.bf16.mxu0 %v2064
        %2540 = vmatpush1.bf16.msra.mxu0 %v2063
        %2541 = vmatprep.subr.bf16.mxu0 %v2068
        %2542 = vmatpush1.bf16.msra.mxu0 %v2067
        %2543 = vmatprep.subr.bf16.mxu0 %v2072
        %2544 = vmatpush1.bf16.msra.mxu0 %v2071
        %2545 = vmatprep.subr.bf16.mxu0 %v2076
        %2546 = vmatpush1.bf16.msra.mxu0 %v2075
        %2547 = vmatprep.subr.bf16.mxu0 %v2080
        %2548 = vmatpush1.bf16.msra.mxu0 %v2079
        %2549 = vmatprep.subr.bf16.mxu0 %v2084
        %2550 = vmatpush1.bf16.msra.mxu0 %v2083
        %2551 = vmatprep.subr.bf16.mxu0 %v2088
        %2552 = vmatpush1.bf16.msra.mxu0 %v2087
        %2553 = vmatprep.subr.bf16.mxu0 %v2092
        %2554 = vmatpush1.bf16.msra.mxu0 %v2091
        %2555 = vmatprep.subr.bf16.mxu0 %v2096
        %2556 = vmatpush1.bf16.msra.mxu0 %v2095
        %2557 = vmatprep.subr.bf16.mxu0 %v2100
        %2558 = vmatpush1.bf16.msra.mxu0 %v2099
        %2559 = vmatprep.subr.bf16.mxu0 %v2104
        %2560 = vmatpush1.bf16.msra.mxu0 %v2103
        %2561 = vmatprep.subr.bf16.mxu0 %v2108
        %2562 = vmatpush1.bf16.msra.mxu0 %v2107
        %2563 = vmatprep.subr.bf16.mxu0 %v2112
        %2564 = vmatpush1.bf16.msra.mxu0 %v2111
        %2565 = vmatprep.mubr.bf16.mxu0 %v1192
        %2566 = vmatmul.mubr.bf16.gmra.mrb[0].mxu0 %v1191
        %v2567 = vpop.f32.mrb[0].mxu0
        %v2568 = vadd.f32 %v2527, %v2567
        %v2569 = vpop.f32.mrb[0].mxu0
        %v2570 = vadd.f32 %v2529, %v2569
        %v2571 = vpop.f32.mrb[0].mxu0
        %v2572 = vpop.f32.mrb[0].mxu0
        %2573 = vdwg.mxu0
        %2574 = vmatprep.subr.bf16.mxu0 %v2116
        %2575 = vmatpush1.bf16.msra.mxu0 %v2115
        %2576 = vmatprep.subr.bf16.mxu0 %v2120
        %2577 = vmatpush1.bf16.msra.mxu0 %v2119
        %2578 = vmatprep.subr.bf16.mxu0 %v2124
        %2579 = vmatpush1.bf16.msra.mxu0 %v2123
        %2580 = vmatprep.subr.bf16.mxu0 %v2128
        %2581 = vmatpush1.bf16.msra.mxu0 %v2127
        %2582 = vmatprep.subr.bf16.mxu0 %v2132
        %2583 = vmatpush1.bf16.msra.mxu0 %v2131
        %2584 = vmatprep.subr.bf16.mxu0 %v2136
        %2585 = vmatpush1.bf16.msra.mxu0 %v2135
        %2586 = vmatprep.subr.bf16.mxu0 %v2140
        %2587 = vmatpush1.bf16.msra.mxu0 %v2139
        %2588 = vmatprep.subr.bf16.mxu0 %v2144
        %2589 = vmatpush1.bf16.msra.mxu0 %v2143
        %2590 = vmatprep.subr.bf16.mxu0 %v2148
        %2591 = vmatpush1.bf16.msra.mxu0 %v2147
        %2592 = vmatprep.subr.bf16.mxu0 %v2152
        %2593 = vmatpush1.bf16.msra.mxu0 %v2151
        %2594 = vmatprep.subr.bf16.mxu0 %v2156
        %2595 = vmatpush1.bf16.msra.mxu0 %v2155
        %2596 = vmatprep.subr.bf16.mxu0 %v2160
        %2597 = vmatpush1.bf16.msra.mxu0 %v2159
        %2598 = vmatprep.subr.bf16.mxu0 %v2164
        %2599 = vmatpush1.bf16.msra.mxu0 %v2163
        %2600 = vmatprep.subr.bf16.mxu0 %v2168
        %2601 = vmatpush1.bf16.msra.mxu0 %v2167
        %2602 = vmatprep.subr.bf16.mxu0 %v2172
        %2603 = vmatpush1.bf16.msra.mxu0 %v2171
        %2604 = vmatprep.subr.bf16.mxu0 %v2176
        %2605 = vmatpush1.bf16.msra.mxu0 %v2175
        %2606 = vmatprep.mubr.bf16.mxu0 %v1194
        %2607 = vmatmul.mubr.bf16.gmra.mrb[0].mxu0 %v1193
        %v2608 = vpop.f32.mrb[0].mxu0
        %v2609 = vadd.f32 %v2568, %v2608
        %v2610 = vpop.f32.mrb[0].mxu0
        %v2611 = vadd.f32 %v2570, %v2610
        %v2612 = vpop.f32.mrb[0].mxu0
        %v2613 = vpop.f32.mrb[0].mxu0
        %2614 = vdwg.mxu0
        %v2615 = vxor.u32 %v2486, 2147483648
        %v2616 = vxor.u32 %v2488, 2147483648
        %v2617 = vxor.u32 %v2609, 2147483648
        %v2618 = vxor.u32 %v2611, 2147483648
        %v2619 = vmul.f32 %v2615, 1.442695
        %v2620 = vpow.pop %v2619
        %v2621 = vmul.f32 %v2616, 1.442695
        %v2622 = vpow.pop %v2621
        %v2623 = vmul.f32 %v2617, 1.442695
        %v2624 = vpow.pop %v2623
        %v2625 = vmul.f32 %v2618, 1.442695
        %v2626 = vpow.pop %v2625
        %v2627 = vadd.f32 %v2620, 1.0
        %v2628 = vadd.f32 %v2622, 1.0
        %v2629 = vadd.f32 %v2624, 1.0
        %v2630 = vadd.f32 %v2626, 1.0
        %v2631 = vrcp.pop %v2627
        %v2632 = vmul.f32 1.0, %v2631
        %v2633 = vrcp.pop %v2628
        %v2634 = vmul.f32 1.0, %v2633
        %v2635 = vrcp.pop %v2629
        %v2636 = vmul.f32 1.0, %v2635
        %v2637 = vrcp.pop %v2630
        %v2638 = vmul.f32 1.0, %v2637
        %v2639 = vmul.f32 %v2486, %v2632
        %v2640 = vmul.f32 %v2488, %v2634
        %v2641 = vmul.f32 %v2609, %v2636
        %v2642 = vmul.f32 %v2611, %v2638
        %v2643 = vld [vmem:[#allocation3] sm:$0xff]
        %v2644 = vld [vmem:[#allocation3 + $0x8] sm:$0xf]
        %v2645 = vpack.c.bf16 %v2639, %v2639
        %v2646 = vpack.c.bf16 %v2640, %v2640
        %v2647 = vpack.c.bf16 %v2641, %v2641
        %v2648 = vpack.c.bf16 %v2642, %v2642
        %v2649 = vld [vmem:[%s407] sm:$0xff]
        %v2650 = vld [vmem:[%s407 + $0x8] sm:$0xff]
        %v2651 = vld [vmem:[%s407 + $0x10] sm:$0xff]
        %v2652 = vld [vmem:[%s407 + $0x18] sm:$0xff]
        %v2653 = vld [vmem:[%s407 + $0x20] sm:$0xff]
        %v2654 = vld [vmem:[%s407 + $0x28] sm:$0xff]
        %v2655 = vld [vmem:[%s407 + $0x30] sm:$0xff]
        %v2656 = vld [vmem:[%s407 + $0x38] sm:$0xff]
        %v2657 = vld [vmem:[%s407 + $0x40] sm:$0xff]
        %v2658 = vld [vmem:[%s407 + $0x48] sm:$0xff]
        %v2659 = vld [vmem:[%s407 + $0x50] sm:$0xff]
        %v2660 = vld [vmem:[%s407 + $0x58] sm:$0xff]
        %v2661 = vld [vmem:[%s407 + $0x60] sm:$0xff]
        %v2662 = vld [vmem:[%s407 + $0x68] sm:$0xff]
        %v2663 = vld [vmem:[%s407 + $0x70] sm:$0xff]
        %v2664 = vld [vmem:[%s407 + $0x78] sm:$0xff]
        %v2665 = vld [vmem:[%s407 + $0x80] sm:$0xff]
        %v2666 = vld [vmem:[%s407 + $0x88] sm:$0xff]
        %v2667 = vld [vmem:[%s407 + $0x90] sm:$0xff]
        %v2668 = vld [vmem:[%s407 + $0x98] sm:$0xff]
        %v2669 = vld [vmem:[%s407 + $0xa0] sm:$0xff]
        %v2670 = vld [vmem:[%s407 + $0xa8] sm:$0xff]
        %v2671 = vld [vmem:[%s407 + $0xb0] sm:$0xff]
        %v2672 = vld [vmem:[%s407 + $0xb8] sm:$0xff]
        %v2673 = vld [vmem:[%s407 + $0xc0] sm:$0xff]
        %v2674 = vld [vmem:[%s407 + $0xc8] sm:$0xff]
        %v2675 = vld [vmem:[%s407 + $0xd0] sm:$0xff]
        %v2676 = vld [vmem:[%s407 + $0xd8] sm:$0xff]
        %v2677 = vld [vmem:[%s407 + $0xe0] sm:$0xff]
        %v2678 = vld [vmem:[%s407 + $0xe8] sm:$0xff]
        %v2679 = vld [vmem:[%s407 + $0xf0] sm:$0xff]
        %v2680 = vld [vmem:[%s407 + $0xf8] sm:$0xff]
        %v2681 = vld [vmem:[%s407 + $0x100] sm:$0xff]
        %v2682 = vld [vmem:[%s407 + $0x108] sm:$0xff]
        %v2683 = vld [vmem:[%s407 + $0x110] sm:$0xff]
        %v2684 = vld [vmem:[%s407 + $0x118] sm:$0xff]
        %v2685 = vld [vmem:[%s407 + $0x120] sm:$0xff]
        %v2686 = vld [vmem:[%s407 + $0x128] sm:$0xff]
        %v2687 = vld [vmem:[%s407 + $0x130] sm:$0xff]
        %v2688 = vld [vmem:[%s407 + $0x138] sm:$0xff]
        %v2689 = vld [vmem:[%s407 + $0x140] sm:$0xff]
        %v2690 = vld [vmem:[%s407 + $0x148] sm:$0xff]
        %v2691 = vld [vmem:[%s407 + $0x150] sm:$0xff]
        %v2692 = vld [vmem:[%s407 + $0x158] sm:$0xff]
        %v2693 = vld [vmem:[%s407 + $0x160] sm:$0xff]
        %v2694 = vld [vmem:[%s407 + $0x168] sm:$0xff]
        %v2695 = vld [vmem:[%s407 + $0x170] sm:$0xff]
        %v2696 = vld [vmem:[%s407 + $0x178] sm:$0xff]
        %v2697 = vld [vmem:[%s407 + $0x180] sm:$0xff]
        %v2698 = vld [vmem:[%s407 + $0x188] sm:$0xff]
        %v2699 = vld [vmem:[%s407 + $0x190] sm:$0xff]
        %v2700 = vld [vmem:[%s407 + $0x198] sm:$0xff]
        %v2701 = vld [vmem:[%s407 + $0x1a0] sm:$0xff]
        %v2702 = vld [vmem:[%s407 + $0x1a8] sm:$0xff]
        %v2703 = vld [vmem:[%s407 + $0x1b0] sm:$0xff]
        %v2704 = vld [vmem:[%s407 + $0x1b8] sm:$0xff]
        %v2705 = vld [vmem:[%s407 + $0x1c0] sm:$0xff]
        %v2706 = vld [vmem:[%s407 + $0x1c8] sm:$0xff]
        %v2707 = vld [vmem:[%s407 + $0x1d0] sm:$0xff]
        %v2708 = vld [vmem:[%s407 + $0x1d8] sm:$0xff]
        %v2709 = vld [vmem:[%s407 + $0x1e0] sm:$0xff]
        %v2710 = vld [vmem:[%s407 + $0x1e8] sm:$0xff]
        %v2711 = vld [vmem:[%s407 + $0x1f0] sm:$0xff]
        %v2712 = vld [vmem:[%s407 + $0x1f8] sm:$0xff]
        %v2713 = vld [vmem:[%s407 + $0x200] sm:$0xff]
        %v2714 = vld [vmem:[%s407 + $0x208] sm:$0xff]
        %v2715 = vld [vmem:[%s407 + $0x210] sm:$0xff]
        %v2716 = vld [vmem:[%s407 + $0x218] sm:$0xff]
        %v2717 = vld [vmem:[%s407 + $0x220] sm:$0xff]
        %v2718 = vld [vmem:[%s407 + $0x228] sm:$0xff]
        %v2719 = vld [vmem:[%s407 + $0x230] sm:$0xff]
        %v2720 = vld [vmem:[%s407 + $0x238] sm:$0xff]
        %v2721 = vld [vmem:[%s407 + $0x240] sm:$0xff]
        %v2722 = vld [vmem:[%s407 + $0x248] sm:$0xff]
        %v2723 = vld [vmem:[%s407 + $0x250] sm:$0xff]
        %v2724 = vld [vmem:[%s407 + $0x258] sm:$0xff]
        %v2725 = vld [vmem:[%s407 + $0x260] sm:$0xff]
        %v2726 = vld [vmem:[%s407 + $0x268] sm:$0xff]
        %v2727 = vld [vmem:[%s407 + $0x270] sm:$0xff]
        %v2728 = vld [vmem:[%s407 + $0x278] sm:$0xff]
        %v2729 = vld [vmem:[%s407 + $0x280] sm:$0xff]
        %v2730 = vld [vmem:[%s407 + $0x288] sm:$0xff]
        %v2731 = vld [vmem:[%s407 + $0x290] sm:$0xff]
        %v2732 = vld [vmem:[%s407 + $0x298] sm:$0xff]
        %v2733 = vld [vmem:[%s407 + $0x2a0] sm:$0xff]
        %v2734 = vld [vmem:[%s407 + $0x2a8] sm:$0xff]
        %v2735 = vld [vmem:[%s407 + $0x2b0] sm:$0xff]
        %v2736 = vld [vmem:[%s407 + $0x2b8] sm:$0xff]
        %v2737 = vld [vmem:[%s407 + $0x2c0] sm:$0xff]
        %v2738 = vld [vmem:[%s407 + $0x2c8] sm:$0xff]
        %v2739 = vld [vmem:[%s407 + $0x2d0] sm:$0xff]
        %v2740 = vld [vmem:[%s407 + $0x2d8] sm:$0xff]
        %v2741 = vld [vmem:[%s407 + $0x2e0] sm:$0xff]
        %v2742 = vld [vmem:[%s407 + $0x2e8] sm:$0xff]
        %v2743 = vld [vmem:[%s407 + $0x2f0] sm:$0xff]
        %v2744 = vld [vmem:[%s407 + $0x2f8] sm:$0xff]
        %v2745 = vld [vmem:[%s407 + $0x300] sm:$0xff]
        %v2746 = vld [vmem:[%s407 + $0x308] sm:$0xff]
        %v2747 = vld [vmem:[%s407 + $0x310] sm:$0xff]
        %v2748 = vld [vmem:[%s407 + $0x318] sm:$0xff]
        %v2749 = vld [vmem:[%s407 + $0x320] sm:$0xff]
        %v2750 = vld [vmem:[%s407 + $0x328] sm:$0xff]
        %v2751 = vld [vmem:[%s407 + $0x330] sm:$0xff]
        %v2752 = vld [vmem:[%s407 + $0x338] sm:$0xff]
        %v2753 = vld [vmem:[%s407 + $0x340] sm:$0xff]
        %v2754 = vld [vmem:[%s407 + $0x348] sm:$0xff]
        %v2755 = vld [vmem:[%s407 + $0x350] sm:$0xff]
        %v2756 = vld [vmem:[%s407 + $0x358] sm:$0xff]
        %v2757 = vld [vmem:[%s407 + $0x360] sm:$0xff]
        %v2758 = vld [vmem:[%s407 + $0x368] sm:$0xff]
        %v2759 = vld [vmem:[%s407 + $0x370] sm:$0xff]
        %v2760 = vld [vmem:[%s407 + $0x378] sm:$0xff]
        %v2761 = vld [vmem:[%s407 + $0x380] sm:$0xff]
        %v2762 = vld [vmem:[%s407 + $0x388] sm:$0xff]
        %v2763 = vld [vmem:[%s407 + $0x390] sm:$0xff]
        %v2764 = vld [vmem:[%s407 + $0x398] sm:$0xff]
        %v2765 = vld [vmem:[%s407 + $0x3a0] sm:$0xff]
        %v2766 = vld [vmem:[%s407 + $0x3a8] sm:$0xff]
        %v2767 = vld [vmem:[%s407 + $0x3b0] sm:$0xff]
        %v2768 = vld [vmem:[%s407 + $0x3b8] sm:$0xff]
        %v2769 = vld [vmem:[%s407 + $0x3c0] sm:$0xff]
        %v2770 = vld [vmem:[%s407 + $0x3c8] sm:$0xff]
        %v2771 = vld [vmem:[%s407 + $0x3d0] sm:$0xff]
        %v2772 = vld [vmem:[%s407 + $0x3d8] sm:$0xff]
        %v2773 = vld [vmem:[%s407 + $0x3e0] sm:$0xff]
        %v2774 = vld [vmem:[%s407 + $0x3e8] sm:$0xff]
        %v2775 = vld [vmem:[%s407 + $0x3f0] sm:$0xff]
        %v2776 = vld [vmem:[%s407 + $0x3f8] sm:$0xff]
        %v2777 = vld [vmem:[%s407 + $0x400] sm:$0xff]
        %v2778 = vld [vmem:[%s407 + $0x408] sm:$0xff]
        %v2779 = vld [vmem:[%s407 + $0x410] sm:$0xff]
        %v2780 = vld [vmem:[%s407 + $0x418] sm:$0xff]
        %v2781 = vld [vmem:[%s407 + $0x420] sm:$0xff]
        %v2782 = vld [vmem:[%s407 + $0x428] sm:$0xff]
        %v2783 = vld [vmem:[%s407 + $0x430] sm:$0xff]
        %v2784 = vld [vmem:[%s407 + $0x438] sm:$0xff]
        %v2785 = vld [vmem:[%s407 + $0x440] sm:$0xff]
        %v2786 = vld [vmem:[%s407 + $0x448] sm:$0xff]
        %v2787 = vld [vmem:[%s407 + $0x450] sm:$0xff]
        %v2788 = vld [vmem:[%s407 + $0x458] sm:$0xff]
        %v2789 = vld [vmem:[%s407 + $0x460] sm:$0xff]
        %v2790 = vld [vmem:[%s407 + $0x468] sm:$0xff]
        %v2791 = vld [vmem:[%s407 + $0x470] sm:$0xff]
        %v2792 = vld [vmem:[%s407 + $0x478] sm:$0xff]
        %v2793 = vld [vmem:[%s407 + $0x480] sm:$0xff]
        %v2794 = vld [vmem:[%s407 + $0x488] sm:$0xff]
        %v2795 = vld [vmem:[%s407 + $0x490] sm:$0xff]
        %v2796 = vld [vmem:[%s407 + $0x498] sm:$0xff]
        %v2797 = vld [vmem:[%s407 + $0x4a0] sm:$0xff]
        %v2798 = vld [vmem:[%s407 + $0x4a8] sm:$0xff]
        %v2799 = vld [vmem:[%s407 + $0x4b0] sm:$0xff]
        %v2800 = vld [vmem:[%s407 + $0x4b8] sm:$0xff]
        %v2801 = vld [vmem:[%s407 + $0x4c0] sm:$0xff]
        %v2802 = vld [vmem:[%s407 + $0x4c8] sm:$0xff]
        %v2803 = vld [vmem:[%s407 + $0x4d0] sm:$0xff]
        %v2804 = vld [vmem:[%s407 + $0x4d8] sm:$0xff]
        %v2805 = vld [vmem:[%s407 + $0x4e0] sm:$0xff]
        %v2806 = vld [vmem:[%s407 + $0x4e8] sm:$0xff]
        %v2807 = vld [vmem:[%s407 + $0x4f0] sm:$0xff]
        %v2808 = vld [vmem:[%s407 + $0x4f8] sm:$0xff]
        %v2809 = vld [vmem:[%s407 + $0x500] sm:$0xff]
        %v2810 = vld [vmem:[%s407 + $0x508] sm:$0xff]
        %v2811 = vld [vmem:[%s407 + $0x510] sm:$0xff]
        %v2812 = vld [vmem:[%s407 + $0x518] sm:$0xff]
        %v2813 = vld [vmem:[%s407 + $0x520] sm:$0xff]
        %v2814 = vld [vmem:[%s407 + $0x528] sm:$0xff]
        %v2815 = vld [vmem:[%s407 + $0x530] sm:$0xff]
        %v2816 = vld [vmem:[%s407 + $0x538] sm:$0xff]
        %v2817 = vld [vmem:[%s407 + $0x540] sm:$0xff]
        %v2818 = vld [vmem:[%s407 + $0x548] sm:$0xff]
        %v2819 = vld [vmem:[%s407 + $0x550] sm:$0xff]
        %v2820 = vld [vmem:[%s407 + $0x558] sm:$0xff]
        %v2821 = vld [vmem:[%s407 + $0x560] sm:$0xff]
        %v2822 = vld [vmem:[%s407 + $0x568] sm:$0xff]
        %v2823 = vld [vmem:[%s407 + $0x570] sm:$0xff]
        %v2824 = vld [vmem:[%s407 + $0x578] sm:$0xff]
        %v2825 = vld [vmem:[%s407 + $0x580] sm:$0xff]
        %v2826 = vld [vmem:[%s407 + $0x588] sm:$0xff]
        %v2827 = vld [vmem:[%s407 + $0x590] sm:$0xff]
        %v2828 = vld [vmem:[%s407 + $0x598] sm:$0xff]
        %v2829 = vld [vmem:[%s407 + $0x5a0] sm:$0xff]
        %v2830 = vld [vmem:[%s407 + $0x5a8] sm:$0xff]
        %v2831 = vld [vmem:[%s407 + $0x5b0] sm:$0xff]
        %v2832 = vld [vmem:[%s407 + $0x5b8] sm:$0xff]
        %v2833 = vld [vmem:[%s407 + $0x5c0] sm:$0xff]
        %v2834 = vld [vmem:[%s407 + $0x5c8] sm:$0xff]
        %v2835 = vld [vmem:[%s407 + $0x5d0] sm:$0xff]
        %v2836 = vld [vmem:[%s407 + $0x5d8] sm:$0xff]
        %v2837 = vld [vmem:[%s407 + $0x5e0] sm:$0xff]
        %v2838 = vld [vmem:[%s407 + $0x5e8] sm:$0xff]
        %v2839 = vld [vmem:[%s407 + $0x5f0] sm:$0xff]
        %v2840 = vld [vmem:[%s407 + $0x5f8] sm:$0xff]
        %v3033 = vunpack.c.l.b16 %v2649
        %v3034 = vunpack.c.h.b16 %v2649
        %v3035 = vunpack.c.l.b16 %v2650
        %v3036 = vunpack.c.h.b16 %v2650
        %v3037 = vunpack.c.l.b16 %v2651
        %v3038 = vunpack.c.h.b16 %v2651
        %v3039 = vunpack.c.l.b16 %v2652
        %v3040 = vunpack.c.h.b16 %v2652
        %v3041 = vunpack.c.l.b16 %v2653
        %v3042 = vunpack.c.h.b16 %v2653
        %v3043 = vunpack.c.l.b16 %v2654
        %v3044 = vunpack.c.h.b16 %v2654
        %v3045 = vunpack.c.l.b16 %v2655
        %v3046 = vunpack.c.h.b16 %v2655
        %v3047 = vunpack.c.l.b16 %v2656
        %v3048 = vunpack.c.h.b16 %v2656
        %v3049 = vunpack.c.l.b16 %v2657
        %v3050 = vunpack.c.h.b16 %v2657
        %v3051 = vunpack.c.l.b16 %v2658
        %v3052 = vunpack.c.h.b16 %v2658
        %v3053 = vunpack.c.l.b16 %v2659
        %v3054 = vunpack.c.h.b16 %v2659
        %v3055 = vunpack.c.l.b16 %v2660
        %v3056 = vunpack.c.h.b16 %v2660
        %v3057 = vunpack.c.l.b16 %v2661
        %v3058 = vunpack.c.h.b16 %v2661
        %v3059 = vunpack.c.l.b16 %v2662
        %v3060 = vunpack.c.h.b16 %v2662
        %v3061 = vunpack.c.l.b16 %v2663
        %v3062 = vunpack.c.h.b16 %v2663
        %v3063 = vunpack.c.l.b16 %v2664
        %v3064 = vunpack.c.h.b16 %v2664
        %v3065 = vunpack.c.l.b16 %v2665
        %v3066 = vunpack.c.h.b16 %v2665
        %v3067 = vunpack.c.l.b16 %v2666
        %v3068 = vunpack.c.h.b16 %v2666
        %v3069 = vunpack.c.l.b16 %v2667
        %v3070 = vunpack.c.h.b16 %v2667
        %v3071 = vunpack.c.l.b16 %v2668
        %v3072 = vunpack.c.h.b16 %v2668
        %v3073 = vunpack.c.l.b16 %v2669
        %v3074 = vunpack.c.h.b16 %v2669
        %v3075 = vunpack.c.l.b16 %v2670
        %v3076 = vunpack.c.h.b16 %v2670
        %v3077 = vunpack.c.l.b16 %v2671
        %v3078 = vunpack.c.h.b16 %v2671
        %v3079 = vunpack.c.l.b16 %v2672
        %v3080 = vunpack.c.h.b16 %v2672
        %v3081 = vunpack.c.l.b16 %v2673
        %v3082 = vunpack.c.h.b16 %v2673
        %v3083 = vunpack.c.l.b16 %v2674
        %v3084 = vunpack.c.h.b16 %v2674
        %v3085 = vunpack.c.l.b16 %v2675
        %v3086 = vunpack.c.h.b16 %v2675
        %v3087 = vunpack.c.l.b16 %v2676
        %v3088 = vunpack.c.h.b16 %v2676
        %v3089 = vunpack.c.l.b16 %v2677
        %v3090 = vunpack.c.h.b16 %v2677
        %v3091 = vunpack.c.l.b16 %v2678
        %v3092 = vunpack.c.h.b16 %v2678
        %v3093 = vunpack.c.l.b16 %v2679
        %v3094 = vunpack.c.h.b16 %v2679
        %v3095 = vunpack.c.l.b16 %v2680
        %v3096 = vunpack.c.h.b16 %v2680
        %v3097 = vunpack.c.l.b16 %v2681
        %v3098 = vunpack.c.h.b16 %v2681
        %v3099 = vunpack.c.l.b16 %v2682
        %v3100 = vunpack.c.h.b16 %v2682
        %v3101 = vunpack.c.l.b16 %v2683
        %v3102 = vunpack.c.h.b16 %v2683
        %v3103 = vunpack.c.l.b16 %v2684
        %v3104 = vunpack.c.h.b16 %v2684
        %v3105 = vunpack.c.l.b16 %v2685
        %v3106 = vunpack.c.h.b16 %v2685
        %v3107 = vunpack.c.l.b16 %v2686
        %v3108 = vunpack.c.h.b16 %v2686
        %v3109 = vunpack.c.l.b16 %v2687
        %v3110 = vunpack.c.h.b16 %v2687
        %v3111 = vunpack.c.l.b16 %v2688
        %v3112 = vunpack.c.h.b16 %v2688
        %v3113 = vunpack.c.l.b16 %v2689
        %v3114 = vunpack.c.h.b16 %v2689
        %v3115 = vunpack.c.l.b16 %v2690
        %v3116 = vunpack.c.h.b16 %v2690
        %v3117 = vunpack.c.l.b16 %v2691
        %v3118 = vunpack.c.h.b16 %v2691
        %v3119 = vunpack.c.l.b16 %v2692
        %v3120 = vunpack.c.h.b16 %v2692
        %v3121 = vunpack.c.l.b16 %v2693
        %v3122 = vunpack.c.h.b16 %v2693
        %v3123 = vunpack.c.l.b16 %v2694
        %v3124 = vunpack.c.h.b16 %v2694
        %v3125 = vunpack.c.l.b16 %v2695
        %v3126 = vunpack.c.h.b16 %v2695
        %v3127 = vunpack.c.l.b16 %v2696
        %v3128 = vunpack.c.h.b16 %v2696
        %v3129 = vunpack.c.l.b16 %v2697
        %v3130 = vunpack.c.h.b16 %v2697
        %v3131 = vunpack.c.l.b16 %v2698
        %v3132 = vunpack.c.h.b16 %v2698
        %v3133 = vunpack.c.l.b16 %v2699
        %v3134 = vunpack.c.h.b16 %v2699
        %v3135 = vunpack.c.l.b16 %v2700
        %v3136 = vunpack.c.h.b16 %v2700
        %v3137 = vunpack.c.l.b16 %v2701
        %v3138 = vunpack.c.h.b16 %v2701
        %v3139 = vunpack.c.l.b16 %v2702
        %v3140 = vunpack.c.h.b16 %v2702
        %v3141 = vunpack.c.l.b16 %v2703
        %v3142 = vunpack.c.h.b16 %v2703
        %v3143 = vunpack.c.l.b16 %v2704
        %v3144 = vunpack.c.h.b16 %v2704
        %v3145 = vunpack.c.l.b16 %v2705
        %v3146 = vunpack.c.h.b16 %v2705
        %v3147 = vunpack.c.l.b16 %v2706
        %v3148 = vunpack.c.h.b16 %v2706
        %v3149 = vunpack.c.l.b16 %v2707
        %v3150 = vunpack.c.h.b16 %v2707
        %v3151 = vunpack.c.l.b16 %v2708
        %v3152 = vunpack.c.h.b16 %v2708
        %v3153 = vunpack.c.l.b16 %v2709
        %v3154 = vunpack.c.h.b16 %v2709
        %v3155 = vunpack.c.l.b16 %v2710
        %v3156 = vunpack.c.h.b16 %v2710
        %v3157 = vunpack.c.l.b16 %v2711
        %v3158 = vunpack.c.h.b16 %v2711
        %v3159 = vunpack.c.l.b16 %v2712
        %v3160 = vunpack.c.h.b16 %v2712
        %v3161 = vunpack.c.l.b16 %v2713
        %v3162 = vunpack.c.h.b16 %v2713
        %v3163 = vunpack.c.l.b16 %v2714
        %v3164 = vunpack.c.h.b16 %v2714
        %v3165 = vunpack.c.l.b16 %v2715
        %v3166 = vunpack.c.h.b16 %v2715
        %v3167 = vunpack.c.l.b16 %v2716
        %v3168 = vunpack.c.h.b16 %v2716
        %v3169 = vunpack.c.l.b16 %v2717
        %v3170 = vunpack.c.h.b16 %v2717
        %v3171 = vunpack.c.l.b16 %v2718
        %v3172 = vunpack.c.h.b16 %v2718
        %v3173 = vunpack.c.l.b16 %v2719
        %v3174 = vunpack.c.h.b16 %v2719
        %v3175 = vunpack.c.l.b16 %v2720
        %v3176 = vunpack.c.h.b16 %v2720
        %v3177 = vunpack.c.l.b16 %v2721
        %v3178 = vunpack.c.h.b16 %v2721
        %v3179 = vunpack.c.l.b16 %v2722
        %v3180 = vunpack.c.h.b16 %v2722
        %v3181 = vunpack.c.l.b16 %v2723
        %v3182 = vunpack.c.h.b16 %v2723
        %v3183 = vunpack.c.l.b16 %v2724
        %v3184 = vunpack.c.h.b16 %v2724
        %v3185 = vunpack.c.l.b16 %v2725
        %v3186 = vunpack.c.h.b16 %v2725
        %v3187 = vunpack.c.l.b16 %v2726
        %v3188 = vunpack.c.h.b16 %v2726
        %v3189 = vunpack.c.l.b16 %v2727
        %v3190 = vunpack.c.h.b16 %v2727
        %v3191 = vunpack.c.l.b16 %v2728
        %v3192 = vunpack.c.h.b16 %v2728
        %v3193 = vunpack.c.l.b16 %v2729
        %v3194 = vunpack.c.h.b16 %v2729
        %v3195 = vunpack.c.l.b16 %v2730
        %v3196 = vunpack.c.h.b16 %v2730
        %v3197 = vunpack.c.l.b16 %v2731
        %v3198 = vunpack.c.h.b16 %v2731
        %v3199 = vunpack.c.l.b16 %v2732
        %v3200 = vunpack.c.h.b16 %v2732
        %v3201 = vunpack.c.l.b16 %v2733
        %v3202 = vunpack.c.h.b16 %v2733
        %v3203 = vunpack.c.l.b16 %v2734
        %v3204 = vunpack.c.h.b16 %v2734
        %v3205 = vunpack.c.l.b16 %v2735
        %v3206 = vunpack.c.h.b16 %v2735
        %v3207 = vunpack.c.l.b16 %v2736
        %v3208 = vunpack.c.h.b16 %v2736
        %v3209 = vunpack.c.l.b16 %v2737
        %v3210 = vunpack.c.h.b16 %v2737
        %v3211 = vunpack.c.l.b16 %v2738
        %v3212 = vunpack.c.h.b16 %v2738
        %v3213 = vunpack.c.l.b16 %v2739
        %v3214 = vunpack.c.h.b16 %v2739
        %v3215 = vunpack.c.l.b16 %v2740
        %v3216 = vunpack.c.h.b16 %v2740
        %v3217 = vunpack.c.l.b16 %v2741
        %v3218 = vunpack.c.h.b16 %v2741
        %v3219 = vunpack.c.l.b16 %v2742
        %v3220 = vunpack.c.h.b16 %v2742
        %v3221 = vunpack.c.l.b16 %v2743
        %v3222 = vunpack.c.h.b16 %v2743
        %v3223 = vunpack.c.l.b16 %v2744
        %v3224 = vunpack.c.h.b16 %v2744
        %v3225 = vunpack.c.l.b16 %v2745
        %v3226 = vunpack.c.h.b16 %v2745
        %v3227 = vunpack.c.l.b16 %v2746
        %v3228 = vunpack.c.h.b16 %v2746
        %v3229 = vunpack.c.l.b16 %v2747
        %v3230 = vunpack.c.h.b16 %v2747
        %v3231 = vunpack.c.l.b16 %v2748
        %v3232 = vunpack.c.h.b16 %v2748
        %v3233 = vunpack.c.l.b16 %v2749
        %v3234 = vunpack.c.h.b16 %v2749
        %v3235 = vunpack.c.l.b16 %v2750
        %v3236 = vunpack.c.h.b16 %v2750
        %v3237 = vunpack.c.l.b16 %v2751
        %v3238 = vunpack.c.h.b16 %v2751
        %v3239 = vunpack.c.l.b16 %v2752
        %v3240 = vunpack.c.h.b16 %v2752
        %v3241 = vunpack.c.l.b16 %v2753
        %v3242 = vunpack.c.h.b16 %v2753
        %v3243 = vunpack.c.l.b16 %v2754
        %v3244 = vunpack.c.h.b16 %v2754
        %v3245 = vunpack.c.l.b16 %v2755
        %v3246 = vunpack.c.h.b16 %v2755
        %v3247 = vunpack.c.l.b16 %v2756
        %v3248 = vunpack.c.h.b16 %v2756
        %v3249 = vunpack.c.l.b16 %v2757
        %v3250 = vunpack.c.h.b16 %v2757
        %v3251 = vunpack.c.l.b16 %v2758
        %v3252 = vunpack.c.h.b16 %v2758
        %v3253 = vunpack.c.l.b16 %v2759
        %v3254 = vunpack.c.h.b16 %v2759
        %v3255 = vunpack.c.l.b16 %v2760
        %v3256 = vunpack.c.h.b16 %v2760
        %v3257 = vunpack.c.l.b16 %v2761
        %v3258 = vunpack.c.h.b16 %v2761
        %v3259 = vunpack.c.l.b16 %v2762
        %v3260 = vunpack.c.h.b16 %v2762
        %v3261 = vunpack.c.l.b16 %v2763
        %v3262 = vunpack.c.h.b16 %v2763
        %v3263 = vunpack.c.l.b16 %v2764
        %v3264 = vunpack.c.h.b16 %v2764
        %v3265 = vunpack.c.l.b16 %v2765
        %v3266 = vunpack.c.h.b16 %v2765
        %v3267 = vunpack.c.l.b16 %v2766
        %v3268 = vunpack.c.h.b16 %v2766
        %v3269 = vunpack.c.l.b16 %v2767
        %v3270 = vunpack.c.h.b16 %v2767
        %v3271 = vunpack.c.l.b16 %v2768
        %v3272 = vunpack.c.h.b16 %v2768
        %v3273 = vunpack.c.l.b16 %v2769
        %v3274 = vunpack.c.h.b16 %v2769
        %v3275 = vunpack.c.l.b16 %v2770
        %v3276 = vunpack.c.h.b16 %v2770
        %v3277 = vunpack.c.l.b16 %v2771
        %v3278 = vunpack.c.h.b16 %v2771
        %v3279 = vunpack.c.l.b16 %v2772
        %v3280 = vunpack.c.h.b16 %v2772
        %v3281 = vunpack.c.l.b16 %v2773
        %v3282 = vunpack.c.h.b16 %v2773
        %v3283 = vunpack.c.l.b16 %v2774
        %v3284 = vunpack.c.h.b16 %v2774
        %v3285 = vunpack.c.l.b16 %v2775
        %v3286 = vunpack.c.h.b16 %v2775
        %v3287 = vunpack.c.l.b16 %v2776
        %v3288 = vunpack.c.h.b16 %v2776
        %v3289 = vunpack.c.l.b16 %v2777
        %v3290 = vunpack.c.h.b16 %v2777
        %v3291 = vunpack.c.l.b16 %v2778
        %v3292 = vunpack.c.h.b16 %v2778
        %v3293 = vunpack.c.l.b16 %v2779
        %v3294 = vunpack.c.h.b16 %v2779
        %v3295 = vunpack.c.l.b16 %v2780
        %v3296 = vunpack.c.h.b16 %v2780
        %v3297 = vunpack.c.l.b16 %v2781
        %v3298 = vunpack.c.h.b16 %v2781
        %v3299 = vunpack.c.l.b16 %v2782
        %v3300 = vunpack.c.h.b16 %v2782
        %v3301 = vunpack.c.l.b16 %v2783
        %v3302 = vunpack.c.h.b16 %v2783
        %v3303 = vunpack.c.l.b16 %v2784
        %v3304 = vunpack.c.h.b16 %v2784
        %v3305 = vunpack.c.l.b16 %v2785
        %v3306 = vunpack.c.h.b16 %v2785
        %v3307 = vunpack.c.l.b16 %v2786
        %v3308 = vunpack.c.h.b16 %v2786
        %v3309 = vunpack.c.l.b16 %v2787
        %v3310 = vunpack.c.h.b16 %v2787
        %v3311 = vunpack.c.l.b16 %v2788
        %v3312 = vunpack.c.h.b16 %v2788
        %v3313 = vunpack.c.l.b16 %v2789
        %v3314 = vunpack.c.h.b16 %v2789
        %v3315 = vunpack.c.l.b16 %v2790
        %v3316 = vunpack.c.h.b16 %v2790
        %v3317 = vunpack.c.l.b16 %v2791
        %v3318 = vunpack.c.h.b16 %v2791
        %v3319 = vunpack.c.l.b16 %v2792
        %v3320 = vunpack.c.h.b16 %v2792
        %v3321 = vunpack.c.l.b16 %v2793
        %v3322 = vunpack.c.h.b16 %v2793
        %v3323 = vunpack.c.l.b16 %v2794
        %v3324 = vunpack.c.h.b16 %v2794
        %v3325 = vunpack.c.l.b16 %v2795
        %v3326 = vunpack.c.h.b16 %v2795
        %v3327 = vunpack.c.l.b16 %v2796
        %v3328 = vunpack.c.h.b16 %v2796
        %v3329 = vunpack.c.l.b16 %v2797
        %v3330 = vunpack.c.h.b16 %v2797
        %v3331 = vunpack.c.l.b16 %v2798
        %v3332 = vunpack.c.h.b16 %v2798
        %v3333 = vunpack.c.l.b16 %v2799
        %v3334 = vunpack.c.h.b16 %v2799
        %v3335 = vunpack.c.l.b16 %v2800
        %v3336 = vunpack.c.h.b16 %v2800
        %v3337 = vunpack.c.l.b16 %v2801
        %v3338 = vunpack.c.h.b16 %v2801
        %v3339 = vunpack.c.l.b16 %v2802
        %v3340 = vunpack.c.h.b16 %v2802
        %v3341 = vunpack.c.l.b16 %v2803
        %v3342 = vunpack.c.h.b16 %v2803
        %v3343 = vunpack.c.l.b16 %v2804
        %v3344 = vunpack.c.h.b16 %v2804
        %v3345 = vunpack.c.l.b16 %v2805
        %v3346 = vunpack.c.h.b16 %v2805
        %v3347 = vunpack.c.l.b16 %v2806
        %v3348 = vunpack.c.h.b16 %v2806
        %v3349 = vunpack.c.l.b16 %v2807
        %v3350 = vunpack.c.h.b16 %v2807
        %v3351 = vunpack.c.l.b16 %v2808
        %v3352 = vunpack.c.h.b16 %v2808
        %v3353 = vunpack.c.l.b16 %v2809
        %v3354 = vunpack.c.h.b16 %v2809
        %v3355 = vunpack.c.l.b16 %v2810
        %v3356 = vunpack.c.h.b16 %v2810
        %v3357 = vunpack.c.l.b16 %v2811
        %v3358 = vunpack.c.h.b16 %v2811
        %v3359 = vunpack.c.l.b16 %v2812
        %v3360 = vunpack.c.h.b16 %v2812
        %v3361 = vunpack.c.l.b16 %v2813
        %v3362 = vunpack.c.h.b16 %v2813
        %v3363 = vunpack.c.l.b16 %v2814
        %v3364 = vunpack.c.h.b16 %v2814
        %v3365 = vunpack.c.l.b16 %v2815
        %v3366 = vunpack.c.h.b16 %v2815
        %v3367 = vunpack.c.l.b16 %v2816
        %v3368 = vunpack.c.h.b16 %v2816
        %v3369 = vunpack.c.l.b16 %v2817
        %v3370 = vunpack.c.h.b16 %v2817
        %v3371 = vunpack.c.l.b16 %v2818
        %v3372 = vunpack.c.h.b16 %v2818
        %v3373 = vunpack.c.l.b16 %v2819
        %v3374 = vunpack.c.h.b16 %v2819
        %v3375 = vunpack.c.l.b16 %v2820
        %v3376 = vunpack.c.h.b16 %v2820
        %v3377 = vunpack.c.l.b16 %v2821
        %v3378 = vunpack.c.h.b16 %v2821
        %v3379 = vunpack.c.l.b16 %v2822
        %v3380 = vunpack.c.h.b16 %v2822
        %v3381 = vunpack.c.l.b16 %v2823
        %v3382 = vunpack.c.h.b16 %v2823
        %v3383 = vunpack.c.l.b16 %v2824
        %v3384 = vunpack.c.h.b16 %v2824
        %v3385 = vunpack.c.l.b16 %v2825
        %v3386 = vunpack.c.h.b16 %v2825
        %v3387 = vunpack.c.l.b16 %v2826
        %v3388 = vunpack.c.h.b16 %v2826
        %v3389 = vunpack.c.l.b16 %v2827
        %v3390 = vunpack.c.h.b16 %v2827
        %v3391 = vunpack.c.l.b16 %v2828
        %v3392 = vunpack.c.h.b16 %v2828
        %v3393 = vunpack.c.l.b16 %v2829
        %v3394 = vunpack.c.h.b16 %v2829
        %v3395 = vunpack.c.l.b16 %v2830
        %v3396 = vunpack.c.h.b16 %v2830
        %v3397 = vunpack.c.l.b16 %v2831
        %v3398 = vunpack.c.h.b16 %v2831
        %v3399 = vunpack.c.l.b16 %v2832
        %v3400 = vunpack.c.h.b16 %v2832
        %v3401 = vunpack.c.l.b16 %v2833
        %v3402 = vunpack.c.h.b16 %v2833
        %v3403 = vunpack.c.l.b16 %v2834
        %v3404 = vunpack.c.h.b16 %v2834
        %v3405 = vunpack.c.l.b16 %v2835
        %v3406 = vunpack.c.h.b16 %v2835
        %v3407 = vunpack.c.l.b16 %v2836
        %v3408 = vunpack.c.h.b16 %v2836
        %v3409 = vunpack.c.l.b16 %v2837
        %v3410 = vunpack.c.h.b16 %v2837
        %v3411 = vunpack.c.l.b16 %v2838
        %v3412 = vunpack.c.h.b16 %v2838
        %v3413 = vunpack.c.l.b16 %v2839
        %v3414 = vunpack.c.h.b16 %v2839
        %v3415 = vunpack.c.l.b16 %v2840
        %v3416 = vunpack.c.h.b16 %v2840
        %v3417 = vpack.c.b16 %v3039, %v3033
        %v3418 = vpack.c.b16 %v3040, %v3034
        %v3419 = vpack.c.b16 %v3041, %v3035
        %v3420 = vpack.c.b16 %v3042, %v3036
        %v3421 = vpack.c.b16 %v3043, %v3037
        %v3422 = vpack.c.b16 %v3044, %v3038
        %v3423 = vpack.c.b16 %v3051, %v3045
        %v3424 = vpack.c.b16 %v3052, %v3046
        %v3425 = vpack.c.b16 %v3053, %v3047
        %v3426 = vpack.c.b16 %v3054, %v3048
        %v3427 = vpack.c.b16 %v3055, %v3049
        %v3428 = vpack.c.b16 %v3056, %v3050
        %v3429 = vpack.c.b16 %v3063, %v3057
        %v3430 = vpack.c.b16 %v3064, %v3058
        %v3431 = vpack.c.b16 %v3065, %v3059
        %v3432 = vpack.c.b16 %v3066, %v3060
        %v3433 = vpack.c.b16 %v3067, %v3061
        %v3434 = vpack.c.b16 %v3068, %v3062
        %v3435 = vpack.c.b16 %v3075, %v3069
        %v3436 = vpack.c.b16 %v3076, %v3070
        %v3437 = vpack.c.b16 %v3077, %v3071
        %v3438 = vpack.c.b16 %v3078, %v3072
        %v3439 = vpack.c.b16 %v3079, %v3073
        %v3440 = vpack.c.b16 %v3080, %v3074
        %v3441 = vpack.c.b16 %v3087, %v3081
        %v3442 = vpack.c.b16 %v3088, %v3082
        %v3443 = vpack.c.b16 %v3089, %v3083
        %v3444 = vpack.c.b16 %v3090, %v3084
        %v3445 = vpack.c.b16 %v3091, %v3085
        %v3446 = vpack.c.b16 %v3092, %v3086
        %v3447 = vpack.c.b16 %v3099, %v3093
        %v3448 = vpack.c.b16 %v3100, %v3094
        %v3449 = vpack.c.b16 %v3101, %v3095
        %v3450 = vpack.c.b16 %v3102, %v3096
        %v3451 = vpack.c.b16 %v3103, %v3097
        %v3452 = vpack.c.b16 %v3104, %v3098
        %v3453 = vpack.c.b16 %v3111, %v3105
        %v3454 = vpack.c.b16 %v3112, %v3106
        %v3455 = vpack.c.b16 %v3113, %v3107
        %v3456 = vpack.c.b16 %v3114, %v3108
        %v3457 = vpack.c.b16 %v3115, %v3109
        %v3458 = vpack.c.b16 %v3116, %v3110
        %v3459 = vpack.c.b16 %v3123, %v3117
        %v3460 = vpack.c.b16 %v3124, %v3118
        %v3461 = vpack.c.b16 %v3125, %v3119
        %v3462 = vpack.c.b16 %v3126, %v3120
        %v3463 = vpack.c.b16 %v3127, %v3121
        %v3464 = vpack.c.b16 %v3128, %v3122
        %v3465 = vpack.c.b16 %v3135, %v3129
        %v3466 = vpack.c.b16 %v3136, %v3130
        %v3467 = vpack.c.b16 %v3137, %v3131
        %v3468 = vpack.c.b16 %v3138, %v3132
        %v3469 = vpack.c.b16 %v3139, %v3133
        %v3470 = vpack.c.b16 %v3140, %v3134
        %v3471 = vpack.c.b16 %v3147, %v3141
        %v3472 = vpack.c.b16 %v3148, %v3142
        %v3473 = vpack.c.b16 %v3149, %v3143
        %v3474 = vpack.c.b16 %v3150, %v3144
        %v3475 = vpack.c.b16 %v3151, %v3145
        %v3476 = vpack.c.b16 %v3152, %v3146
        %v3477 = vpack.c.b16 %v3159, %v3153
        %v3478 = vpack.c.b16 %v3160, %v3154
        %v3479 = vpack.c.b16 %v3161, %v3155
        %v3480 = vpack.c.b16 %v3162, %v3156
        %v3481 = vpack.c.b16 %v3163, %v3157
        %v3482 = vpack.c.b16 %v3164, %v3158
        %v3483 = vpack.c.b16 %v3171, %v3165
        %v3484 = vpack.c.b16 %v3172, %v3166
        %v3485 = vpack.c.b16 %v3173, %v3167
        %v3486 = vpack.c.b16 %v3174, %v3168
        %v3487 = vpack.c.b16 %v3175, %v3169
        %v3488 = vpack.c.b16 %v3176, %v3170
        %v3489 = vpack.c.b16 %v3183, %v3177
        %v3490 = vpack.c.b16 %v3184, %v3178
        %v3491 = vpack.c.b16 %v3185, %v3179
        %v3492 = vpack.c.b16 %v3186, %v3180
        %v3493 = vpack.c.b16 %v3187, %v3181
        %v3494 = vpack.c.b16 %v3188, %v3182
        %v3495 = vpack.c.b16 %v3195, %v3189
        %v3496 = vpack.c.b16 %v3196, %v3190
        %v3497 = vpack.c.b16 %v3197, %v3191
        %v3498 = vpack.c.b16 %v3198, %v3192
        %v3499 = vpack.c.b16 %v3199, %v3193
        %v3500 = vpack.c.b16 %v3200, %v3194
        %v3501 = vpack.c.b16 %v3207, %v3201
        %v3502 = vpack.c.b16 %v3208, %v3202
        %v3503 = vpack.c.b16 %v3209, %v3203
        %v3504 = vpack.c.b16 %v3210, %v3204
        %v3505 = vpack.c.b16 %v3211, %v3205
        %v3506 = vpack.c.b16 %v3212, %v3206
        %v3507 = vpack.c.b16 %v3219, %v3213
        %v3508 = vpack.c.b16 %v3220, %v3214
        %v3509 = vpack.c.b16 %v3221, %v3215
        %v3510 = vpack.c.b16 %v3222, %v3216
        %v3511 = vpack.c.b16 %v3223, %v3217
        %v3512 = vpack.c.b16 %v3224, %v3218
        %v3513 = vpack.c.b16 %v3231, %v3225
        %v3514 = vpack.c.b16 %v3232, %v3226
        %v3515 = vpack.c.b16 %v3233, %v3227
        %v3516 = vpack.c.b16 %v3234, %v3228
        %v3517 = vpack.c.b16 %v3235, %v3229
        %v3518 = vpack.c.b16 %v3236, %v3230
        %v3519 = vpack.c.b16 %v3243, %v3237
        %v3520 = vpack.c.b16 %v3244, %v3238
        %v3521 = vpack.c.b16 %v3245, %v3239
        %v3522 = vpack.c.b16 %v3246, %v3240
        %v3523 = vpack.c.b16 %v3247, %v3241
        %v3524 = vpack.c.b16 %v3248, %v3242
        %v3525 = vpack.c.b16 %v3255, %v3249
        %v3526 = vpack.c.b16 %v3256, %v3250
        %v3527 = vpack.c.b16 %v3257, %v3251
        %v3528 = vpack.c.b16 %v3258, %v3252
        %v3529 = vpack.c.b16 %v3259, %v3253
        %v3530 = vpack.c.b16 %v3260, %v3254
        %v3531 = vpack.c.b16 %v3267, %v3261
        %v3532 = vpack.c.b16 %v3268, %v3262
        %v3533 = vpack.c.b16 %v3269, %v3263
        %v3534 = vpack.c.b16 %v3270, %v3264
        %v3535 = vpack.c.b16 %v3271, %v3265
        %v3536 = vpack.c.b16 %v3272, %v3266
        %v3537 = vpack.c.b16 %v3279, %v3273
        %v3538 = vpack.c.b16 %v3280, %v3274
        %v3539 = vpack.c.b16 %v3281, %v3275
        %v3540 = vpack.c.b16 %v3282, %v3276
        %v3541 = vpack.c.b16 %v3283, %v3277
        %v3542 = vpack.c.b16 %v3284, %v3278
        %v3543 = vpack.c.b16 %v3291, %v3285
        %v3544 = vpack.c.b16 %v3292, %v3286
        %v3545 = vpack.c.b16 %v3293, %v3287
        %v3546 = vpack.c.b16 %v3294, %v3288
        %v3547 = vpack.c.b16 %v3295, %v3289
        %v3548 = vpack.c.b16 %v3296, %v3290
        %v3549 = vpack.c.b16 %v3303, %v3297
        %v3550 = vpack.c.b16 %v3304, %v3298
        %v3551 = vpack.c.b16 %v3305, %v3299
        %v3552 = vpack.c.b16 %v3306, %v3300
        %v3553 = vpack.c.b16 %v3307, %v3301
        %v3554 = vpack.c.b16 %v3308, %v3302
        %v3555 = vpack.c.b16 %v3315, %v3309
        %v3556 = vpack.c.b16 %v3316, %v3310
        %v3557 = vpack.c.b16 %v3317, %v3311
        %v3558 = vpack.c.b16 %v3318, %v3312
        %v3559 = vpack.c.b16 %v3319, %v3313
        %v3560 = vpack.c.b16 %v3320, %v3314
        %v3561 = vpack.c.b16 %v3327, %v3321
        %v3562 = vpack.c.b16 %v3328, %v3322
        %v3563 = vpack.c.b16 %v3329, %v3323
        %v3564 = vpack.c.b16 %v3330, %v3324
        %v3565 = vpack.c.b16 %v3331, %v3325
        %v3566 = vpack.c.b16 %v3332, %v3326
        %v3567 = vpack.c.b16 %v3339, %v3333
        %v3568 = vpack.c.b16 %v3340, %v3334
        %v3569 = vpack.c.b16 %v3341, %v3335
        %v3570 = vpack.c.b16 %v3342, %v3336
        %v3571 = vpack.c.b16 %v3343, %v3337
        %v3572 = vpack.c.b16 %v3344, %v3338
        %v3573 = vpack.c.b16 %v3351, %v3345
        %v3574 = vpack.c.b16 %v3352, %v3346
        %v3575 = vpack.c.b16 %v3353, %v3347
        %v3576 = vpack.c.b16 %v3354, %v3348
        %v3577 = vpack.c.b16 %v3355, %v3349
        %v3578 = vpack.c.b16 %v3356, %v3350
        %v3579 = vpack.c.b16 %v3363, %v3357
        %v3580 = vpack.c.b16 %v3364, %v3358
        %v3581 = vpack.c.b16 %v3365, %v3359
        %v3582 = vpack.c.b16 %v3366, %v3360
        %v3583 = vpack.c.b16 %v3367, %v3361
        %v3584 = vpack.c.b16 %v3368, %v3362
        %v3585 = vpack.c.b16 %v3375, %v3369
        %v3586 = vpack.c.b16 %v3376, %v3370
        %v3587 = vpack.c.b16 %v3377, %v3371
        %v3588 = vpack.c.b16 %v3378, %v3372
        %v3589 = vpack.c.b16 %v3379, %v3373
        %v3590 = vpack.c.b16 %v3380, %v3374
        %v3591 = vpack.c.b16 %v3387, %v3381
        %v3592 = vpack.c.b16 %v3388, %v3382
        %v3593 = vpack.c.b16 %v3389, %v3383
        %v3594 = vpack.c.b16 %v3390, %v3384
        %v3595 = vpack.c.b16 %v3391, %v3385
        %v3596 = vpack.c.b16 %v3392, %v3386
        %v3597 = vpack.c.b16 %v3399, %v3393
        %v3598 = vpack.c.b16 %v3400, %v3394
        %v3599 = vpack.c.b16 %v3401, %v3395
        %v3600 = vpack.c.b16 %v3402, %v3396
        %v3601 = vpack.c.b16 %v3403, %v3397
        %v3602 = vpack.c.b16 %v3404, %v3398
        %v3603 = vpack.c.b16 %v3411, %v3405
        %v3604 = vpack.c.b16 %v3412, %v3406
        %v3605 = vpack.c.b16 %v3413, %v3407
        %v3606 = vpack.c.b16 %v3414, %v3408
        %v3607 = vpack.c.b16 %v3415, %v3409
        %v3608 = vpack.c.b16 %v3416, %v3410
        %3801 = vmatprep.subr.bf16.mxu0 %v3418
        %3802 = vmatpush1.bf16.msra.mxu0 %v3417
        %3803 = vmatprep.subr.bf16.mxu0 %v3424
        %3804 = vmatpush1.bf16.msra.mxu0 %v3423
        %3805 = vmatprep.subr.bf16.mxu0 %v3430
        %3806 = vmatpush1.bf16.msra.mxu0 %v3429
        %3807 = vmatprep.subr.bf16.mxu0 %v3436
        %3808 = vmatpush1.bf16.msra.mxu0 %v3435
        %3809 = vmatprep.subr.bf16.mxu0 %v3442
        %3810 = vmatpush1.bf16.msra.mxu0 %v3441
        %3811 = vmatprep.subr.bf16.mxu0 %v3448
        %3812 = vmatpush1.bf16.msra.mxu0 %v3447
        %3813 = vmatprep.subr.bf16.mxu0 %v3454
        %3814 = vmatpush1.bf16.msra.mxu0 %v3453
        %3815 = vmatprep.subr.bf16.mxu0 %v3460
        %3816 = vmatpush1.bf16.msra.mxu0 %v3459
        %3817 = vmatprep.subr.bf16.mxu0 %v3466
        %3818 = vmatpush1.bf16.msra.mxu0 %v3465
        %3819 = vmatprep.subr.bf16.mxu0 %v3472
        %3820 = vmatpush1.bf16.msra.mxu0 %v3471
        %3821 = vmatprep.subr.bf16.mxu0 %v3478
        %3822 = vmatpush1.bf16.msra.mxu0 %v3477
        %3823 = vmatprep.subr.bf16.mxu0 %v3484
        %3824 = vmatpush1.bf16.msra.mxu0 %v3483
        %3825 = vmatprep.subr.bf16.mxu0 %v3490
        %3826 = vmatpush1.bf16.msra.mxu0 %v3489
        %3827 = vmatprep.subr.bf16.mxu0 %v3496
        %3828 = vmatpush1.bf16.msra.mxu0 %v3495
        %3829 = vmatprep.subr.bf16.mxu0 %v3502
        %3830 = vmatpush1.bf16.msra.mxu0 %v3501
        %3831 = vmatprep.subr.bf16.mxu0 %v3508
        %3832 = vmatpush1.bf16.msra.mxu0 %v3507
        %3833 = vmatprep.mubr.bf16.mxu0 %v2646
        %3834 = vmatmul.mubr.bf16.gmra.mrb[0].mxu0 %v2645
        %v3835 = vpop.f32.mrb[0].mxu0
        %v3836 = vadd.f32 0.0, %v3835
        %v3837 = vpop.f32.mrb[0].mxu0
        %v3838 = vadd.f32 0.0, %v3837
        %v3839 = vpop.f32.mrb[0].mxu0
        %v3840 = vpop.f32.mrb[0].mxu0
        %3841 = vdwg.mxu0
        %3842 = vmatprep.subr.bf16.mxu0 %v3514
        %3843 = vmatpush1.bf16.msra.mxu0 %v3513
        %3844 = vmatprep.subr.bf16.mxu0 %v3520
        %3845 = vmatpush1.bf16.msra.mxu0 %v3519
        %3846 = vmatprep.subr.bf16.mxu0 %v3526
        %3847 = vmatpush1.bf16.msra.mxu0 %v3525
        %3848 = vmatprep.subr.bf16.mxu0 %v3532
        %3849 = vmatpush1.bf16.msra.mxu0 %v3531
        %3850 = vmatprep.subr.bf16.mxu0 %v3538
        %3851 = vmatpush1.bf16.msra.mxu0 %v3537
        %3852 = vmatprep.subr.bf16.mxu0 %v3544
        %3853 = vmatpush1.bf16.msra.mxu0 %v3543
        %3854 = vmatprep.subr.bf16.mxu0 %v3550
        %3855 = vmatpush1.bf16.msra.mxu0 %v3549
        %3856 = vmatprep.subr.bf16.mxu0 %v3556
        %3857 = vmatpush1.bf16.msra.mxu0 %v3555
        %3858 = vmatprep.subr.bf16.mxu0 %v3562
        %3859 = vmatpush1.bf16.msra.mxu0 %v3561
        %3860 = vmatprep.subr.bf16.mxu0 %v3568
        %3861 = vmatpush1.bf16.msra.mxu0 %v3567
        %3862 = vmatprep.subr.bf16.mxu0 %v3574
        %3863 = vmatpush1.bf16.msra.mxu0 %v3573
        %3864 = vmatprep.subr.bf16.mxu0 %v3580
        %3865 = vmatpush1.bf16.msra.mxu0 %v3579
        %3866 = vmatprep.subr.bf16.mxu0 %v3586
        %3867 = vmatpush1.bf16.msra.mxu0 %v3585
        %3868 = vmatprep.subr.bf16.mxu0 %v3592
        %3869 = vmatpush1.bf16.msra.mxu0 %v3591
        %3870 = vmatprep.subr.bf16.mxu0 %v3598
        %3871 = vmatpush1.bf16.msra.mxu0 %v3597
        %3872 = vmatprep.subr.bf16.mxu0 %v3604
        %3873 = vmatpush1.bf16.msra.mxu0 %v3603
        %3874 = vmatprep.mubr.bf16.mxu0 %v2648
        %3875 = vmatmul.mubr.bf16.gmra.mrb[0].mxu0 %v2647
        %v3876 = vpop.f32.mrb[0].mxu0
        %v3877 = vadd.f32 %v3836, %v3876
        %v3878 = vpop.f32.mrb[0].mxu0
        %v3879 = vadd.f32 %v3838, %v3878
        %v3880 = vpop.f32.mrb[0].mxu0
        %v3881 = vpop.f32.mrb[0].mxu0
        %3882 = vdwg.mxu0
        %3883 = vmatprep.subr.bf16.mxu0 %v3420
        %3884 = vmatpush1.bf16.msra.mxu0 %v3419
        %3885 = vmatprep.subr.bf16.mxu0 %v3426
        %3886 = vmatpush1.bf16.msra.mxu0 %v3425
        %3887 = vmatprep.subr.bf16.mxu0 %v3432
        %3888 = vmatpush1.bf16.msra.mxu0 %v3431
        %3889 = vmatprep.subr.bf16.mxu0 %v3438
        %3890 = vmatpush1.bf16.msra.mxu0 %v3437
        %3891 = vmatprep.subr.bf16.mxu0 %v3444
        %3892 = vmatpush1.bf16.msra.mxu0 %v3443
        %3893 = vmatprep.subr.bf16.mxu0 %v3450
        %3894 = vmatpush1.bf16.msra.mxu0 %v3449
        %3895 = vmatprep.subr.bf16.mxu0 %v3456
        %3896 = vmatpush1.bf16.msra.mxu0 %v3455
        %3897 = vmatprep.subr.bf16.mxu0 %v3462
        %3898 = vmatpush1.bf16.msra.mxu0 %v3461
        %3899 = vmatprep.subr.bf16.mxu0 %v3468
        %3900 = vmatpush1.bf16.msra.mxu0 %v3467
        %3901 = vmatprep.subr.bf16.mxu0 %v3474
        %3902 = vmatpush1.bf16.msra.mxu0 %v3473
        %3903 = vmatprep.subr.bf16.mxu0 %v3480
        %3904 = vmatpush1.bf16.msra.mxu0 %v3479
        %3905 = vmatprep.subr.bf16.mxu0 %v3486
        %3906 = vmatpush1.bf16.msra.mxu0 %v3485
        %3907 = vmatprep.subr.bf16.mxu0 %v3492
        %3908 = vmatpush1.bf16.msra.mxu0 %v3491
        %3909 = vmatprep.subr.bf16.mxu0 %v3498
        %3910 = vmatpush1.bf16.msra.mxu0 %v3497
        %3911 = vmatprep.subr.bf16.mxu0 %v3504
        %3912 = vmatpush1.bf16.msra.mxu0 %v3503
        %3913 = vmatprep.subr.bf16.mxu0 %v3510
        %3914 = vmatpush1.bf16.msra.mxu0 %v3509
        %3915 = vmatprep.mubr.bf16.mxu0 %v2646
        %3916 = vmatmul.mubr.bf16.gmra.mrb[0].mxu0 %v2645
        %v3917 = vpop.f32.mrb[0].mxu0
        %v3918 = vadd.f32 0.0, %v3917
        %v3919 = vpop.f32.mrb[0].mxu0
        %v3920 = vadd.f32 0.0, %v3919
        %v3921 = vpop.f32.mrb[0].mxu0
        %v3922 = vpop.f32.mrb[0].mxu0
        %3923 = vdwg.mxu0
        %3924 = vmatprep.subr.bf16.mxu0 %v3516
        %3925 = vmatpush1.bf16.msra.mxu0 %v3515
        %3926 = vmatprep.subr.bf16.mxu0 %v3522
        %3927 = vmatpush1.bf16.msra.mxu0 %v3521
        %3928 = vmatprep.subr.bf16.mxu0 %v3528
        %3929 = vmatpush1.bf16.msra.mxu0 %v3527
        %3930 = vmatprep.subr.bf16.mxu0 %v3534
        %3931 = vmatpush1.bf16.msra.mxu0 %v3533
        %3932 = vmatprep.subr.bf16.mxu0 %v3540
        %3933 = vmatpush1.bf16.msra.mxu0 %v3539
        %3934 = vmatprep.subr.bf16.mxu0 %v3546
        %3935 = vmatpush1.bf16.msra.mxu0 %v3545
        %3936 = vmatprep.subr.bf16.mxu0 %v3552
        %3937 = vmatpush1.bf16.msra.mxu0 %v3551
        %3938 = vmatprep.subr.bf16.mxu0 %v3558
        %3939 = vmatpush1.bf16.msra.mxu0 %v3557
        %3940 = vmatprep.subr.bf16.mxu0 %v3564
        %3941 = vmatpush1.bf16.msra.mxu0 %v3563
        %3942 = vmatprep.subr.bf16.mxu0 %v3570
        %3943 = vmatpush1.bf16.msra.mxu0 %v3569
        %3944 = vmatprep.subr.bf16.mxu0 %v3576
        %3945 = vmatpush1.bf16.msra.mxu0 %v3575
        %3946 = vmatprep.subr.bf16.mxu0 %v3582
        %3947 = vmatpush1.bf16.msra.mxu0 %v3581
        %3948 = vmatprep.subr.bf16.mxu0 %v3588
        %3949 = vmatpush1.bf16.msra.mxu0 %v3587
        %3950 = vmatprep.subr.bf16.mxu0 %v3594
        %3951 = vmatpush1.bf16.msra.mxu0 %v3593
        %3952 = vmatprep.subr.bf16.mxu0 %v3600
        %3953 = vmatpush1.bf16.msra.mxu0 %v3599
        %3954 = vmatprep.subr.bf16.mxu0 %v3606
        %3955 = vmatpush1.bf16.msra.mxu0 %v3605
        %3956 = vmatprep.mubr.bf16.mxu0 %v2648
        %3957 = vmatmul.mubr.bf16.gmra.mrb[0].mxu0 %v2647
        %v3958 = vpop.f32.mrb[0].mxu0
        %v3959 = vadd.f32 %v3918, %v3958
        %v3960 = vpop.f32.mrb[0].mxu0
        %v3961 = vadd.f32 %v3920, %v3960
        %v3962 = vpop.f32.mrb[0].mxu0
        %v3963 = vpop.f32.mrb[0].mxu0
        %3964 = vdwg.mxu0
        %3965 = vmatprep.subr.bf16.mxu0 %v3422
        %3966 = vmatpush1.bf16.msra.mxu0 %v3421
        %3967 = vmatprep.subr.bf16.mxu0 %v3428
        %3968 = vmatpush1.bf16.msra.mxu0 %v3427
        %3969 = vmatprep.subr.bf16.mxu0 %v3434
        %3970 = vmatpush1.bf16.msra.mxu0 %v3433
        %3971 = vmatprep.subr.bf16.mxu0 %v3440
        %3972 = vmatpush1.bf16.msra.mxu0 %v3439
        %3973 = vmatprep.subr.bf16.mxu0 %v3446
        %3974 = vmatpush1.bf16.msra.mxu0 %v3445
        %3975 = vmatprep.subr.bf16.mxu0 %v3452
        %3976 = vmatpush1.bf16.msra.mxu0 %v3451
        %3977 = vmatprep.subr.bf16.mxu0 %v3458
        %3978 = vmatpush1.bf16.msra.mxu0 %v3457
        %3979 = vmatprep.subr.bf16.mxu0 %v3464
        %3980 = vmatpush1.bf16.msra.mxu0 %v3463
        %3981 = vmatprep.subr.bf16.mxu0 %v3470
        %3982 = vmatpush1.bf16.msra.mxu0 %v3469
        %3983 = vmatprep.subr.bf16.mxu0 %v3476
        %3984 = vmatpush1.bf16.msra.mxu0 %v3475
        %3985 = vmatprep.subr.bf16.mxu0 %v3482
        %3986 = vmatpush1.bf16.msra.mxu0 %v3481
        %3987 = vmatprep.subr.bf16.mxu0 %v3488
        %3988 = vmatpush1.bf16.msra.mxu0 %v3487
        %3989 = vmatprep.subr.bf16.mxu0 %v3494
        %3990 = vmatpush1.bf16.msra.mxu0 %v3493
        %3991 = vmatprep.subr.bf16.mxu0 %v3500
        %3992 = vmatpush1.bf16.msra.mxu0 %v3499
        %3993 = vmatprep.subr.bf16.mxu0 %v3506
        %3994 = vmatpush1.bf16.msra.mxu0 %v3505
        %3995 = vmatprep.subr.bf16.mxu0 %v3512
        %3996 = vmatpush1.bf16.msra.mxu0 %v3511
        %3997 = vmatprep.mubr.bf16.mxu0 %v2646
        %3998 = vmatmul.mubr.bf16.gmra.mrb[0].mxu0 %v2645
        %v3999 = vpop.f32.mrb[0].mxu0
        %v4000 = vadd.f32 0.0, %v3999
        %v4001 = vpop.f32.mrb[0].mxu0
        %v4002 = vadd.f32 0.0, %v4001
        %v4003 = vpop.f32.mrb[0].mxu0
        %v4004 = vpop.f32.mrb[0].mxu0
        %4005 = vdwg.mxu0
        %4006 = vmatprep.subr.bf16.mxu0 %v3518
        %4007 = vmatpush1.bf16.msra.mxu0 %v3517
        %4008 = vmatprep.subr.bf16.mxu0 %v3524
        %4009 = vmatpush1.bf16.msra.mxu0 %v3523
        %4010 = vmatprep.subr.bf16.mxu0 %v3530
        %4011 = vmatpush1.bf16.msra.mxu0 %v3529
        %4012 = vmatprep.subr.bf16.mxu0 %v3536
        %4013 = vmatpush1.bf16.msra.mxu0 %v3535
        %4014 = vmatprep.subr.bf16.mxu0 %v3542
        %4015 = vmatpush1.bf16.msra.mxu0 %v3541
        %4016 = vmatprep.subr.bf16.mxu0 %v3548
        %4017 = vmatpush1.bf16.msra.mxu0 %v3547
        %4018 = vmatprep.subr.bf16.mxu0 %v3554
        %4019 = vmatpush1.bf16.msra.mxu0 %v3553
        %4020 = vmatprep.subr.bf16.mxu0 %v3560
        %4021 = vmatpush1.bf16.msra.mxu0 %v3559
        %4022 = vmatprep.subr.bf16.mxu0 %v3566
        %4023 = vmatpush1.bf16.msra.mxu0 %v3565
        %4024 = vmatprep.subr.bf16.mxu0 %v3572
        %4025 = vmatpush1.bf16.msra.mxu0 %v3571
        %4026 = vmatprep.subr.bf16.mxu0 %v3578
        %4027 = vmatpush1.bf16.msra.mxu0 %v3577
        %4028 = vmatprep.subr.bf16.mxu0 %v3584
        %4029 = vmatpush1.bf16.msra.mxu0 %v3583
        %4030 = vmatprep.subr.bf16.mxu0 %v3590
        %4031 = vmatpush1.bf16.msra.mxu0 %v3589
        %4032 = vmatprep.subr.bf16.mxu0 %v3596
        %4033 = vmatpush1.bf16.msra.mxu0 %v3595
        %4034 = vmatprep.subr.bf16.mxu0 %v3602
        %4035 = vmatpush1.bf16.msra.mxu0 %v3601
        %4036 = vmatprep.subr.bf16.mxu0 %v3608
        %4037 = vmatpush1.bf16.msra.mxu0 %v3607
        %4038 = vmatprep.mubr.bf16.mxu0 %v2648
        %4039 = vmatmul.mubr.bf16.gmra.mrb[0].mxu0 %v2647
        %v4040 = vpop.f32.mrb[0].mxu0
        %v4041 = vadd.f32 %v4000, %v4040
        %v4042 = vpop.f32.mrb[0].mxu0
        %v4043 = vadd.f32 %v4002, %v4042
        %v4044 = vpop.f32.mrb[0].mxu0
        %v4045 = vpop.f32.mrb[0].mxu0
        %4046 = vdwg.mxu0
        %v4053 = vcombine.low %v3877, %v3879
        %v4054 = vcombine.low %v3959, %v3961
        %v4056 = vunpack.c.l.s4 1983009808
        %v4057 = vunpack.c.0.s8 %v4056
        %v4058 = vlaneseq
        %v4059 = vshrl.u32 %v4058, 7
        %v4060 = vsub.s32 %v4057, %v4059
        %v4061 = vrot.slane %v4053, %v4060
        %v4063 = vunpack.c.l.s4 1983009808
        %v4064 = vunpack.c.0.s8 %v4063
        %v4065 = vlaneseq
        %v4066 = vshrl.u32 %v4065, 7
        %v4067 = vsub.s32 %v4064, %v4066
        %v4068 = vrot.slane %v4054, %v4067
        %v4069 = vcombine.low %v4061, %v4068
        %v4070 = vcombine.low %v4041, %v4043
        %v4072 = vunpack.c.l.s4 1983009808
        %v4073 = vunpack.c.0.s8 %v4072
        %v4074 = vlaneseq
        %v4075 = vshrl.u32 %v4074, 7
        %v4076 = vsub.s32 %v4073, %v4075
        %v4077 = vrot.slane %v4070, %v4076
        %v4080 = vadd.f32 %v2643, %v4069
        %v4081 = vadd.f32 %v2644, %v4077
        %4082 = vst [vmem:[#allocation3] sm:$0xff] %v4080
        %4083 = vst [vmem:[#allocation3 + $0x8] sm:$0xf] %v4081
        %p4084 = scmp.eq.s32.totalorder %s29, 3
        // Predicated region
        $region85: #{tpu_custom_call.1} parent=55 // pred_check
          %p4085 = pneg %p4084
        $region86: #{tpu_custom_call.1} parent=55 // pred_check_branch
          %4087 = sbr.rel (%p4085) target = $region88
        $region87: #{tpu_custom_call.1} parent=55 // pred_region
          %v4088 = vld [vmem:[#allocation3] sm:$0xff]
          %v4089 = vld [vmem:[#allocation3 + $0x8] sm:$0xf]
          %v4090 = vld [vmem:[#allocation12] sm:$0x3f]
          %v4092 = vlaneseq
          %v4093 = vshrl.u32 %v4092, 7
          %v4094 = vsub.s32 0, %v4093
          %v4095 = vrot.slane %v4090, %v4094
          %v4096 = vlaneseq
          %v4097 = vshrl.u32 %v4096, 7
          %v4098 = vsub.s32 1, %v4097
          %v4099 = vrot.slane %v4090, %v4098
          %v4100 = vlaneseq
          %v4101 = vshrl.u32 %v4100, 7
          %v4102 = vsub.s32 2, %v4101
          %v4103 = vrot.slane %v4090, %v4102
          %v4104 = vlaneseq
          %v4105 = vshrl.u32 %v4104, 7
          %v4106 = vsub.s32 3, %v4105
          %v4107 = vrot.slane %v4090, %v4106
          %v4108 = vlaneseq
          %v4109 = vshrl.u32 %v4108, 7
          %v4110 = vsub.s32 4, %v4109
          %v4111 = vrot.slane %v4090, %v4110
          %v4112 = vlaneseq
          %v4113 = vshrl.u32 %v4112, 7
          %v4114 = vsub.s32 5, %v4113
          %v4115 = vrot.slane %v4090, %v4114
          %v4116 = vcombine.low %v4095, %v4099
          %v4117 = vcombine.low %v4103, %v4107
          %v4119 = vunpack.c.l.s4 1983009808
          %v4120 = vunpack.c.0.s8 %v4119
          %v4121 = vlaneseq
          %v4122 = vshrl.u32 %v4121, 7
          %v4123 = vsub.s32 %v4120, %v4122
          %v4124 = vrot.slane %v4116, %v4123
          %v4126 = vunpack.c.l.s4 1983009808
          %v4127 = vunpack.c.0.s8 %v4126
          %v4128 = vlaneseq
          %v4129 = vshrl.u32 %v4128, 7
          %v4130 = vsub.s32 %v4127, %v4129
          %v4131 = vrot.slane %v4117, %v4130
          %v4132 = vcombine.low %v4124, %v4131
          %v4133 = vcombine.low %v4111, %v4115
          %v4135 = vunpack.c.l.s4 1983009808
          %v4136 = vunpack.c.0.s8 %v4135
          %v4137 = vlaneseq
          %v4138 = vshrl.u32 %v4137, 7
          %v4139 = vsub.s32 %v4136, %v4138
          %v4140 = vrot.slane %v4133, %v4139
          %v4143 = vadd.f32 %v4088, %v4132
          %v4144 = vadd.f32 %v4089, %v4140
          %v4145 = vlaneseq
          %v4146 = vand.u32 %v4145, 127
          %v4147 = vld [vmem:[%s6] sm:$0xff]
          %v4148 = vld [vmem:[%s6 + $0x8] sm:$0xff]
          %v4149 = vld [vmem:[%s6 + $0x10] sm:$0xff]
          %v4150 = vld [vmem:[%s6 + $0x18] sm:$0xff]
          %v4151 = vld [vmem:[%s6 + $0x20] sm:$0xff]
          %v4152 = vld [vmem:[%s6 + $0x28] sm:$0xff]
          %v4153 = vld [vmem:[%s6 + $0x30] sm:$0xff]
          %v4154 = vld [vmem:[%s6 + $0x38] sm:$0xff]
          %v4155 = vld [vmem:[%s6 + $0x40] sm:$0xff]
          %v4156 = vld [vmem:[%s6 + $0x48] sm:$0xff]
          %v4157 = vld [vmem:[%s6 + $0x50] sm:$0xff]
          %v4158 = vld [vmem:[%s6 + $0x58] sm:$0xff]
          %v4159 = vld [vmem:[%s6 + $0x60] sm:$0xff]
          %v4160 = vld [vmem:[%s6 + $0x68] sm:$0xff]
          %v4161 = vld [vmem:[%s6 + $0x70] sm:$0xff]
          %v4162 = vld [vmem:[%s6 + $0x78] sm:$0xff]
          %v4163 = vld [vmem:[%s6 + $0x80] sm:$0xff]
          %v4164 = vld [vmem:[%s6 + $0x88] sm:$0xff]
          %v4165 = vld [vmem:[%s6 + $0x90] sm:$0xff]
          %v4166 = vld [vmem:[%s6 + $0x98] sm:$0x3]
          %4167 = vset.pattern.permute.xlu0 0
          %4168 = vperm.xlu0 %4167, %v4147
          %v4169 = vpop.permute.xlu0 %4168
          %4170 = vset.pattern.permute.xlu0 0
          %4171 = vperm.xlu0 %4170, %v4148
          %v4172 = vpop.permute.xlu0 %4171
          %4173 = vset.pattern.permute.xlu0 0
          %4174 = vperm.xlu0 %4173, %v4149
          %v4175 = vpop.permute.xlu0 %4174
          %4176 = vset.pattern.permute.xlu0 0
          %4177 = vperm.xlu0 %4176, %v4150
          %v4178 = vpop.permute.xlu0 %4177
          %4179 = vset.pattern.permute.xlu0 0
          %4180 = vperm.xlu0 %4179, %v4151
          %v4181 = vpop.permute.xlu0 %4180
          %4182 = vset.pattern.permute.xlu0 0
          %4183 = vperm.xlu0 %4182, %v4152
          %v4184 = vpop.permute.xlu0 %4183
          %4185 = vset.pattern.permute.xlu0 0
          %4186 = vperm.xlu0 %4185, %v4153
          %v4187 = vpop.permute.xlu0 %4186
          %4188 = vset.pattern.permute.xlu0 0
          %4189 = vperm.xlu0 %4188, %v4154
          %v4190 = vpop.permute.xlu0 %4189
          %4191 = vset.pattern.permute.xlu0 0
          %4192 = vperm.xlu0 %4191, %v4155
          %v4193 = vpop.permute.xlu0 %4192
          %4194 = vset.pattern.permute.xlu0 0
          %4195 = vperm.xlu0 %4194, %v4156
          %v4196 = vpop.permute.xlu0 %4195
          %4197 = vset.pattern.permute.xlu0 0
          %4198 = vperm.xlu0 %4197, %v4157
          %v4199 = vpop.permute.xlu0 %4198
          %4200 = vset.pattern.permute.xlu0 0
          %4201 = vperm.xlu0 %4200, %v4158
          %v4202 = vpop.permute.xlu0 %4201
          %4203 = vset.pattern.permute.xlu0 0
          %4204 = vperm.xlu0 %4203, %v4159
          %v4205 = vpop.permute.xlu0 %4204
          %4206 = vset.pattern.permute.xlu0 0
          %4207 = vperm.xlu0 %4206, %v4160
          %v4208 = vpop.permute.xlu0 %4207
          %4209 = vset.pattern.permute.xlu0 0
          %4210 = vperm.xlu0 %4209, %v4161
          %v4211 = vpop.permute.xlu0 %4210
          %4212 = vset.pattern.permute.xlu0 0
          %4213 = vperm.xlu0 %4212, %v4162
          %v4214 = vpop.permute.xlu0 %4213
          %4215 = vset.pattern.permute.xlu0 0
          %4216 = vperm.xlu0 %4215, %v4163
          %v4217 = vpop.permute.xlu0 %4216
          %4218 = vset.pattern.permute.xlu0 0
          %4219 = vperm.xlu0 %4218, %v4164
          %v4220 = vpop.permute.xlu0 %4219
          %4221 = vset.pattern.permute.xlu0 0
          %4222 = vperm.xlu0 %4221, %v4165
          %v4223 = vpop.permute.xlu0 %4222
          %4224 = vset.pattern.permute.xlu0 0
          %4225 = vperm.xlu0 %4224, %v4166
          %v4226 = vpop.permute.xlu0 %4225
          %vm4227 = vcmp.eq.s32.totalorder %v4169, %v4146
          %vm4228 = vcmp.eq.s32.totalorder %v4172, %v4146
          %vm4229 = vcmp.eq.s32.totalorder %v4175, %v4146
          %vm4230 = vcmp.eq.s32.totalorder %v4178, %v4146
          %vm4231 = vcmp.eq.s32.totalorder %v4181, %v4146
          %vm4232 = vcmp.eq.s32.totalorder %v4184, %v4146
          %vm4233 = vcmp.eq.s32.totalorder %v4187, %v4146
          %vm4234 = vcmp.eq.s32.totalorder %v4190, %v4146
          %vm4235 = vcmp.eq.s32.totalorder %v4193, %v4146
          %vm4236 = vcmp.eq.s32.totalorder %v4196, %v4146
          %vm4237 = vcmp.eq.s32.totalorder %v4199, %v4146
          %vm4238 = vcmp.eq.s32.totalorder %v4202, %v4146
          %vm4239 = vcmp.eq.s32.totalorder %v4205, %v4146
          %vm4240 = vcmp.eq.s32.totalorder %v4208, %v4146
          %vm4241 = vcmp.eq.s32.totalorder %v4211, %v4146
          %vm4242 = vcmp.eq.s32.totalorder %v4214, %v4146
          %vm4243 = vcmp.eq.s32.totalorder %v4217, %v4146
          %vm4244 = vcmp.eq.s32.totalorder %v4220, %v4146
          %vm4245 = vcmp.eq.s32.totalorder %v4223, %v4146
          %vm4246 = vcmp.eq.s32.totalorder %v4226, %v4146
          %v4247 = vsel %vm4227, 1, 0
          %v4248 = vsel %vm4228, 1, 0
          %v4249 = vsel %vm4229, 1, 0
          %v4250 = vsel %vm4230, 1, 0
          %v4251 = vsel %vm4231, 1, 0
          %v4252 = vsel %vm4232, 1, 0
          %v4253 = vsel %vm4233, 1, 0
          %v4254 = vsel %vm4234, 1, 0
          %v4255 = vsel %vm4235, 1, 0
          %v4256 = vsel %vm4236, 1, 0
          %v4257 = vsel %vm4237, 1, 0
          %v4258 = vsel %vm4238, 1, 0
          %v4259 = vsel %vm4239, 1, 0
          %v4260 = vsel %vm4240, 1, 0
          %v4261 = vsel %vm4241, 1, 0
          %v4262 = vsel %vm4242, 1, 0
          %v4263 = vsel %vm4243, 1, 0
          %v4264 = vsel %vm4244, 1, 0
          %v4265 = vsel %vm4245, 1, 0
          %v4266 = vsel %vm4246, 1, 0
          %v4267 = vcvt.s32.f32 %v4247
          %v4268 = vcvt.s32.f32 %v4248
          %v4269 = vcvt.s32.f32 %v4249
          %v4270 = vcvt.s32.f32 %v4250
          %v4271 = vcvt.s32.f32 %v4251
          %v4272 = vcvt.s32.f32 %v4252
          %v4273 = vcvt.s32.f32 %v4253
          %v4274 = vcvt.s32.f32 %v4254
          %v4275 = vcvt.s32.f32 %v4255
          %v4276 = vcvt.s32.f32 %v4256
          %v4277 = vcvt.s32.f32 %v4257
          %v4278 = vcvt.s32.f32 %v4258
          %v4279 = vcvt.s32.f32 %v4259
          %v4280 = vcvt.s32.f32 %v4260
          %v4281 = vcvt.s32.f32 %v4261
          %v4282 = vcvt.s32.f32 %v4262
          %v4283 = vcvt.s32.f32 %v4263
          %v4284 = vcvt.s32.f32 %v4264
          %v4285 = vcvt.s32.f32 %v4265
          %v4286 = vcvt.s32.f32 %v4266
          %v4287 = vpack.c.bf16 %v4268, %v4267
          %v4288 = vpack.c.bf16 %v4270, %v4269
          %v4289 = vpack.c.bf16 %v4272, %v4271
          %v4290 = vpack.c.bf16 %v4274, %v4273
          %v4291 = vpack.c.bf16 %v4276, %v4275
          %v4292 = vpack.c.bf16 %v4278, %v4277
          %v4293 = vpack.c.bf16 %v4280, %v4279
          %v4294 = vpack.c.bf16 %v4282, %v4281
          %v4295 = vpack.c.bf16 %v4284, %v4283
          %v4296 = vpack.c.bf16 %v4286, %v4285
          %v4297 = vld [vmem:[#allocation13] sm:$0xff]
          %v4298 = vld [vmem:[#allocation13 + $0x8] sm:$0xff]
          %v4299 = vld [vmem:[#allocation13 + $0x10] sm:$0xff]
          %v4300 = vld [vmem:[#allocation13 + $0x18] sm:$0xff]
          %v4301 = vld [vmem:[#allocation13 + $0x20] sm:$0xff]
          %v4302 = vld [vmem:[#allocation13 + $0x28] sm:$0xff]
          %v4309 = vunpack.c.l.b16 %v4297
          %v4310 = vunpack.c.h.b16 %v4297
          %v4311 = vunpack.c.l.b16 %v4298
          %v4312 = vunpack.c.h.b16 %v4298
          %v4313 = vunpack.c.l.b16 %v4299
          %v4314 = vunpack.c.h.b16 %v4299
          %v4315 = vunpack.c.l.b16 %v4300
          %v4316 = vunpack.c.h.b16 %v4300
          %v4317 = vunpack.c.l.b16 %v4301
          %v4318 = vunpack.c.h.b16 %v4301
          %v4319 = vunpack.c.l.b16 %v4302
          %v4320 = vunpack.c.h.b16 %v4302
          %v4321 = vpack.c.b16 %v4315, %v4309
          %v4322 = vpack.c.b16 %v4316, %v4310
          %v4323 = vpack.c.b16 %v4317, %v4311
          %v4324 = vpack.c.b16 %v4318, %v4312
          %v4325 = vpack.c.b16 %v4319, %v4313
          %v4326 = vpack.c.b16 %v4320, %v4314
          %vm4333 = vcmask 130048
          %v4335 = vsel %vm4333, %v4287, 0
          %v4338 = vsel %vm4333, %v4288, 0
          %v4341 = vsel %vm4333, %v4289, 0
          %v4344 = vsel %vm4333, %v4290, 0
          %v4347 = vsel %vm4333, %v4291, 0
          %v4350 = vsel %vm4333, %v4292, 0
          %v4353 = vsel %vm4333, %v4293, 0
          %v4356 = vsel %vm4333, %v4294, 0
          %v4359 = vsel %vm4333, %v4295, 0
          %v4362 = vsel %vm4333, %v4296, 0
          %4364 = vmatprep.subr.bf16.mxu0 %v4322
          %4365 = vmatpush1.bf16.msra.mxu0 %v4321
          %4366 = vmatprep.subr.bf16.mxu0 0
          %4367 = vmatpush1.bf16.msra.mxu0 0
          %4368 = vmatprep.subr.bf16.mxu0 0
          %4369 = vmatpush1.bf16.msra.mxu0 0
          %4370 = vmatprep.subr.bf16.mxu0 0
          %4371 = vmatpush1.bf16.msra.mxu0 0
          %4372 = vmatprep.subr.bf16.mxu0 0
          %4373 = vmatpush1.bf16.msra.mxu0 0
          %4374 = vmatprep.subr.bf16.mxu0 0
          %4375 = vmatpush1.bf16.msra.mxu0 0
          %4376 = vmatprep.subr.bf16.mxu0 0
          %4377 = vmatpush1.bf16.msra.mxu0 0
          %4378 = vmatprep.subr.bf16.mxu0 0
          %4379 = vmatpush1.bf16.msra.mxu0 0
          %4380 = vmatprep.subr.bf16.mxu0 0
          %4381 = vmatpush1.bf16.msra.mxu0 0
          %4382 = vmatprep.subr.bf16.mxu0 0
          %4383 = vmatpush1.bf16.msra.mxu0 0
          %4384 = vmatprep.subr.bf16.mxu0 0
          %4385 = vmatpush1.bf16.msra.mxu0 0
          %4386 = vmatprep.subr.bf16.mxu0 0
          %4387 = vmatpush1.bf16.msra.mxu0 0
          %4388 = vmatprep.subr.bf16.mxu0 0
          %4389 = vmatpush1.bf16.msra.mxu0 0
          %4390 = vmatprep.subr.bf16.mxu0 0
          %4391 = vmatpush1.bf16.msra.mxu0 0
          %4392 = vmatprep.subr.bf16.mxu0 0
          %4393 = vmatpush1.bf16.msra.mxu0 0
          %4394 = vmatprep.subr.bf16.mxu0 0
          %4395 = vmatpush1.bf16.msra.mxu0 0
          %4396 = vmatprep.mubr.bf16.mxu0 0
          %4397 = vmatmul.mubr.bf16.gmra.mrb[0].mxu0 %v4335
          %v4398 = vpop.f32.mrb[0].mxu0
          %v4399 = vadd.f32 0.0, %v4398
          %v4400 = vpop.f32.mrb[0].mxu0
          %v4401 = vadd.f32 0.0, %v4400
          %v4402 = vpop.f32.mrb[0].mxu0
          %v4403 = vadd.f32 0.0, %v4402
          %v4404 = vpop.f32.mrb[0].mxu0
          %v4405 = vadd.f32 0.0, %v4404
          %4406 = vmatprep.mubr.bf16.mxu0 0
          %4407 = vmatmul.mubr.bf16.gmra.mrb[0].mxu0 %v4338
          %v4408 = vpop.f32.mrb[0].mxu0
          %v4409 = vadd.f32 0.0, %v4408
          %v4410 = vpop.f32.mrb[0].mxu0
          %v4411 = vadd.f32 0.0, %v4410
          %v4412 = vpop.f32.mrb[0].mxu0
          %v4413 = vadd.f32 0.0, %v4412
          %v4414 = vpop.f32.mrb[0].mxu0
          %v4415 = vadd.f32 0.0, %v4414
          %4416 = vmatprep.mubr.bf16.mxu0 0
          %4417 = vmatmul.mubr.bf16.gmra.mrb[0].mxu0 %v4341
          %v4418 = vpop.f32.mrb[0].mxu0
          %v4419 = vadd.f32 0.0, %v4418
          %v4420 = vpop.f32.mrb[0].mxu0
          %v4421 = vadd.f32 0.0, %v4420
          %v4422 = vpop.f32.mrb[0].mxu0
          %v4423 = vadd.f32 0.0, %v4422
          %v4424 = vpop.f32.mrb[0].mxu0
          %v4425 = vadd.f32 0.0, %v4424
          %4426 = vmatprep.mubr.bf16.mxu0 0
          %4427 = vmatmul.mubr.bf16.gmra.mrb[0].mxu0 %v4344
          %v4428 = vpop.f32.mrb[0].mxu0
          %v4429 = vadd.f32 0.0, %v4428
          %v4430 = vpop.f32.mrb[0].mxu0
          %v4431 = vadd.f32 0.0, %v4430
          %v4432 = vpop.f32.mrb[0].mxu0
          %v4433 = vadd.f32 0.0, %v4432
          %v4434 = vpop.f32.mrb[0].mxu0
          %v4435 = vadd.f32 0.0, %v4434
          %4436 = vmatprep.mubr.bf16.mxu0 0
          %4437 = vmatmul.mubr.bf16.gmra.mrb[0].mxu0 %v4347
          %v4438 = vpop.f32.mrb[0].mxu0
          %v4439 = vadd.f32 0.0, %v4438
          %v4440 = vpop.f32.mrb[0].mxu0
          %v4441 = vadd.f32 0.0, %v4440
          %v4442 = vpop.f32.mrb[0].mxu0
          %v4443 = vadd.f32 0.0, %v4442
          %v4444 = vpop.f32.mrb[0].mxu0
          %v4445 = vadd.f32 0.0, %v4444
          %4446 = vmatprep.mubr.bf16.mxu0 0
          %4447 = vmatmul.mubr.bf16.gmra.mrb[0].mxu0 %v4350
          %v4448 = vpop.f32.mrb[0].mxu0
          %v4449 = vadd.f32 0.0, %v4448
          %v4450 = vpop.f32.mrb[0].mxu0
          %v4451 = vadd.f32 0.0, %v4450
          %v4452 = vpop.f32.mrb[0].mxu0
          %v4453 = vadd.f32 0.0, %v4452
          %v4454 = vpop.f32.mrb[0].mxu0
          %v4455 = vadd.f32 0.0, %v4454
          %4456 = vmatprep.mubr.bf16.mxu0 0
          %4457 = vmatmul.mubr.bf16.gmra.mrb[0].mxu0 %v4353
          %v4458 = vpop.f32.mrb[0].mxu0
          %v4459 = vadd.f32 0.0, %v4458
          %v4460 = vpop.f32.mrb[0].mxu0
          %v4461 = vadd.f32 0.0, %v4460
          %v4462 = vpop.f32.mrb[0].mxu0
          %v4463 = vadd.f32 0.0, %v4462
          %v4464 = vpop.f32.mrb[0].mxu0
          %v4465 = vadd.f32 0.0, %v4464
          %4466 = vmatprep.mubr.bf16.mxu0 0
          %4467 = vmatmul.mubr.bf16.gmra.mrb[0].mxu0 %v4356
          %v4468 = vpop.f32.mrb[0].mxu0
          %v4469 = vadd.f32 0.0, %v4468
          %v4470 = vpop.f32.mrb[0].mxu0
          %v4471 = vadd.f32 0.0, %v4470
          %v4472 = vpop.f32.mrb[0].mxu0
          %v4473 = vadd.f32 0.0, %v4472
          %v4474 = vpop.f32.mrb[0].mxu0
          %v4475 = vadd.f32 0.0, %v4474
          %4476 = vmatprep.mubr.bf16.mxu0 0
          %4477 = vmatmul.mubr.bf16.gmra.mrb[0].mxu0 %v4359
          %v4478 = vpop.f32.mrb[0].mxu0
          %v4479 = vadd.f32 0.0, %v4478
          %v4480 = vpop.f32.mrb[0].mxu0
          %v4481 = vadd.f32 0.0, %v4480
          %v4482 = vpop.f32.mrb[0].mxu0
          %v4483 = vadd.f32 0.0, %v4482
          %v4484 = vpop.f32.mrb[0].mxu0
          %v4485 = vadd.f32 0.0, %v4484
          %4486 = vmatprep.mubr.bf16.mxu0 0
          %4487 = vmatmul.mubr.bf16.gmra.mrb[0].mxu0 %v4362
          %v4488 = vpop.f32.mrb[0].mxu0
          %v4489 = vadd.f32 0.0, %v4488
          %v4490 = vpop.f32.mrb[0].mxu0
          %v4491 = vadd.f32 0.0, %v4490
          %v4492 = vpop.f32.mrb[0].mxu0
          %v4493 = vadd.f32 0.0, %v4492
          %v4494 = vpop.f32.mrb[0].mxu0
          %v4495 = vadd.f32 0.0, %v4494
          %4496 = vdwg.mxu0
          %4497 = vmatprep.subr.bf16.mxu0 %v4324
          %4498 = vmatpush1.bf16.msra.mxu0 %v4323
          %4499 = vmatprep.subr.bf16.mxu0 0
          %4500 = vmatpush1.bf16.msra.mxu0 0
          %4501 = vmatprep.subr.bf16.mxu0 0
          %4502 = vmatpush1.bf16.msra.mxu0 0
          %4503 = vmatprep.subr.bf16.mxu0 0
          %4504 = vmatpush1.bf16.msra.mxu0 0
          %4505 = vmatprep.subr.bf16.mxu0 0
          %4506 = vmatpush1.bf16.msra.mxu0 0
          %4507 = vmatprep.subr.bf16.mxu0 0
          %4508 = vmatpush1.bf16.msra.mxu0 0
          %4509 = vmatprep.subr.bf16.mxu0 0
          %4510 = vmatpush1.bf16.msra.mxu0 0
          %4511 = vmatprep.subr.bf16.mxu0 0
          %4512 = vmatpush1.bf16.msra.mxu0 0
          %4513 = vmatprep.subr.bf16.mxu0 0
          %4514 = vmatpush1.bf16.msra.mxu0 0
          %4515 = vmatprep.subr.bf16.mxu0 0
          %4516 = vmatpush1.bf16.msra.mxu0 0
          %4517 = vmatprep.subr.bf16.mxu0 0
          %4518 = vmatpush1.bf16.msra.mxu0 0
          %4519 = vmatprep.subr.bf16.mxu0 0
          %4520 = vmatpush1.bf16.msra.mxu0 0
          %4521 = vmatprep.subr.bf16.mxu0 0
          %4522 = vmatpush1.bf16.msra.mxu0 0
          %4523 = vmatprep.subr.bf16.mxu0 0
          %4524 = vmatpush1.bf16.msra.mxu0 0
          %4525 = vmatprep.subr.bf16.mxu0 0
          %4526 = vmatpush1.bf16.msra.mxu0 0
          %4527 = vmatprep.subr.bf16.mxu0 0
          %4528 = vmatpush1.bf16.msra.mxu0 0
          %4529 = vmatprep.mubr.bf16.mxu0 0
          %4530 = vmatmul.mubr.bf16.gmra.mrb[0].mxu0 %v4335
          %v4531 = vpop.f32.mrb[0].mxu0
          %v4532 = vadd.f32 0.0, %v4531
          %v4533 = vpop.f32.mrb[0].mxu0
          %v4534 = vadd.f32 0.0, %v4533
          %v4535 = vpop.f32.mrb[0].mxu0
          %v4536 = vadd.f32 0.0, %v4535
          %v4537 = vpop.f32.mrb[0].mxu0
          %v4538 = vadd.f32 0.0, %v4537
          %4539 = vmatprep.mubr.bf16.mxu0 0
          %4540 = vmatmul.mubr.bf16.gmra.mrb[0].mxu0 %v4338
          %v4541 = vpop.f32.mrb[0].mxu0
          %v4542 = vadd.f32 0.0, %v4541
          %v4543 = vpop.f32.mrb[0].mxu0
          %v4544 = vadd.f32 0.0, %v4543
          %v4545 = vpop.f32.mrb[0].mxu0
          %v4546 = vadd.f32 0.0, %v4545
          %v4547 = vpop.f32.mrb[0].mxu0
          %v4548 = vadd.f32 0.0, %v4547
          %4549 = vmatprep.mubr.bf16.mxu0 0
          %4550 = vmatmul.mubr.bf16.gmra.mrb[0].mxu0 %v4341
          %v4551 = vpop.f32.mrb[0].mxu0
          %v4552 = vadd.f32 0.0, %v4551
          %v4553 = vpop.f32.mrb[0].mxu0
          %v4554 = vadd.f32 0.0, %v4553
          %v4555 = vpop.f32.mrb[0].mxu0
          %v4556 = vadd.f32 0.0, %v4555
          %v4557 = vpop.f32.mrb[0].mxu0
          %v4558 = vadd.f32 0.0, %v4557
          %4559 = vmatprep.mubr.bf16.mxu0 0
          %4560 = vmatmul.mubr.bf16.gmra.mrb[0].mxu0 %v4344
          %v4561 = vpop.f32.mrb[0].mxu0
          %v4562 = vadd.f32 0.0, %v4561
          %v4563 = vpop.f32.mrb[0].mxu0
          %v4564 = vadd.f32 0.0, %v4563
          %v4565 = vpop.f32.mrb[0].mxu0
          %v4566 = vadd.f32 0.0, %v4565
          %v4567 = vpop.f32.mrb[0].mxu0
          %v4568 = vadd.f32 0.0, %v4567
          %4569 = vmatprep.mubr.bf16.mxu0 0
          %4570 = vmatmul.mubr.bf16.gmra.mrb[0].mxu0 %v4347
          %v4571 = vpop.f32.mrb[0].mxu0
          %v4572 = vadd.f32 0.0, %v4571
          %v4573 = vpop.f32.mrb[0].mxu0
          %v4574 = vadd.f32 0.0, %v4573
          %v4575 = vpop.f32.mrb[0].mxu0
          %v4576 = vadd.f32 0.0, %v4575
          %v4577 = vpop.f32.mrb[0].mxu0
          %v4578 = vadd.f32 0.0, %v4577
          %4579 = vmatprep.mubr.bf16.mxu0 0
          %4580 = vmatmul.mubr.bf16.gmra.mrb[0].mxu0 %v4350
          %v4581 = vpop.f32.mrb[0].mxu0
          %v4582 = vadd.f32 0.0, %v4581
          %v4583 = vpop.f32.mrb[0].mxu0
          %v4584 = vadd.f32 0.0, %v4583
          %v4585 = vpop.f32.mrb[0].mxu0
          %v4586 = vadd.f32 0.0, %v4585
          %v4587 = vpop.f32.mrb[0].mxu0
          %v4588 = vadd.f32 0.0, %v4587
          %4589 = vmatprep.mubr.bf16.mxu0 0
          %4590 = vmatmul.mubr.bf16.gmra.mrb[0].mxu0 %v4353
          %v4591 = vpop.f32.mrb[0].mxu0
          %v4592 = vadd.f32 0.0, %v4591
          %v4593 = vpop.f32.mrb[0].mxu0
          %v4594 = vadd.f32 0.0, %v4593
          %v4595 = vpop.f32.mrb[0].mxu0
          %v4596 = vadd.f32 0.0, %v4595
          %v4597 = vpop.f32.mrb[0].mxu0
          %v4598 = vadd.f32 0.0, %v4597
          %4599 = vmatprep.mubr.bf16.mxu0 0
          %4600 = vmatmul.mubr.bf16.gmra.mrb[0].mxu0 %v4356
          %v4601 = vpop.f32.mrb[0].mxu0
          %v4602 = vadd.f32 0.0, %v4601
          %v4603 = vpop.f32.mrb[0].mxu0
          %v4604 = vadd.f32 0.0, %v4603
          %v4605 = vpop.f32.mrb[0].mxu0
          %v4606 = vadd.f32 0.0, %v4605
          %v4607 = vpop.f32.mrb[0].mxu0
          %v4608 = vadd.f32 0.0, %v4607
          %4609 = vmatprep.mubr.bf16.mxu0 0
          %4610 = vmatmul.mubr.bf16.gmra.mrb[0].mxu0 %v4359
          %v4611 = vpop.f32.mrb[0].mxu0
          %v4612 = vadd.f32 0.0, %v4611
          %v4613 = vpop.f32.mrb[0].mxu0
          %v4614 = vadd.f32 0.0, %v4613
          %v4615 = vpop.f32.mrb[0].mxu0
          %v4616 = vadd.f32 0.0, %v4615
          %v4617 = vpop.f32.mrb[0].mxu0
          %v4618 = vadd.f32 0.0, %v4617
          %4619 = vmatprep.mubr.bf16.mxu0 0
          %4620 = vmatmul.mubr.bf16.gmra.mrb[0].mxu0 %v4362
          %v4621 = vpop.f32.mrb[0].mxu0
          %v4622 = vadd.f32 0.0, %v4621
          %v4623 = vpop.f32.mrb[0].mxu0
          %v4624 = vadd.f32 0.0, %v4623
          %v4625 = vpop.f32.mrb[0].mxu0
          %v4626 = vadd.f32 0.0, %v4625
          %v4627 = vpop.f32.mrb[0].mxu0
          %v4628 = vadd.f32 0.0, %v4627
          %4629 = vdwg.mxu0
          %4630 = vmatprep.subr.bf16.mxu0 %v4326
          %4631 = vmatpush1.bf16.msra.mxu0 %v4325
          %4632 = vmatprep.subr.bf16.mxu0 0
          %4633 = vmatpush1.bf16.msra.mxu0 0
          %4634 = vmatprep.subr.bf16.mxu0 0
          %4635 = vmatpush1.bf16.msra.mxu0 0
          %4636 = vmatprep.subr.bf16.mxu0 0
          %4637 = vmatpush1.bf16.msra.mxu0 0
          %4638 = vmatprep.subr.bf16.mxu0 0
          %4639 = vmatpush1.bf16.msra.mxu0 0
          %4640 = vmatprep.subr.bf16.mxu0 0
          %4641 = vmatpush1.bf16.msra.mxu0 0
          %4642 = vmatprep.subr.bf16.mxu0 0
          %4643 = vmatpush1.bf16.msra.mxu0 0
          %4644 = vmatprep.subr.bf16.mxu0 0
          %4645 = vmatpush1.bf16.msra.mxu0 0
          %4646 = vmatprep.subr.bf16.mxu0 0
          %4647 = vmatpush1.bf16.msra.mxu0 0
          %4648 = vmatprep.subr.bf16.mxu0 0
          %4649 = vmatpush1.bf16.msra.mxu0 0
          %4650 = vmatprep.subr.bf16.mxu0 0
          %4651 = vmatpush1.bf16.msra.mxu0 0
          %4652 = vmatprep.subr.bf16.mxu0 0
          %4653 = vmatpush1.bf16.msra.mxu0 0
          %4654 = vmatprep.subr.bf16.mxu0 0
          %4655 = vmatpush1.bf16.msra.mxu0 0
          %4656 = vmatprep.subr.bf16.mxu0 0
          %4657 = vmatpush1.bf16.msra.mxu0 0
          %4658 = vmatprep.subr.bf16.mxu0 0
          %4659 = vmatpush1.bf16.msra.mxu0 0
          %4660 = vmatprep.subr.bf16.mxu0 0
          %4661 = vmatpush1.bf16.msra.mxu0 0
          %4662 = vmatprep.mubr.bf16.mxu0 0
          %4663 = vmatmul.mubr.bf16.gmra.mrb[0].mxu0 %v4335
          %v4664 = vpop.f32.mrb[0].mxu0
          %v4665 = vadd.f32 0.0, %v4664
          %v4666 = vpop.f32.mrb[0].mxu0
          %v4667 = vadd.f32 0.0, %v4666
          %v4668 = vpop.f32.mrb[0].mxu0
          %v4669 = vadd.f32 0.0, %v4668
          %v4670 = vpop.f32.mrb[0].mxu0
          %v4671 = vadd.f32 0.0, %v4670
          %4672 = vmatprep.mubr.bf16.mxu0 0
          %4673 = vmatmul.mubr.bf16.gmra.mrb[0].mxu0 %v4338
          %v4674 = vpop.f32.mrb[0].mxu0
          %v4675 = vadd.f32 0.0, %v4674
          %v4676 = vpop.f32.mrb[0].mxu0
          %v4677 = vadd.f32 0.0, %v4676
          %v4678 = vpop.f32.mrb[0].mxu0
          %v4679 = vadd.f32 0.0, %v4678
          %v4680 = vpop.f32.mrb[0].mxu0
          %v4681 = vadd.f32 0.0, %v4680
          %4682 = vmatprep.mubr.bf16.mxu0 0
          %4683 = vmatmul.mubr.bf16.gmra.mrb[0].mxu0 %v4341
          %v4684 = vpop.f32.mrb[0].mxu0
          %v4685 = vadd.f32 0.0, %v4684
          %v4686 = vpop.f32.mrb[0].mxu0
          %v4687 = vadd.f32 0.0, %v4686
          %v4688 = vpop.f32.mrb[0].mxu0
          %v4689 = vadd.f32 0.0, %v4688
          %v4690 = vpop.f32.mrb[0].mxu0
          %v4691 = vadd.f32 0.0, %v4690
          %4692 = vmatprep.mubr.bf16.mxu0 0
          %4693 = vmatmul.mubr.bf16.gmra.mrb[0].mxu0 %v4344
          %v4694 = vpop.f32.mrb[0].mxu0
          %v4695 = vadd.f32 0.0, %v4694
          %v4696 = vpop.f32.mrb[0].mxu0
          %v4697 = vadd.f32 0.0, %v4696
          %v4698 = vpop.f32.mrb[0].mxu0
          %v4699 = vadd.f32 0.0, %v4698
          %v4700 = vpop.f32.mrb[0].mxu0
          %v4701 = vadd.f32 0.0, %v4700
          %4702 = vmatprep.mubr.bf16.mxu0 0
          %4703 = vmatmul.mubr.bf16.gmra.mrb[0].mxu0 %v4347
          %v4704 = vpop.f32.mrb[0].mxu0
          %v4705 = vadd.f32 0.0, %v4704
          %v4706 = vpop.f32.mrb[0].mxu0
          %v4707 = vadd.f32 0.0, %v4706
          %v4708 = vpop.f32.mrb[0].mxu0
          %v4709 = vadd.f32 0.0, %v4708
          %v4710 = vpop.f32.mrb[0].mxu0
          %v4711 = vadd.f32 0.0, %v4710
          %4712 = vmatprep.mubr.bf16.mxu0 0
          %4713 = vmatmul.mubr.bf16.gmra.mrb[0].mxu0 %v4350
          %v4714 = vpop.f32.mrb[0].mxu0
          %v4715 = vadd.f32 0.0, %v4714
          %v4716 = vpop.f32.mrb[0].mxu0
          %v4717 = vadd.f32 0.0, %v4716
          %v4718 = vpop.f32.mrb[0].mxu0
          %v4719 = vadd.f32 0.0, %v4718
          %v4720 = vpop.f32.mrb[0].mxu0
          %v4721 = vadd.f32 0.0, %v4720
          %4722 = vmatprep.mubr.bf16.mxu0 0
          %4723 = vmatmul.mubr.bf16.gmra.mrb[0].mxu0 %v4353
          %v4724 = vpop.f32.mrb[0].mxu0
          %v4725 = vadd.f32 0.0, %v4724
          %v4726 = vpop.f32.mrb[0].mxu0
          %v4727 = vadd.f32 0.0, %v4726
          %v4728 = vpop.f32.mrb[0].mxu0
          %v4729 = vadd.f32 0.0, %v4728
          %v4730 = vpop.f32.mrb[0].mxu0
          %v4731 = vadd.f32 0.0, %v4730
          %4732 = vmatprep.mubr.bf16.mxu0 0
          %4733 = vmatmul.mubr.bf16.gmra.mrb[0].mxu0 %v4356
          %v4734 = vpop.f32.mrb[0].mxu0
          %v4735 = vadd.f32 0.0, %v4734
          %v4736 = vpop.f32.mrb[0].mxu0
          %v4737 = vadd.f32 0.0, %v4736
          %v4738 = vpop.f32.mrb[0].mxu0
          %v4739 = vadd.f32 0.0, %v4738
          %v4740 = vpop.f32.mrb[0].mxu0
          %v4741 = vadd.f32 0.0, %v4740
          %4742 = vmatprep.mubr.bf16.mxu0 0
          %4743 = vmatmul.mubr.bf16.gmra.mrb[0].mxu0 %v4359
          %v4744 = vpop.f32.mrb[0].mxu0
          %v4745 = vadd.f32 0.0, %v4744
          %v4746 = vpop.f32.mrb[0].mxu0
          %v4747 = vadd.f32 0.0, %v4746
          %v4748 = vpop.f32.mrb[0].mxu0
          %v4749 = vadd.f32 0.0, %v4748
          %v4750 = vpop.f32.mrb[0].mxu0
          %v4751 = vadd.f32 0.0, %v4750
          %4752 = vmatprep.mubr.bf16.mxu0 0
          %4753 = vmatmul.mubr.bf16.gmra.mrb[0].mxu0 %v4362
          %v4754 = vpop.f32.mrb[0].mxu0
          %v4755 = vadd.f32 0.0, %v4754
          %v4756 = vpop.f32.mrb[0].mxu0
          %v4757 = vadd.f32 0.0, %v4756
          %v4758 = vpop.f32.mrb[0].mxu0
          %v4759 = vadd.f32 0.0, %v4758
          %v4760 = vpop.f32.mrb[0].mxu0
          %v4761 = vadd.f32 0.0, %v4760
          %4762 = vdwg.mxu0
          %v4763 = vld [vmem:[%s7] sm:$0xff]
          %v4764 = vld [vmem:[%s7 + $0x8] sm:$0xff]
          %v4765 = vld [vmem:[%s7 + $0x10] sm:$0xff]
          %v4766 = vld [vmem:[%s7 + $0x18] sm:$0xff]
          %v4767 = vld [vmem:[%s7 + $0x20] sm:$0xff]
          %v4768 = vld [vmem:[%s7 + $0x28] sm:$0xff]
          %v4769 = vld [vmem:[%s7 + $0x30] sm:$0xff]
          %v4770 = vld [vmem:[%s7 + $0x38] sm:$0xff]
          %v4771 = vld [vmem:[%s7 + $0x40] sm:$0xff]
          %v4772 = vld [vmem:[%s7 + $0x48] sm:$0xff]
          %v4773 = vld [vmem:[%s7 + $0x50] sm:$0xff]
          %v4774 = vld [vmem:[%s7 + $0x58] sm:$0xff]
          %v4775 = vld [vmem:[%s7 + $0x60] sm:$0xff]
          %v4776 = vld [vmem:[%s7 + $0x68] sm:$0xff]
          %v4777 = vld [vmem:[%s7 + $0x70] sm:$0xff]
          %v4778 = vld [vmem:[%s7 + $0x78] sm:$0xff]
          %v4779 = vld [vmem:[%s7 + $0x80] sm:$0xff]
          %v4780 = vld [vmem:[%s7 + $0x88] sm:$0xff]
          %v4781 = vld [vmem:[%s7 + $0x90] sm:$0xff]
          %v4782 = vld [vmem:[%s7 + $0x98] sm:$0x3]
          %vm4783 = vcmp.eq.s32.totalorder %v4763, 0
          %vm4784 = vcmp.eq.s32.totalorder %v4764, 0
          %vm4785 = vcmp.eq.s32.totalorder %v4765, 0
          %vm4786 = vcmp.eq.s32.totalorder %v4766, 0
          %vm4787 = vcmp.eq.s32.totalorder %v4767, 0
          %vm4788 = vcmp.eq.s32.totalorder %v4768, 0
          %vm4789 = vcmp.eq.s32.totalorder %v4769, 0
          %vm4790 = vcmp.eq.s32.totalorder %v4770, 0
          %vm4791 = vcmp.eq.s32.totalorder %v4771, 0
          %vm4792 = vcmp.eq.s32.totalorder %v4772, 0
          %vm4793 = vcmp.eq.s32.totalorder %v4773, 0
          %vm4794 = vcmp.eq.s32.totalorder %v4774, 0
          %vm4795 = vcmp.eq.s32.totalorder %v4775, 0
          %vm4796 = vcmp.eq.s32.totalorder %v4776, 0
          %vm4797 = vcmp.eq.s32.totalorder %v4777, 0
          %vm4798 = vcmp.eq.s32.totalorder %v4778, 0
          %vm4799 = vcmp.eq.s32.totalorder %v4779, 0
          %vm4800 = vcmp.eq.s32.totalorder %v4780, 0
          %vm4801 = vcmp.eq.s32.totalorder %v4781, 0
          %vm4802 = vcmp.eq.s32.totalorder %v4782, 0
          %v4803 = vsel %vm4783, 1, 0
          %v4804 = vsel %vm4784, 1, 0
          %v4805 = vsel %vm4785, 1, 0
          %v4806 = vsel %vm4786, 1, 0
          %v4807 = vsel %vm4787, 1, 0
          %v4808 = vsel %vm4788, 1, 0
          %v4809 = vsel %vm4789, 1, 0
          %v4810 = vsel %vm4790, 1, 0
          %v4811 = vsel %vm4791, 1, 0
          %v4812 = vsel %vm4792, 1, 0
          %v4813 = vsel %vm4793, 1, 0
          %v4814 = vsel %vm4794, 1, 0
          %v4815 = vsel %vm4795, 1, 0
          %v4816 = vsel %vm4796, 1, 0
          %v4817 = vsel %vm4797, 1, 0
          %v4818 = vsel %vm4798, 1, 0
          %v4819 = vsel %vm4799, 1, 0
          %v4820 = vsel %vm4800, 1, 0
          %v4821 = vsel %vm4801, 1, 0
          %v4822 = vsel %vm4802, 1, 0
          %4823 = vset.pattern.permute.xlu0 0
          %4824 = vperm.xlu0 %4823, %v4803
          %v4825 = vpop.permute.xlu0 %4824
          %4826 = vset.pattern.permute.xlu0 0
          %4827 = vperm.xlu0 %4826, %v4804
          %v4828 = vpop.permute.xlu0 %4827
          %4829 = vset.pattern.permute.xlu0 0
          %4830 = vperm.xlu0 %4829, %v4805
          %v4831 = vpop.permute.xlu0 %4830
          %4832 = vset.pattern.permute.xlu0 0
          %4833 = vperm.xlu0 %4832, %v4806
          %v4834 = vpop.permute.xlu0 %4833
          %4835 = vset.pattern.permute.xlu0 0
          %4836 = vperm.xlu0 %4835, %v4807
          %v4837 = vpop.permute.xlu0 %4836
          %4838 = vset.pattern.permute.xlu0 0
          %4839 = vperm.xlu0 %4838, %v4808
          %v4840 = vpop.permute.xlu0 %4839
          %4841 = vset.pattern.permute.xlu0 0
          %4842 = vperm.xlu0 %4841, %v4809
          %v4843 = vpop.permute.xlu0 %4842
          %4844 = vset.pattern.permute.xlu0 0
          %4845 = vperm.xlu0 %4844, %v4810
          %v4846 = vpop.permute.xlu0 %4845
          %4847 = vset.pattern.permute.xlu0 0
          %4848 = vperm.xlu0 %4847, %v4811
          %v4849 = vpop.permute.xlu0 %4848
          %4850 = vset.pattern.permute.xlu0 0
          %4851 = vperm.xlu0 %4850, %v4812
          %v4852 = vpop.permute.xlu0 %4851
          %4853 = vset.pattern.permute.xlu0 0
          %4854 = vperm.xlu0 %4853, %v4813
          %v4855 = vpop.permute.xlu0 %4854
          %4856 = vset.pattern.permute.xlu0 0
          %4857 = vperm.xlu0 %4856, %v4814
          %v4858 = vpop.permute.xlu0 %4857
          %4859 = vset.pattern.permute.xlu0 0
          %4860 = vperm.xlu0 %4859, %v4815
          %v4861 = vpop.permute.xlu0 %4860
          %4862 = vset.pattern.permute.xlu0 0
          %4863 = vperm.xlu0 %4862, %v4816
          %v4864 = vpop.permute.xlu0 %4863
          %4865 = vset.pattern.permute.xlu0 0
          %4866 = vperm.xlu0 %4865, %v4817
          %v4867 = vpop.permute.xlu0 %4866
          %4868 = vset.pattern.permute.xlu0 0
          %4869 = vperm.xlu0 %4868, %v4818
          %v4870 = vpop.permute.xlu0 %4869
          %4871 = vset.pattern.permute.xlu0 0
          %4872 = vperm.xlu0 %4871, %v4819
          %v4873 = vpop.permute.xlu0 %4872
          %4874 = vset.pattern.permute.xlu0 0
          %4875 = vperm.xlu0 %4874, %v4820
          %v4876 = vpop.permute.xlu0 %4875
          %4877 = vset.pattern.permute.xlu0 0
          %4878 = vperm.xlu0 %4877, %v4821
          %v4879 = vpop.permute.xlu0 %4878
          %4880 = vset.pattern.permute.xlu0 0
          %4881 = vperm.xlu0 %4880, %v4822
          %v4882 = vpop.permute.xlu0 %4881
          %vm4883 = vcmp.eq.s32.totalorder %v4825, 1
          %vm4884 = vcmp.eq.s32.totalorder %v4828, 1
          %vm4885 = vcmp.eq.s32.totalorder %v4831, 1
          %vm4886 = vcmp.eq.s32.totalorder %v4834, 1
          %vm4887 = vcmp.eq.s32.totalorder %v4837, 1
          %vm4888 = vcmp.eq.s32.totalorder %v4840, 1
          %vm4889 = vcmp.eq.s32.totalorder %v4843, 1
          %vm4890 = vcmp.eq.s32.totalorder %v4846, 1
          %vm4891 = vcmp.eq.s32.totalorder %v4849, 1
          %vm4892 = vcmp.eq.s32.totalorder %v4852, 1
          %vm4893 = vcmp.eq.s32.totalorder %v4855, 1
          %vm4894 = vcmp.eq.s32.totalorder %v4858, 1
          %vm4895 = vcmp.eq.s32.totalorder %v4861, 1
          %vm4896 = vcmp.eq.s32.totalorder %v4864, 1
          %vm4897 = vcmp.eq.s32.totalorder %v4867, 1
          %vm4898 = vcmp.eq.s32.totalorder %v4870, 1
          %vm4899 = vcmp.eq.s32.totalorder %v4873, 1
          %vm4900 = vcmp.eq.s32.totalorder %v4876, 1
          %vm4901 = vcmp.eq.s32.totalorder %v4879, 1
          %vm4902 = vcmp.eq.s32.totalorder %v4882, 1
          %v4905 = vlaneseq
          %v4906 = vshrl.u32 %v4905, 7
          %v4907 = vsub.s32 0, %v4906
          %v4908 = vrot.slane %v4143, %v4907
          %v4909 = vlaneseq
          %v4910 = vshrl.u32 %v4909, 7
          %v4911 = vsub.s32 2, %v4910
          %v4912 = vrot.slane %v4143, %v4911
          %v4913 = vlaneseq
          %v4914 = vshrl.u32 %v4913, 7
          %v4915 = vsub.s32 4, %v4914
          %v4916 = vrot.slane %v4143, %v4915
          %v4917 = vlaneseq
          %v4918 = vshrl.u32 %v4917, 7
          %v4919 = vsub.s32 6, %v4918
          %v4920 = vrot.slane %v4143, %v4919
          %v4921 = vlaneseq
          %v4922 = vshrl.u32 %v4921, 7
          %v4923 = vsub.s32 0, %v4922
          %v4924 = vrot.slane %v4144, %v4923
          %v4925 = vlaneseq
          %v4926 = vshrl.u32 %v4925, 7
          %v4927 = vsub.s32 2, %v4926
          %v4928 = vrot.slane %v4144, %v4927
          %v4935 = vlaneseq
          %v4936 = vshrl.u32 %v4935, 7
          %v4937 = vsub.s32 0, %v4936
          %v4938 = vrot.slane %v4908, %v4937
          %v4939 = vlaneseq
          %v4940 = vshrl.u32 %v4939, 7
          %v4941 = vsub.s32 0, %v4940
          %v4942 = vrot.slane %v4912, %v4941
          %v4943 = vlaneseq
          %v4944 = vshrl.u32 %v4943, 7
          %v4945 = vsub.s32 0, %v4944
          %v4946 = vrot.slane %v4916, %v4945
          %v4947 = vlaneseq
          %v4948 = vshrl.u32 %v4947, 7
          %v4949 = vsub.s32 0, %v4948
          %v4950 = vrot.slane %v4920, %v4949
          %v4951 = vlaneseq
          %v4952 = vshrl.u32 %v4951, 7
          %v4953 = vsub.s32 0, %v4952
          %v4954 = vrot.slane %v4924, %v4953
          %v4955 = vlaneseq
          %v4956 = vshrl.u32 %v4955, 7
          %v4957 = vsub.s32 0, %v4956
          %v4958 = vrot.slane %v4928, %v4957
          %v4959 = vsel %vm4883, %v4938, 0.0
          %v4960 = vsel %vm4883, %v4942, 0.0
          %v4961 = vsel %vm4883, %v4946, 0.0
          %v4962 = vsel %vm4883, %v4950, 0.0
          %v4963 = vsel %vm4883, %v4954, 0.0
          %v4964 = vsel %vm4883, %v4958, 0.0
          %v4965 = vsel %vm4884, %v4938, 0.0
          %v4966 = vsel %vm4884, %v4942, 0.0
          %v4967 = vsel %vm4884, %v4946, 0.0
          %v4968 = vsel %vm4884, %v4950, 0.0
          %v4969 = vsel %vm4884, %v4954, 0.0
          %v4970 = vsel %vm4884, %v4958, 0.0
          %v4971 = vsel %vm4885, %v4938, 0.0
          %v4972 = vsel %vm4885, %v4942, 0.0
          %v4973 = vsel %vm4885, %v4946, 0.0
          %v4974 = vsel %vm4885, %v4950, 0.0
          %v4975 = vsel %vm4885, %v4954, 0.0
          %v4976 = vsel %vm4885, %v4958, 0.0
          %v4977 = vsel %vm4886, %v4938, 0.0
          %v4978 = vsel %vm4886, %v4942, 0.0
          %v4979 = vsel %vm4886, %v4946, 0.0
          %v4980 = vsel %vm4886, %v4950, 0.0
          %v4981 = vsel %vm4886, %v4954, 0.0
          %v4982 = vsel %vm4886, %v4958, 0.0
          %v4983 = vsel %vm4887, %v4938, 0.0
          %v4984 = vsel %vm4887, %v4942, 0.0
          %v4985 = vsel %vm4887, %v4946, 0.0
          %v4986 = vsel %vm4887, %v4950, 0.0
          %v4987 = vsel %vm4887, %v4954, 0.0
          %v4988 = vsel %vm4887, %v4958, 0.0
          %v4989 = vsel %vm4888, %v4938, 0.0
          %v4990 = vsel %vm4888, %v4942, 0.0
          %v4991 = vsel %vm4888, %v4946, 0.0
          %v4992 = vsel %vm4888, %v4950, 0.0
          %v4993 = vsel %vm4888, %v4954, 0.0
          %v4994 = vsel %vm4888, %v4958, 0.0
          %v4995 = vsel %vm4889, %v4938, 0.0
          %v4996 = vsel %vm4889, %v4942, 0.0
          %v4997 = vsel %vm4889, %v4946, 0.0
          %v4998 = vsel %vm4889, %v4950, 0.0
          %v4999 = vsel %vm4889, %v4954, 0.0
          %v5000 = vsel %vm4889, %v4958, 0.0
          %v5001 = vsel %vm4890, %v4938, 0.0
          %v5002 = vsel %vm4890, %v4942, 0.0
          %v5003 = vsel %vm4890, %v4946, 0.0
          %v5004 = vsel %vm4890, %v4950, 0.0
          %v5005 = vsel %vm4890, %v4954, 0.0
          %v5006 = vsel %vm4890, %v4958, 0.0
          %v5007 = vsel %vm4891, %v4938, 0.0
          %v5008 = vsel %vm4891, %v4942, 0.0
          %v5009 = vsel %vm4891, %v4946, 0.0
          %v5010 = vsel %vm4891, %v4950, 0.0
          %v5011 = vsel %vm4891, %v4954, 0.0
          %v5012 = vsel %vm4891, %v4958, 0.0
          %v5013 = vsel %vm4892, %v4938, 0.0
          %v5014 = vsel %vm4892, %v4942, 0.0
          %v5015 = vsel %vm4892, %v4946, 0.0
          %v5016 = vsel %vm4892, %v4950, 0.0
          %v5017 = vsel %vm4892, %v4954, 0.0
          %v5018 = vsel %vm4892, %v4958, 0.0
          %v5019 = vsel %vm4893, %v4938, 0.0
          %v5020 = vsel %vm4893, %v4942, 0.0
          %v5021 = vsel %vm4893, %v4946, 0.0
          %v5022 = vsel %vm4893, %v4950, 0.0
          %v5023 = vsel %vm4893, %v4954, 0.0
          %v5024 = vsel %vm4893, %v4958, 0.0
          %v5025 = vsel %vm4894, %v4938, 0.0
          %v5026 = vsel %vm4894, %v4942, 0.0
          %v5027 = vsel %vm4894, %v4946, 0.0
          %v5028 = vsel %vm4894, %v4950, 0.0
          %v5029 = vsel %vm4894, %v4954, 0.0
          %v5030 = vsel %vm4894, %v4958, 0.0
          %v5031 = vsel %vm4895, %v4938, 0.0
          %v5032 = vsel %vm4895, %v4942, 0.0
          %v5033 = vsel %vm4895, %v4946, 0.0
          %v5034 = vsel %vm4895, %v4950, 0.0
          %v5035 = vsel %vm4895, %v4954, 0.0
          %v5036 = vsel %vm4895, %v4958, 0.0
          %v5037 = vsel %vm4896, %v4938, 0.0
          %v5038 = vsel %vm4896, %v4942, 0.0
          %v5039 = vsel %vm4896, %v4946, 0.0
          %v5040 = vsel %vm4896, %v4950, 0.0
          %v5041 = vsel %vm4896, %v4954, 0.0
          %v5042 = vsel %vm4896, %v4958, 0.0
          %v5043 = vsel %vm4897, %v4938, 0.0
          %v5044 = vsel %vm4897, %v4942, 0.0
          %v5045 = vsel %vm4897, %v4946, 0.0
          %v5046 = vsel %vm4897, %v4950, 0.0
          %v5047 = vsel %vm4897, %v4954, 0.0
          %v5048 = vsel %vm4897, %v4958, 0.0
          %v5049 = vsel %vm4898, %v4938, 0.0
          %v5050 = vsel %vm4898, %v4942, 0.0
          %v5051 = vsel %vm4898, %v4946, 0.0
          %v5052 = vsel %vm4898, %v4950, 0.0
          %v5053 = vsel %vm4898, %v4954, 0.0
          %v5054 = vsel %vm4898, %v4958, 0.0
          %v5055 = vsel %vm4899, %v4938, 0.0
          %v5056 = vsel %vm4899, %v4942, 0.0
          %v5057 = vsel %vm4899, %v4946, 0.0
          %v5058 = vsel %vm4899, %v4950, 0.0
          %v5059 = vsel %vm4899, %v4954, 0.0
          %v5060 = vsel %vm4899, %v4958, 0.0
          %v5061 = vsel %vm4900, %v4938, 0.0
          %v5062 = vsel %vm4900, %v4942, 0.0
          %v5063 = vsel %vm4900, %v4946, 0.0
          %v5064 = vsel %vm4900, %v4950, 0.0
          %v5065 = vsel %vm4900, %v4954, 0.0
          %v5066 = vsel %vm4900, %v4958, 0.0
          %v5067 = vsel %vm4901, %v4938, 0.0
          %v5068 = vsel %vm4901, %v4942, 0.0
          %v5069 = vsel %vm4901, %v4946, 0.0
          %v5070 = vsel %vm4901, %v4950, 0.0
          %v5071 = vsel %vm4901, %v4954, 0.0
          %v5072 = vsel %vm4901, %v4958, 0.0
          %v5073 = vsel %vm4902, %v4938, 0.0
          %v5074 = vsel %vm4902, %v4942, 0.0
          %v5075 = vsel %vm4902, %v4946, 0.0
          %v5076 = vsel %vm4902, %v4950, 0.0
          %v5077 = vsel %vm4902, %v4954, 0.0
          %v5078 = vsel %vm4902, %v4958, 0.0
          %vm5079 = vcmp.eq.s32.totalorder %v4763, 1
          %vm5080 = vcmp.eq.s32.totalorder %v4764, 1
          %vm5081 = vcmp.eq.s32.totalorder %v4765, 1
          %vm5082 = vcmp.eq.s32.totalorder %v4766, 1
          %vm5083 = vcmp.eq.s32.totalorder %v4767, 1
          %vm5084 = vcmp.eq.s32.totalorder %v4768, 1
          %vm5085 = vcmp.eq.s32.totalorder %v4769, 1
          %vm5086 = vcmp.eq.s32.totalorder %v4770, 1
          %vm5087 = vcmp.eq.s32.totalorder %v4771, 1
          %vm5088 = vcmp.eq.s32.totalorder %v4772, 1
          %vm5089 = vcmp.eq.s32.totalorder %v4773, 1
          %vm5090 = vcmp.eq.s32.totalorder %v4774, 1
          %vm5091 = vcmp.eq.s32.totalorder %v4775, 1
          %vm5092 = vcmp.eq.s32.totalorder %v4776, 1
          %vm5093 = vcmp.eq.s32.totalorder %v4777, 1
          %vm5094 = vcmp.eq.s32.totalorder %v4778, 1
          %vm5095 = vcmp.eq.s32.totalorder %v4779, 1
          %vm5096 = vcmp.eq.s32.totalorder %v4780, 1
          %vm5097 = vcmp.eq.s32.totalorder %v4781, 1
          %vm5098 = vcmp.eq.s32.totalorder %v4782, 1
          %v5099 = vsel %vm5079, 1, 0
          %v5100 = vsel %vm5080, 1, 0
          %v5101 = vsel %vm5081, 1, 0
          %v5102 = vsel %vm5082, 1, 0
          %v5103 = vsel %vm5083, 1, 0
          %v5104 = vsel %vm5084, 1, 0
          %v5105 = vsel %vm5085, 1, 0
          %v5106 = vsel %vm5086, 1, 0
          %v5107 = vsel %vm5087, 1, 0
          %v5108 = vsel %vm5088, 1, 0
          %v5109 = vsel %vm5089, 1, 0
          %v5110 = vsel %vm5090, 1, 0
          %v5111 = vsel %vm5091, 1, 0
          %v5112 = vsel %vm5092, 1, 0
          %v5113 = vsel %vm5093, 1, 0
          %v5114 = vsel %vm5094, 1, 0
          %v5115 = vsel %vm5095, 1, 0
          %v5116 = vsel %vm5096, 1, 0
          %v5117 = vsel %vm5097, 1, 0
          %v5118 = vsel %vm5098, 1, 0
          %5119 = vset.pattern.permute.xlu0 0
          %5120 = vperm.xlu0 %5119, %v5099
          %v5121 = vpop.permute.xlu0 %5120
          %5122 = vset.pattern.permute.xlu0 0
          %5123 = vperm.xlu0 %5122, %v5100
          %v5124 = vpop.permute.xlu0 %5123
          %5125 = vset.pattern.permute.xlu0 0
          %5126 = vperm.xlu0 %5125, %v5101
          %v5127 = vpop.permute.xlu0 %5126
          %5128 = vset.pattern.permute.xlu0 0
          %5129 = vperm.xlu0 %5128, %v5102
          %v5130 = vpop.permute.xlu0 %5129
          %5131 = vset.pattern.permute.xlu0 0
          %5132 = vperm.xlu0 %5131, %v5103
          %v5133 = vpop.permute.xlu0 %5132
          %5134 = vset.pattern.permute.xlu0 0
          %5135 = vperm.xlu0 %5134, %v5104
          %v5136 = vpop.permute.xlu0 %5135
          %5137 = vset.pattern.permute.xlu0 0
          %5138 = vperm.xlu0 %5137, %v5105
          %v5139 = vpop.permute.xlu0 %5138
          %5140 = vset.pattern.permute.xlu0 0
          %5141 = vperm.xlu0 %5140, %v5106
          %v5142 = vpop.permute.xlu0 %5141
          %5143 = vset.pattern.permute.xlu0 0
          %5144 = vperm.xlu0 %5143, %v5107
          %v5145 = vpop.permute.xlu0 %5144
          %5146 = vset.pattern.permute.xlu0 0
          %5147 = vperm.xlu0 %5146, %v5108
          %v5148 = vpop.permute.xlu0 %5147
          %5149 = vset.pattern.permute.xlu0 0
          %5150 = vperm.xlu0 %5149, %v5109
          %v5151 = vpop.permute.xlu0 %5150
          %5152 = vset.pattern.permute.xlu0 0
          %5153 = vperm.xlu0 %5152, %v5110
          %v5154 = vpop.permute.xlu0 %5153
          %5155 = vset.pattern.permute.xlu0 0
          %5156 = vperm.xlu0 %5155, %v5111
          %v5157 = vpop.permute.xlu0 %5156
          %5158 = vset.pattern.permute.xlu0 0
          %5159 = vperm.xlu0 %5158, %v5112
          %v5160 = vpop.permute.xlu0 %5159
          %5161 = vset.pattern.permute.xlu0 0
          %5162 = vperm.xlu0 %5161, %v5113
          %v5163 = vpop.permute.xlu0 %5162
          %5164 = vset.pattern.permute.xlu0 0
          %5165 = vperm.xlu0 %5164, %v5114
          %v5166 = vpop.permute.xlu0 %5165
          %5167 = vset.pattern.permute.xlu0 0
          %5168 = vperm.xlu0 %5167, %v5115
          %v5169 = vpop.permute.xlu0 %5168
          %5170 = vset.pattern.permute.xlu0 0
          %5171 = vperm.xlu0 %5170, %v5116
          %v5172 = vpop.permute.xlu0 %5171
          %5173 = vset.pattern.permute.xlu0 0
          %5174 = vperm.xlu0 %5173, %v5117
          %v5175 = vpop.permute.xlu0 %5174
          %5176 = vset.pattern.permute.xlu0 0
          %5177 = vperm.xlu0 %5176, %v5118
          %v5178 = vpop.permute.xlu0 %5177
          %vm5179 = vcmp.eq.s32.totalorder %v5121, 1
          %vm5180 = vcmp.eq.s32.totalorder %v5124, 1
          %vm5181 = vcmp.eq.s32.totalorder %v5127, 1
          %vm5182 = vcmp.eq.s32.totalorder %v5130, 1
          %vm5183 = vcmp.eq.s32.totalorder %v5133, 1
          %vm5184 = vcmp.eq.s32.totalorder %v5136, 1
          %vm5185 = vcmp.eq.s32.totalorder %v5139, 1
          %vm5186 = vcmp.eq.s32.totalorder %v5142, 1
          %vm5187 = vcmp.eq.s32.totalorder %v5145, 1
          %vm5188 = vcmp.eq.s32.totalorder %v5148, 1
          %vm5189 = vcmp.eq.s32.totalorder %v5151, 1
          %vm5190 = vcmp.eq.s32.totalorder %v5154, 1
          %vm5191 = vcmp.eq.s32.totalorder %v5157, 1
          %vm5192 = vcmp.eq.s32.totalorder %v5160, 1
          %vm5193 = vcmp.eq.s32.totalorder %v5163, 1
          %vm5194 = vcmp.eq.s32.totalorder %v5166, 1
          %vm5195 = vcmp.eq.s32.totalorder %v5169, 1
          %vm5196 = vcmp.eq.s32.totalorder %v5172, 1
          %vm5197 = vcmp.eq.s32.totalorder %v5175, 1
          %vm5198 = vcmp.eq.s32.totalorder %v5178, 1
          %v5199 = vlaneseq
          %v5200 = vshrl.u32 %v5199, 7
          %v5201 = vsub.s32 1, %v5200
          %v5202 = vrot.slane %v4143, %v5201
          %v5203 = vlaneseq
          %v5204 = vshrl.u32 %v5203, 7
          %v5205 = vsub.s32 3, %v5204
          %v5206 = vrot.slane %v4143, %v5205
          %v5207 = vlaneseq
          %v5208 = vshrl.u32 %v5207, 7
          %v5209 = vsub.s32 5, %v5208
          %v5210 = vrot.slane %v4143, %v5209
          %v5211 = vlaneseq
          %v5212 = vshrl.u32 %v5211, 7
          %v5213 = vsub.s32 7, %v5212
          %v5214 = vrot.slane %v4143, %v5213
          %v5215 = vlaneseq
          %v5216 = vshrl.u32 %v5215, 7
          %v5217 = vsub.s32 1, %v5216
          %v5218 = vrot.slane %v4144, %v5217
          %v5219 = vlaneseq
          %v5220 = vshrl.u32 %v5219, 7
          %v5221 = vsub.s32 3, %v5220
          %v5222 = vrot.slane %v4144, %v5221
          %v5229 = vlaneseq
          %v5230 = vshrl.u32 %v5229, 7
          %v5231 = vsub.s32 1, %v5230
          %v5232 = vrot.slane %v5202, %v5231
          %v5233 = vlaneseq
          %v5234 = vshrl.u32 %v5233, 7
          %v5235 = vsub.s32 1, %v5234
          %v5236 = vrot.slane %v5206, %v5235
          %v5237 = vlaneseq
          %v5238 = vshrl.u32 %v5237, 7
          %v5239 = vsub.s32 1, %v5238
          %v5240 = vrot.slane %v5210, %v5239
          %v5241 = vlaneseq
          %v5242 = vshrl.u32 %v5241, 7
          %v5243 = vsub.s32 1, %v5242
          %v5244 = vrot.slane %v5214, %v5243
          %v5245 = vlaneseq
          %v5246 = vshrl.u32 %v5245, 7
          %v5247 = vsub.s32 1, %v5246
          %v5248 = vrot.slane %v5218, %v5247
          %v5249 = vlaneseq
          %v5250 = vshrl.u32 %v5249, 7
          %v5251 = vsub.s32 1, %v5250
          %v5252 = vrot.slane %v5222, %v5251
          %v5253 = vsel %vm5179, %v5232, %v4959
          %v5254 = vsel %vm5179, %v5236, %v4960
          %v5255 = vsel %vm5179, %v5240, %v4961
          %v5256 = vsel %vm5179, %v5244, %v4962
          %v5257 = vsel %vm5179, %v5248, %v4963
          %v5258 = vsel %vm5179, %v5252, %v4964
          %v5259 = vsel %vm5180, %v5232, %v4965
          %v5260 = vsel %vm5180, %v5236, %v4966
          %v5261 = vsel %vm5180, %v5240, %v4967
          %v5262 = vsel %vm5180, %v5244, %v4968
          %v5263 = vsel %vm5180, %v5248, %v4969
          %v5264 = vsel %vm5180, %v5252, %v4970
          %v5265 = vsel %vm5181, %v5232, %v4971
          %v5266 = vsel %vm5181, %v5236, %v4972
          %v5267 = vsel %vm5181, %v5240, %v4973
          %v5268 = vsel %vm5181, %v5244, %v4974
          %v5269 = vsel %vm5181, %v5248, %v4975
          %v5270 = vsel %vm5181, %v5252, %v4976
          %v5271 = vsel %vm5182, %v5232, %v4977
          %v5272 = vsel %vm5182, %v5236, %v4978
          %v5273 = vsel %vm5182, %v5240, %v4979
          %v5274 = vsel %vm5182, %v5244, %v4980
          %v5275 = vsel %vm5182, %v5248, %v4981
          %v5276 = vsel %vm5182, %v5252, %v4982
          %v5277 = vsel %vm5183, %v5232, %v4983
          %v5278 = vsel %vm5183, %v5236, %v4984
          %v5279 = vsel %vm5183, %v5240, %v4985
          %v5280 = vsel %vm5183, %v5244, %v4986
          %v5281 = vsel %vm5183, %v5248, %v4987
          %v5282 = vsel %vm5183, %v5252, %v4988
          %v5283 = vsel %vm5184, %v5232, %v4989
          %v5284 = vsel %vm5184, %v5236, %v4990
          %v5285 = vsel %vm5184, %v5240, %v4991
          %v5286 = vsel %vm5184, %v5244, %v4992
          %v5287 = vsel %vm5184, %v5248, %v4993
          %v5288 = vsel %vm5184, %v5252, %v4994
          %v5289 = vsel %vm5185, %v5232, %v4995
          %v5290 = vsel %vm5185, %v5236, %v4996
          %v5291 = vsel %vm5185, %v5240, %v4997
          %v5292 = vsel %vm5185, %v5244, %v4998
          %v5293 = vsel %vm5185, %v5248, %v4999
          %v5294 = vsel %vm5185, %v5252, %v5000
          %v5295 = vsel %vm5186, %v5232, %v5001
          %v5296 = vsel %vm5186, %v5236, %v5002
          %v5297 = vsel %vm5186, %v5240, %v5003
          %v5298 = vsel %vm5186, %v5244, %v5004
          %v5299 = vsel %vm5186, %v5248, %v5005
          %v5300 = vsel %vm5186, %v5252, %v5006
          %v5301 = vsel %vm5187, %v5232, %v5007
          %v5302 = vsel %vm5187, %v5236, %v5008
          %v5303 = vsel %vm5187, %v5240, %v5009
          %v5304 = vsel %vm5187, %v5244, %v5010
          %v5305 = vsel %vm5187, %v5248, %v5011
          %v5306 = vsel %vm5187, %v5252, %v5012
          %v5307 = vsel %vm5188, %v5232, %v5013
          %v5308 = vsel %vm5188, %v5236, %v5014
          %v5309 = vsel %vm5188, %v5240, %v5015
          %v5310 = vsel %vm5188, %v5244, %v5016
          %v5311 = vsel %vm5188, %v5248, %v5017
          %v5312 = vsel %vm5188, %v5252, %v5018
          %v5313 = vsel %vm5189, %v5232, %v5019
          %v5314 = vsel %vm5189, %v5236, %v5020
          %v5315 = vsel %vm5189, %v5240, %v5021
          %v5316 = vsel %vm5189, %v5244, %v5022
          %v5317 = vsel %vm5189, %v5248, %v5023
          %v5318 = vsel %vm5189, %v5252, %v5024
          %v5319 = vsel %vm5190, %v5232, %v5025
          %v5320 = vsel %vm5190, %v5236, %v5026
          %v5321 = vsel %vm5190, %v5240, %v5027
          %v5322 = vsel %vm5190, %v5244, %v5028
          %v5323 = vsel %vm5190, %v5248, %v5029
          %v5324 = vsel %vm5190, %v5252, %v5030
          %v5325 = vsel %vm5191, %v5232, %v5031
          %v5326 = vsel %vm5191, %v5236, %v5032
          %v5327 = vsel %vm5191, %v5240, %v5033
          %v5328 = vsel %vm5191, %v5244, %v5034
          %v5329 = vsel %vm5191, %v5248, %v5035
          %v5330 = vsel %vm5191, %v5252, %v5036
          %v5331 = vsel %vm5192, %v5232, %v5037
          %v5332 = vsel %vm5192, %v5236, %v5038
          %v5333 = vsel %vm5192, %v5240, %v5039
          %v5334 = vsel %vm5192, %v5244, %v5040
          %v5335 = vsel %vm5192, %v5248, %v5041
          %v5336 = vsel %vm5192, %v5252, %v5042
          %v5337 = vsel %vm5193, %v5232, %v5043
          %v5338 = vsel %vm5193, %v5236, %v5044
          %v5339 = vsel %vm5193, %v5240, %v5045
          %v5340 = vsel %vm5193, %v5244, %v5046
          %v5341 = vsel %vm5193, %v5248, %v5047
          %v5342 = vsel %vm5193, %v5252, %v5048
          %v5343 = vsel %vm5194, %v5232, %v5049
          %v5344 = vsel %vm5194, %v5236, %v5050
          %v5345 = vsel %vm5194, %v5240, %v5051
          %v5346 = vsel %vm5194, %v5244, %v5052
          %v5347 = vsel %vm5194, %v5248, %v5053
          %v5348 = vsel %vm5194, %v5252, %v5054
          %v5349 = vsel %vm5195, %v5232, %v5055
          %v5350 = vsel %vm5195, %v5236, %v5056
          %v5351 = vsel %vm5195, %v5240, %v5057
          %v5352 = vsel %vm5195, %v5244, %v5058
          %v5353 = vsel %vm5195, %v5248, %v5059
          %v5354 = vsel %vm5195, %v5252, %v5060
          %v5355 = vsel %vm5196, %v5232, %v5061
          %v5356 = vsel %vm5196, %v5236, %v5062
          %v5357 = vsel %vm5196, %v5240, %v5063
          %v5358 = vsel %vm5196, %v5244, %v5064
          %v5359 = vsel %vm5196, %v5248, %v5065
          %v5360 = vsel %vm5196, %v5252, %v5066
          %v5361 = vsel %vm5197, %v5232, %v5067
          %v5362 = vsel %vm5197, %v5236, %v5068
          %v5363 = vsel %vm5197, %v5240, %v5069
          %v5364 = vsel %vm5197, %v5244, %v5070
          %v5365 = vsel %vm5197, %v5248, %v5071
          %v5366 = vsel %vm5197, %v5252, %v5072
          %v5367 = vsel %vm5198, %v5232, %v5073
          %v5368 = vsel %vm5198, %v5236, %v5074
          %v5369 = vsel %vm5198, %v5240, %v5075
          %v5370 = vsel %vm5198, %v5244, %v5076
          %v5371 = vsel %vm5198, %v5248, %v5077
          %v5372 = vsel %vm5198, %v5252, %v5078
          %v5373 = vmul.f32 %v5253, %v4399
          %v5374 = vmul.f32 %v5254, %v4401
          %v5375 = vmul.f32 %v5255, %v4532
          %v5376 = vmul.f32 %v5256, %v4534
          %v5377 = vmul.f32 %v5257, %v4665
          %v5378 = vmul.f32 %v5258, %v4667
          %v5379 = vmul.f32 %v5259, %v4403
          %v5380 = vmul.f32 %v5260, %v4405
          %v5381 = vmul.f32 %v5261, %v4536
          %v5382 = vmul.f32 %v5262, %v4538
          %v5383 = vmul.f32 %v5263, %v4669
          %v5384 = vmul.f32 %v5264, %v4671
          %v5385 = vmul.f32 %v5265, %v4409
          %v5386 = vmul.f32 %v5266, %v4411
          %v5387 = vmul.f32 %v5267, %v4542
          %v5388 = vmul.f32 %v5268, %v4544
          %v5389 = vmul.f32 %v5269, %v4675
          %v5390 = vmul.f32 %v5270, %v4677
          %v5391 = vmul.f32 %v5271, %v4413
          %v5392 = vmul.f32 %v5272, %v4415
          %v5393 = vmul.f32 %v5273, %v4546
          %v5394 = vmul.f32 %v5274, %v4548
          %v5395 = vmul.f32 %v5275, %v4679
          %v5396 = vmul.f32 %v5276, %v4681
          %v5397 = vmul.f32 %v5277, %v4419
          %v5398 = vmul.f32 %v5278, %v4421
          %v5399 = vmul.f32 %v5279, %v4552
          %v5400 = vmul.f32 %v5280, %v4554
          %v5401 = vmul.f32 %v5281, %v4685
          %v5402 = vmul.f32 %v5282, %v4687
          %v5403 = vmul.f32 %v5283, %v4423
          %v5404 = vmul.f32 %v5284, %v4425
          %v5405 = vmul.f32 %v5285, %v4556
          %v5406 = vmul.f32 %v5286, %v4558
          %v5407 = vmul.f32 %v5287, %v4689
          %v5408 = vmul.f32 %v5288, %v4691
          %v5409 = vmul.f32 %v5289, %v4429
          %v5410 = vmul.f32 %v5290, %v4431
          %v5411 = vmul.f32 %v5291, %v4562
          %v5412 = vmul.f32 %v5292, %v4564
          %v5413 = vmul.f32 %v5293, %v4695
          %v5414 = vmul.f32 %v5294, %v4697
          %v5415 = vmul.f32 %v5295, %v4433
          %v5416 = vmul.f32 %v5296, %v4435
          %v5417 = vmul.f32 %v5297, %v4566
          %v5418 = vmul.f32 %v5298, %v4568
          %v5419 = vmul.f32 %v5299, %v4699
          %v5420 = vmul.f32 %v5300, %v4701
          %v5421 = vmul.f32 %v5301, %v4439
          %v5422 = vmul.f32 %v5302, %v4441
          %v5423 = vmul.f32 %v5303, %v4572
          %v5424 = vmul.f32 %v5304, %v4574
          %v5425 = vmul.f32 %v5305, %v4705
          %v5426 = vmul.f32 %v5306, %v4707
          %v5427 = vmul.f32 %v5307, %v4443
          %v5428 = vmul.f32 %v5308, %v4445
          %v5429 = vmul.f32 %v5309, %v4576
          %v5430 = vmul.f32 %v5310, %v4578
          %v5431 = vmul.f32 %v5311, %v4709
          %v5432 = vmul.f32 %v5312, %v4711
          %v5433 = vmul.f32 %v5313, %v4449
          %v5434 = vmul.f32 %v5314, %v4451
          %v5435 = vmul.f32 %v5315, %v4582
          %v5436 = vmul.f32 %v5316, %v4584
          %v5437 = vmul.f32 %v5317, %v4715
          %v5438 = vmul.f32 %v5318, %v4717
          %v5439 = vmul.f32 %v5319, %v4453
          %v5440 = vmul.f32 %v5320, %v4455
          %v5441 = vmul.f32 %v5321, %v4586
          %v5442 = vmul.f32 %v5322, %v4588
          %v5443 = vmul.f32 %v5323, %v4719
          %v5444 = vmul.f32 %v5324, %v4721
          %v5445 = vmul.f32 %v5325, %v4459
          %v5446 = vmul.f32 %v5326, %v4461
          %v5447 = vmul.f32 %v5327, %v4592
          %v5448 = vmul.f32 %v5328, %v4594
          %v5449 = vmul.f32 %v5329, %v4725
          %v5450 = vmul.f32 %v5330, %v4727
          %v5451 = vmul.f32 %v5331, %v4463
          %v5452 = vmul.f32 %v5332, %v4465
          %v5453 = vmul.f32 %v5333, %v4596
          %v5454 = vmul.f32 %v5334, %v4598
          %v5455 = vmul.f32 %v5335, %v4729
          %v5456 = vmul.f32 %v5336, %v4731
          %v5457 = vmul.f32 %v5337, %v4469
          %v5458 = vmul.f32 %v5338, %v4471
          %v5459 = vmul.f32 %v5339, %v4602
          %v5460 = vmul.f32 %v5340, %v4604
          %v5461 = vmul.f32 %v5341, %v4735
          %v5462 = vmul.f32 %v5342, %v4737
          %v5463 = vmul.f32 %v5343, %v4473
          %v5464 = vmul.f32 %v5344, %v4475
          %v5465 = vmul.f32 %v5345, %v4606
          %v5466 = vmul.f32 %v5346, %v4608
          %v5467 = vmul.f32 %v5347, %v4739
          %v5468 = vmul.f32 %v5348, %v4741
          %v5469 = vmul.f32 %v5349, %v4479
          %v5470 = vmul.f32 %v5350, %v4481
          %v5471 = vmul.f32 %v5351, %v4612
          %v5472 = vmul.f32 %v5352, %v4614
          %v5473 = vmul.f32 %v5353, %v4745
          %v5474 = vmul.f32 %v5354, %v4747
          %v5475 = vmul.f32 %v5355, %v4483
          %v5476 = vmul.f32 %v5356, %v4485
          %v5477 = vmul.f32 %v5357, %v4616
          %v5478 = vmul.f32 %v5358, %v4618
          %v5479 = vmul.f32 %v5359, %v4749
          %v5480 = vmul.f32 %v5360, %v4751
          %v5481 = vmul.f32 %v5361, %v4489
          %v5482 = vmul.f32 %v5362, %v4491
          %v5483 = vmul.f32 %v5363, %v4622
          %v5484 = vmul.f32 %v5364, %v4624
          %v5485 = vmul.f32 %v5365, %v4755
          %v5486 = vmul.f32 %v5366, %v4757
          %v5487 = vmul.f32 %v5367, %v4493
          %v5488 = vmul.f32 %v5368, %v4495
          %v5489 = vmul.f32 %v5369, %v4626
          %v5490 = vmul.f32 %v5370, %v4628
          %v5491 = vmul.f32 %v5371, %v4759
          %v5492 = vmul.f32 %v5372, %v4761
          %5493 = vst [vmem:[#allocation15] sm:$0xff] %v5373
          %5494 = vst [vmem:[#allocation15 + $0x8] sm:$0xff] %v5374
          %5495 = vst [vmem:[#allocation15 + $0x10] sm:$0xff] %v5375
          %5496 = vst [vmem:[#allocation15 + $0x18] sm:$0xff] %v5376
          %5497 = vst [vmem:[#allocation15 + $0x20] sm:$0xff] %v5377
          %5498 = vst [vmem:[#allocation15 + $0x28] sm:$0xff] %v5378
          %5499 = vst [vmem:[#allocation15 + $0x30] sm:$0xff] %v5379
          %5500 = vst [vmem:[#allocation15 + $0x38] sm:$0xff] %v5380
          %5501 = vst [vmem:[#allocation15 + $0x40] sm:$0xff] %v5381
          %5502 = vst [vmem:[#allocation15 + $0x48] sm:$0xff] %v5382
          %5503 = vst [vmem:[#allocation15 + $0x50] sm:$0xff] %v5383
          %5504 = vst [vmem:[#allocation15 + $0x58] sm:$0xff] %v5384
          %5505 = vst [vmem:[#allocation15 + $0x60] sm:$0xff] %v5385
          %5506 = vst [vmem:[#allocation15 + $0x68] sm:$0xff] %v5386
          %5507 = vst [vmem:[#allocation15 + $0x70] sm:$0xff] %v5387
          %5508 = vst [vmem:[#allocation15 + $0x78] sm:$0xff] %v5388
          %5509 = vst [vmem:[#allocation15 + $0x80] sm:$0xff] %v5389
          %5510 = vst [vmem:[#allocation15 + $0x88] sm:$0xff] %v5390
          %5511 = vst [vmem:[#allocation15 + $0x90] sm:$0xff] %v5391
          %5512 = vst [vmem:[#allocation15 + $0x98] sm:$0xff] %v5392
          %5513 = vst [vmem:[#allocation15 + $0xa0] sm:$0xff] %v5393
          %5514 = vst [vmem:[#allocation15 + $0xa8] sm:$0xff] %v5394
          %5515 = vst [vmem:[#allocation15 + $0xb0] sm:$0xff] %v5395
          %5516 = vst [vmem:[#allocation15 + $0xb8] sm:$0xff] %v5396
          %5517 = vst [vmem:[#allocation15 + $0xc0] sm:$0xff] %v5397
          %5518 = vst [vmem:[#allocation15 + $0xc8] sm:$0xff] %v5398
          %5519 = vst [vmem:[#allocation15 + $0xd0] sm:$0xff] %v5399
          %5520 = vst [vmem:[#allocation15 + $0xd8] sm:$0xff] %v5400
          %5521 = vst [vmem:[#allocation15 + $0xe0] sm:$0xff] %v5401
          %5522 = vst [vmem:[#allocation15 + $0xe8] sm:$0xff] %v5402
          %5523 = vst [vmem:[#allocation15 + $0xf0] sm:$0xff] %v5403
          %5524 = vst [vmem:[#allocation15 + $0xf8] sm:$0xff] %v5404
          %5525 = vst [vmem:[#allocation15 + $0x100] sm:$0xff] %v5405
          %5526 = vst [vmem:[#allocation15 + $0x108] sm:$0xff] %v5406
          %5527 = vst [vmem:[#allocation15 + $0x110] sm:$0xff] %v5407
          %5528 = vst [vmem:[#allocation15 + $0x118] sm:$0xff] %v5408
          %5529 = vst [vmem:[#allocation15 + $0x120] sm:$0xff] %v5409
          %5530 = vst [vmem:[#allocation15 + $0x128] sm:$0xff] %v5410
          %5531 = vst [vmem:[#allocation15 + $0x130] sm:$0xff] %v5411
          %5532 = vst [vmem:[#allocation15 + $0x138] sm:$0xff] %v5412
          %5533 = vst [vmem:[#allocation15 + $0x140] sm:$0xff] %v5413
          %5534 = vst [vmem:[#allocation15 + $0x148] sm:$0xff] %v5414
          %5535 = vst [vmem:[#allocation15 + $0x150] sm:$0xff] %v5415
          %5536 = vst [vmem:[#allocation15 + $0x158] sm:$0xff] %v5416
          %5537 = vst [vmem:[#allocation15 + $0x160] sm:$0xff] %v5417
          %5538 = vst [vmem:[#allocation15 + $0x168] sm:$0xff] %v5418
          %5539 = vst [vmem:[#allocation15 + $0x170] sm:$0xff] %v5419
          %5540 = vst [vmem:[#allocation15 + $0x178] sm:$0xff] %v5420
          %5541 = vst [vmem:[#allocation15 + $0x180] sm:$0xff] %v5421
          %5542 = vst [vmem:[#allocation15 + $0x188] sm:$0xff] %v5422
          %5543 = vst [vmem:[#allocation15 + $0x190] sm:$0xff] %v5423
          %5544 = vst [vmem:[#allocation15 + $0x198] sm:$0xff] %v5424
          %5545 = vst [vmem:[#allocation15 + $0x1a0] sm:$0xff] %v5425
          %5546 = vst [vmem:[#allocation15 + $0x1a8] sm:$0xff] %v5426
          %5547 = vst [vmem:[#allocation15 + $0x1b0] sm:$0xff] %v5427
          %5548 = vst [vmem:[#allocation15 + $0x1b8] sm:$0xff] %v5428
          %5549 = vst [vmem:[#allocation15 + $0x1c0] sm:$0xff] %v5429
          %5550 = vst [vmem:[#allocation15 + $0x1c8] sm:$0xff] %v5430
          %5551 = vst [vmem:[#allocation15 + $0x1d0] sm:$0xff] %v5431
          %5552 = vst [vmem:[#allocation15 + $0x1d8] sm:$0xff] %v5432
          %5553 = vst [vmem:[#allocation15 + $0x1e0] sm:$0xff] %v5433
          %5554 = vst [vmem:[#allocation15 + $0x1e8] sm:$0xff] %v5434
          %5555 = vst [vmem:[#allocation15 + $0x1f0] sm:$0xff] %v5435
          %5556 = vst [vmem:[#allocation15 + $0x1f8] sm:$0xff] %v5436
          %5557 = vst [vmem:[#allocation15 + $0x200] sm:$0xff] %v5437
          %5558 = vst [vmem:[#allocation15 + $0x208] sm:$0xff] %v5438
          %5559 = vst [vmem:[#allocation15 + $0x210] sm:$0xff] %v5439
          %5560 = vst [vmem:[#allocation15 + $0x218] sm:$0xff] %v5440
          %5561 = vst [vmem:[#allocation15 + $0x220] sm:$0xff] %v5441
          %5562 = vst [vmem:[#allocation15 + $0x228] sm:$0xff] %v5442
          %5563 = vst [vmem:[#allocation15 + $0x230] sm:$0xff] %v5443
          %5564 = vst [vmem:[#allocation15 + $0x238] sm:$0xff] %v5444
          %5565 = vst [vmem:[#allocation15 + $0x240] sm:$0xff] %v5445
          %5566 = vst [vmem:[#allocation15 + $0x248] sm:$0xff] %v5446
          %5567 = vst [vmem:[#allocation15 + $0x250] sm:$0xff] %v5447
          %5568 = vst [vmem:[#allocation15 + $0x258] sm:$0xff] %v5448
          %5569 = vst [vmem:[#allocation15 + $0x260] sm:$0xff] %v5449
          %5570 = vst [vmem:[#allocation15 + $0x268] sm:$0xff] %v5450
          %5571 = vst [vmem:[#allocation15 + $0x270] sm:$0xff] %v5451
          %5572 = vst [vmem:[#allocation15 + $0x278] sm:$0xff] %v5452
          %5573 = vst [vmem:[#allocation15 + $0x280] sm:$0xff] %v5453
          %5574 = vst [vmem:[#allocation15 + $0x288] sm:$0xff] %v5454
          %5575 = vst [vmem:[#allocation15 + $0x290] sm:$0xff] %v5455
          %5576 = vst [vmem:[#allocation15 + $0x298] sm:$0xff] %v5456
          %5577 = vst [vmem:[#allocation15 + $0x2a0] sm:$0xff] %v5457
          %5578 = vst [vmem:[#allocation15 + $0x2a8] sm:$0xff] %v5458
          %5579 = vst [vmem:[#allocation15 + $0x2b0] sm:$0xff] %v5459
          %5580 = vst [vmem:[#allocation15 + $0x2b8] sm:$0xff] %v5460
          %5581 = vst [vmem:[#allocation15 + $0x2c0] sm:$0xff] %v5461
          %5582 = vst [vmem:[#allocation15 + $0x2c8] sm:$0xff] %v5462
          %5583 = vst [vmem:[#allocation15 + $0x2d0] sm:$0xff] %v5463
          %5584 = vst [vmem:[#allocation15 + $0x2d8] sm:$0xff] %v5464
          %5585 = vst [vmem:[#allocation15 + $0x2e0] sm:$0xff] %v5465
          %5586 = vst [vmem:[#allocation15 + $0x2e8] sm:$0xff] %v5466
          %5587 = vst [vmem:[#allocation15 + $0x2f0] sm:$0xff] %v5467
          %5588 = vst [vmem:[#allocation15 + $0x2f8] sm:$0xff] %v5468
          %5589 = vst [vmem:[#allocation15 + $0x300] sm:$0xff] %v5469
          %5590 = vst [vmem:[#allocation15 + $0x308] sm:$0xff] %v5470
          %5591 = vst [vmem:[#allocation15 + $0x310] sm:$0xff] %v5471
          %5592 = vst [vmem:[#allocation15 + $0x318] sm:$0xff] %v5472
          %5593 = vst [vmem:[#allocation15 + $0x320] sm:$0xff] %v5473
          %5594 = vst [vmem:[#allocation15 + $0x328] sm:$0xff] %v5474
          %5595 = vst [vmem:[#allocation15 + $0x330] sm:$0xff] %v5475
          %5596 = vst [vmem:[#allocation15 + $0x338] sm:$0xff] %v5476
          %5597 = vst [vmem:[#allocation15 + $0x340] sm:$0xff] %v5477
          %5598 = vst [vmem:[#allocation15 + $0x348] sm:$0xff] %v5478
          %5599 = vst [vmem:[#allocation15 + $0x350] sm:$0xff] %v5479
          %5600 = vst [vmem:[#allocation15 + $0x358] sm:$0xff] %v5480
          %5601 = vst [vmem:[#allocation15 + $0x360] sm:$0xff] %v5481
          %5602 = vst [vmem:[#allocation15 + $0x368] sm:$0xff] %v5482
          %5603 = vst [vmem:[#allocation15 + $0x370] sm:$0xff] %v5483
          %5604 = vst [vmem:[#allocation15 + $0x378] sm:$0xff] %v5484
          %5605 = vst [vmem:[#allocation15 + $0x380] sm:$0xff] %v5485
          %5606 = vst [vmem:[#allocation15 + $0x388] sm:$0xff] %v5486
          %5607 = vst [vmem:[#allocation15 + $0x390] sm:$0x3] %v5487
          %5608 = vst [vmem:[#allocation15 + $0x398] sm:$0x3] %v5488
          %5609 = vst [vmem:[#allocation15 + $0x3a0] sm:$0x3] %v5489
          %5610 = vst [vmem:[#allocation15 + $0x3a8] sm:$0x3] %v5490
          %5611 = vst [vmem:[#allocation15 + $0x3b0] sm:$0x3] %v5491
          %5612 = vst [vmem:[#allocation15 + $0x3b8] sm:$0x3] %v5492
        $region88: #{tpu_custom_call.1} parent=55 // pred_fallthru
          _
        // Predicated region
        $region89: #{tpu_custom_call.1} parent=55 // pred_check
          %p5613 = pneg %p246
        $region90: #{tpu_custom_call.1} parent=55 // pred_check_branch
          %5615 = sbr.rel (%p5613) target = $region92
        $region91: #{tpu_custom_call.1} parent=55 // pred_region
          %s5617 = ssub.s32 15360, 15360
          %5618 = vsyncadd [#allocation6], %s5617
          %s5619 = sshll.u32 [#allocation15], 4
          %s5620 = int_to_ptr.vmem [resolvable:$true] %s5619
          %5625 = dma.vmem_to_hbm [thread:$0]  %s5620, 15360, %s9, [#allocation6], 768, 768, 48
        $region92: #{tpu_custom_call.1} parent=55 // pred_fallthru
          _
        // Predicated region
        $region93: #{tpu_custom_call.1} parent=55 // pred_check
          %p5626 = pneg %p246
        $region94: #{tpu_custom_call.1} parent=55 // pred_check_branch
          %5628 = sbr.rel (%p5626) target = $region96
        $region95: #{tpu_custom_call.1} parent=55 // pred_region
          %5629 = dma.done [#allocation6], 15360
        $region96: #{tpu_custom_call.1} parent=55 // pred_fallthru
          _
      $region56: #{tpu_custom_call.1} parent=5 // pred_fallthru
        _
      %p5630 = scmp.le.s32.totalorder 2, %s24
      // Predicated region
      $region97: #{tpu_custom_call.1} parent=5 // pred_check
        %p5631 = pneg %p5630
      $region98: #{tpu_custom_call.1} parent=5 // pred_check_branch
        %5633 = sbr.rel (%p5631) target = $region100
      $region99: #{tpu_custom_call.1} parent=5 // pred_region
        %s5634 = ssub.s32 %s24, 2
      $region100: #{tpu_custom_call.1} parent=5 // pred_fallthru
        _
    $region6: #{tpu_custom_call.1} parent=1 // loop_footer
      %s28 = sadd.s32 1, %s24
    $region7: #{tpu_custom_call.1} parent=1 // loop_footer_branch
      %23 = sbr.rel target = $region3
    $region8: #{tpu_custom_call.1} parent=1 // loop_exit
      _
    %5635 = vsyncpa [#allocation5], 1
    %s5636 = scalar_lea.sflag [#allocation5], 1
    %5637 = vsyncpa %s5636, 1
    %5638 = vsyncpa [#allocation8], 1
    %s5639 = scalar_lea.sflag [#allocation8], 1
    %5640 = vsyncpa %s5639, 1
    %5641 = vsyncpa [#allocation11], 1
    %s5642 = scalar_lea.sflag [#allocation11], 1
    %5643 = vsyncpa %s5642, 1
    %5644 = vsyncpa [#allocation14], 1
    %5645 = vsyncpa [#allocation6], 1
    %s5646 = scalar_lea.sflag [#allocation6], 1
    %5647 = vsyncpa %s5646, 1

</llo_original>
